<compile_context>
chip_gen: v6e
topology: v6e:2x2x1
jax: 0.10.0
libtpu: 0.0.40
codegen_flags: <defaults>
</compile_context>

<pallas_src>
import jax
import jax.numpy as jnp
from jax.experimental import pallas as pl
from jax.experimental.pallas import tpu as pltpu

R = 28  # rows carried per image inside the kernel (== input image height)


def _rows_up(x, k):
    """result[i, :] = x[(i + k) % nrows, :].

    Sublane rotation on the XLU (which has slack here) instead of slice +
    zero-concat (which burns vld/vst + select slots).  Rows that wrap around
    end up only in per-image rows that are already invalid downstream, so no
    masking is needed.
    """
    if k == 0:
        return x
    return pltpu.roll(x, x.shape[0] - k, axis=0)


# ----------------------------------------------------------------------------
# The single fused kernel
# ----------------------------------------------------------------------------
def _net_kernel(x_ref, t1_ref, b1_ref, t2_ref, b2_ref, wfc1_ref, bfc1_ref,
                wfc2_ref, bfc2_ref, o_ref):
    tb = o_ref.shape[0]          # images in this batch tile
    x = x_ref[...]               # (tb*28, 28) f32: row = (image, input row)
    n = x.shape[0]

    # ---- conv1 (5x5, 1->10): ONE K=140 bf16 MXU matmul ----------------------
    # LHS lane-concatenates the 5 row-shifted views of x (K = 5 taps * 28 cols).
    # Output column layout: (w % 2) * 128 + (w // 2) * 10 + c, so the
    # W-direction pool pair is a single lane-slice max.
    lhs1 = jnp.concatenate([_rows_up(x, ki) for ki in range(5)], axis=1)
    acc1 = jnp.dot(lhs1.astype(jnp.bfloat16), t1_ref[...],
                   preferred_element_type=jnp.float32)            # (n, 256)
    wp1 = jnp.maximum(acc1[:, 0:120], acc1[:, 128:248])           # pool over W
    hp1 = jnp.maximum(wp1, _rows_up(wp1, 1))                      # pool over H
    # per-channel bias commutes with max; relu fused
    p1 = jnp.maximum(hp1 + b1_ref[...], 0.0)                      # valid rows 2*h2; col = w2*10+c

    # ---- conv2 (5x5, 10->20): ONE K=600 bf16 MXU matmul ----------------------
    # Valid conv1-pooled rows live at stride 2, so taps are row shifts 0,2,..,8.
    # Dropout2d: identity in eval mode.
    lhs2 = jnp.concatenate([_rows_up(p1, 2 * ki) for ki in range(5)], axis=1)
    acc2 = jnp.dot(lhs2.astype(jnp.bfloat16), t2_ref[...],
                   preferred_element_type=jnp.float32)            # (n, 256)
    wp2 = jnp.maximum(acc2[:, 0:80], acc2[:, 128:208])
    hp2 = jnp.maximum(wp2, _rows_up(wp2, 2))
    p2 = jnp.maximum(hp2 + b2_ref[...], 0.0)                      # valid rows 4*h; col = w*20+c

    # ---- compact the 4 valid pooled rows of each image into (tb, 320) --------
    # feat[b, h*80 + w*20 + c] = p2[b*28 + 4h, w*20 + c]; a tiny one-hot
    # selection matmul keeps the row gather on the MXU and makes the FC stage
    # and the output store batch-dense (no per-image sublane slicing).
    feat_full = jnp.concatenate([_rows_up(p2, 4 * h) for h in range(4)], axis=1)
    rows = jax.lax.broadcasted_iota(jnp.int32, (tb, n), 0)
    cols = jax.lax.broadcasted_iota(jnp.int32, (tb, n), 1)
    sel = jnp.where(cols == rows * R, 1.0, 0.0).astype(jnp.bfloat16)   # (tb, n)
    feat = jnp.dot(sel, feat_full.astype(jnp.bfloat16),
                   preferred_element_type=jnp.float32)            # (tb, 320)

    # ---- fc1 (320->50) + relu, fc2 (50->10), log_softmax ---------------------
    f1 = jnp.dot(feat.astype(jnp.bfloat16), wfc1_ref[...],
                 preferred_element_type=jnp.float32) + bfc1_ref[...]
    f1 = jnp.maximum(f1, 0.0)                                     # Dropout: identity (eval)
    logits = jnp.dot(f1, wfc2_ref[...],
                     preferred_element_type=jnp.float32) + bfc2_ref[...]
    m = jnp.max(logits, axis=-1, keepdims=True)
    lse = m + jnp.log(jnp.sum(jnp.exp(logits - m), axis=-1, keepdims=True))
    o_ref[...] = logits - lse                                     # dense (tb, 10) store


# ----------------------------------------------------------------------------
# One-time weight packing (outside the jitted forward)
# ----------------------------------------------------------------------------
def pack_params(params):
    W1 = params["conv1_w"]   # (10, 1, 5, 5)  [c_out, c_in, kh, kw]
    W2 = params["conv2_w"]   # (20, 10, 5, 5)
    Wf1 = params["fc1_w"]    # (50, 320)
    Wf2 = params["fc2_w"]    # (10, 50)

    # conv1 slab: T1[ki*28 + j, (w%2)*128 + (w//2)*10 + c] = W1[c,0,ki,j-w]
    # (zero when j-w not in [0,5))
    j = jnp.arange(28)[:, None]
    w = jnp.arange(24)[None, :]
    d = j - w
    m1 = ((d >= 0) & (d < 5)).astype(jnp.float32)
    W1_t = jnp.transpose(W1[:, 0], (1, 0, 2))                      # (5, 10, 5) [ki, c, kw]
    T1 = W1_t[:, :, jnp.clip(d, 0, 4)] * m1[None, None]            # (5, 10, 28, 24)
    T1 = jnp.transpose(T1, (0, 2, 3, 1))                           # (5, 28, 24, 10)
    T1 = T1.reshape(5, 28, 12, 2, 10)                              # w -> (w2, pw)
    T1 = jnp.transpose(T1, (0, 1, 3, 2, 4)).reshape(5, 28, 2, 120)
    T1 = jnp.pad(T1, ((0, 0), (0, 0), (0, 0), (0, 8))).reshape(5 * 28, 256)

    # conv2 slab: T2[ki*120 + wi*10+ci, (wo%2)*128 + (wo//2)*20 + co] = W2[co,ci,ki,wi-wo]
    wi = jnp.arange(12)[:, None]
    wo = jnp.arange(8)[None, :]
    d2 = wi - wo
    m2 = ((d2 >= 0) & (d2 < 5)).astype(jnp.float32)
    W2_t = jnp.transpose(W2, (2, 1, 0, 3))                         # (5, 10, 20, 5) [ki, ci, co, kw]
    T2 = W2_t[:, :, :, jnp.clip(d2, 0, 4)] * m2[None, None, None]  # (5, 10, 20, 12, 8)
    T2 = jnp.transpose(T2, (0, 3, 1, 4, 2))                        # (5, 12, 10, 8, 20)
    T2 = T2.reshape(5, 120, 4, 2, 20)                              # wo -> (wo2, pw)
    T2 = jnp.transpose(T2, (0, 1, 3, 2, 4)).reshape(5, 120, 2, 80)
    T2 = jnp.pad(T2, ((0, 0), (0, 0), (0, 0), (0, 48))).reshape(5 * 120, 256)

    # fc1: Wfc1[h*80 + w*20 + c, f] = Wf1[f, c*16 + h*4 + w]  (matches feat layout)
    Wfc1 = jnp.transpose(Wf1.reshape(50, 20, 4, 4), (2, 3, 1, 0)).reshape(320, 50)

    return {
        "T1": T1.astype(jnp.bfloat16),                    # (140, 256)
        "b1": jnp.tile(params["conv1_b"], 12)[None, :],   # (1, 120): col = w2*10 + c
        "T2": T2.astype(jnp.bfloat16),                    # (600, 256)
        "b2": jnp.tile(params["conv2_b"], 4)[None, :],    # (1, 80):  col = wo2*20 + co
        "Wfc1": Wfc1.astype(jnp.bfloat16),                # (320, 50)
        "bfc1": params["fc1_b"][None, :],                 # (1, 50)
        "Wfc2": Wf2.T,                                    # (50, 10) f32 (tiny; stays f32)
        "bfc2": params["fc2_b"][None, :],                 # (1, 10)
    }


# ----------------------------------------------------------------------------
# Forward pass
# ----------------------------------------------------------------------------
def _tile_size(batch):
    # 32 images/step amortizes the ~600-cycle per-grid-step overhead; smaller
    # batches use a smaller (still multiple-of-8) tile so the grid keeps >=2
    # steps for v7x's two TensorCores.  All sizes fit comfortably in the
    # 32 MiB VMEM limit below (peak live intermediates ~6 MiB at TB=32), so no
    # per-generation cap is needed.
    if batch >= 64:
        return 32
    if batch > 8:
        return 8 * ((batch + 15) // 16)
    return 8


@jax.jit
def net_forward(x_nchw, packed):
    """x_nchw: (B, 1, 28, 28) float32 -> (B, 10) log-probabilities."""
    B = x_nchw.shape[0]
    TB = _tile_size(B)
    B_pad = TB * pl.cdiv(B, TB)
    if B_pad != B:
        # zero-pad the batch up to a tile multiple (padded rows are discarded)
        x_nchw = jnp.pad(x_nchw, ((0, B_pad - B), (0, 0), (0, 0), (0, 0)))
    x2d = x_nchw.reshape(B_pad * R, 28)     # row = (image, input row)

    out = pl.pallas_call(
        _net_kernel,
        out_shape=jax.ShapeDtypeStruct((B_pad, 10), jnp.float32),
        grid=(B_pad // TB,),
        in_specs=[
            pl.BlockSpec((TB * R, 28), lambda i: (i, 0)),   # input rows (batch-tiled)
            pl.BlockSpec((140, 256), lambda i: (0, 0)),     # conv1 K-folded slab
            pl.BlockSpec((1, 120), lambda i: (0, 0)),
            pl.BlockSpec((600, 256), lambda i: (0, 0)),     # conv2 K-folded slab
            pl.BlockSpec((1, 80), lambda i: (0, 0)),
            pl.BlockSpec((320, 50), lambda i: (0, 0)),      # fc1 folded weight
            pl.BlockSpec((1, 50), lambda i: (0, 0)),
            pl.BlockSpec((50, 10), lambda i: (0, 0)),
            pl.BlockSpec((1, 10), lambda i: (0, 0)),
        ],
        out_specs=pl.BlockSpec((TB, 10), lambda i: (i, 0)),
        compiler_params=pltpu.CompilerParams(
            dimension_semantics=("parallel",),
            vmem_limit_bytes=32 * 1024 * 1024),
    )(x2d, packed["T1"], packed["b1"], packed["T2"], packed["b2"],
      packed["Wfc1"], packed["bfc1"], packed["Wfc2"], packed["bfc2"])
    return out[:B]


# ----------------------------------------------------------------------------
# Pure-JAX reference (PyTorch Net.forward, eval mode) and parameter init
# ----------------------------------------------------------------------------
def _pool2_ref(y):
    B, C, H, W = y.shape
    return y.reshape(B, C, H // 2, 2, W // 2, 2).max(axis=(3, 5))


def reference_forward(x, params):
    dn = ("NCHW", "OIHW", "NCHW")
    hi = jax.lax.Precision.HIGHEST
    y = jax.lax.conv_general_dilated(x, params["conv1_w"], (1, 1), "VALID",
                                     dimension_numbers=dn, precision=hi)
    y = y + params["conv1_b"][None, :, None, None]
    y = jnp.maximum(_pool2_ref(y), 0.0)
    y = jax.lax.conv_general_dilated(y, params["conv2_w"], (1, 1), "VALID",
                                     dimension_numbers=dn, precision=hi)
    y = y + params["conv2_b"][None, :, None, None]
    y = jnp.maximum(_pool2_ref(y), 0.0)
    y = y.reshape(x.shape[0], 320)
    y = jnp.maximum(jnp.dot(y, params["fc1_w"].T, precision=hi) + params["fc1_b"], 0.0)
    y = jnp.dot(y, params["fc2_w"].T, precision=hi) + params["fc2_b"]
    return jax.nn.log_softmax(y, axis=-1)


def init_params(key):
    ks = jax.random.split(key, 8)
    s = 0.1
    return {
        "conv1_w": s * jax.random.normal(ks[0], (10, 1, 5, 5), jnp.float32),
        "conv1_b": s * jax.random.normal(ks[1], (10,), jnp.float32),
        "conv2_w": s * jax.random.normal(ks[2], (20, 10, 5, 5), jnp.float32),
        "conv2_b": s * jax.random.normal(ks[3], (20,), jnp.float32),
        "fc1_w": s * jax.random.normal(ks[4], (50, 320), jnp.float32),
        "fc1_b": s * jax.random.normal(ks[5], (50,), jnp.float32),
        "fc2_w": s * jax.random.normal(ks[6], (10, 50), jnp.float32),
        "fc2_b": s * jax.random.normal(ks[7], (10,), jnp.float32),
    }


if __name__ == "__main__":
    key = jax.random.PRNGKey(0)
    k_in, k_par = jax.random.split(key)
    B = 12                                                      # pads to 16 -> 2 grid steps
    x = jax.random.normal(k_in, (B, 1, 28, 28), jnp.float32)    # NCHW input
    params = init_params(k_par)
    packed = pack_params(params)    # packed once, outside the jitted forward

    out = jax.block_until_ready(net_forward(x, packed))
    assert out.shape == (B, 10)
    assert bool(jnp.all(jnp.isfinite(out)))
    # rows of log_softmax must exp-sum to 1
    assert jnp.allclose(jnp.sum(jnp.exp(out), axis=-1), 1.0, atol=1e-4)
    # numerics vs a pure-JAX reference of the PyTorch forward (bf16 MXU operands)
    ref = reference_forward(x, params)
    assert jnp.allclose(out, ref, atol=5e-2, rtol=5e-2), float(jnp.max(jnp.abs(out - ref)))
    print("KERNEL_OK")
</pallas_src>

<mosaic_0001>
module attributes {stable_mosaic.version = 11 : i64} {
  func.func @_net_kernel(%arg0: i32, %arg1: memref<224x28xf32, #tpu.memory_space<vmem>>, %arg2: memref<140x256xbf16, #tpu.memory_space<vmem>>, %arg3: memref<1x120xf32, #tpu.memory_space<vmem>>, %arg4: memref<600x256xbf16, #tpu.memory_space<vmem>>, %arg5: memref<1x80xf32, #tpu.memory_space<vmem>>, %arg6: memref<320x50xbf16, #tpu.memory_space<vmem>>, %arg7: memref<1x50xf32, #tpu.memory_space<vmem>>, %arg8: memref<50x10xf32, #tpu.memory_space<vmem>>, %arg9: memref<1x10xf32, #tpu.memory_space<vmem>>, %arg10: memref<8x10xf32, #tpu.memory_space<vmem>>) attributes {dimension_semantics = [#tpu.dimension_semantics<parallel>], iteration_bounds = array<i64: 2>, scalar_prefetch = 0 : i64, scratch_operands = 0 : i64, tpu.core_type = #tpu.core_type<tc>, window_params = [{transform_indices = @transform_0, window_bounds = array<i64: 224, 28>}, {pipeline_mode = #tpu.pipeline_mode<synchronous>, transform_indices = @transform_1, window_bounds = array<i64: 140, 256>}, {pipeline_mode = #tpu.pipeline_mode<synchronous>, transform_indices = @transform_2, window_bounds = array<i64: 1, 120>}, {pipeline_mode = #tpu.pipeline_mode<synchronous>, transform_indices = @transform_3, window_bounds = array<i64: 600, 256>}, {pipeline_mode = #tpu.pipeline_mode<synchronous>, transform_indices = @transform_4, window_bounds = array<i64: 1, 80>}, {pipeline_mode = #tpu.pipeline_mode<synchronous>, transform_indices = @transform_5, window_bounds = array<i64: 320, 50>}, {pipeline_mode = #tpu.pipeline_mode<synchronous>, transform_indices = @transform_6, window_bounds = array<i64: 1, 50>}, {pipeline_mode = #tpu.pipeline_mode<synchronous>, transform_indices = @transform_7, window_bounds = array<i64: 50, 10>}, {pipeline_mode = #tpu.pipeline_mode<synchronous>, transform_indices = @transform_8, window_bounds = array<i64: 1, 10>}, {transform_indices = @transform_9, window_bounds = array<i64: 8, 10>}]} {
    %c0 = arith.constant 0 : index
    %c0_0 = arith.constant 0 : index
    %0 = vector.load %arg1[%c0, %c0_0] : memref<224x28xf32, #tpu.memory_space<vmem>>, vector<224x28xf32>
    %c223_i32 = arith.constant 223 : i32
    %1 = tpu.dynamic_rotate %0 by %c223_i32 dim 0 : vector<224x28xf32>, i32 -> vector<224x28xf32>
    %c222_i32 = arith.constant 222 : i32
    %2 = tpu.dynamic_rotate %0 by %c222_i32 dim 0 : vector<224x28xf32>, i32 -> vector<224x28xf32>
    %c221_i32 = arith.constant 221 : i32
    %3 = tpu.dynamic_rotate %0 by %c221_i32 dim 0 : vector<224x28xf32>, i32 -> vector<224x28xf32>
    %c220_i32 = arith.constant 220 : i32
    %4 = tpu.dynamic_rotate %0 by %c220_i32 dim 0 : vector<224x28xf32>, i32 -> vector<224x28xf32>
    %5 = tpu.concatenate %0, %1, %2, %3, %4 in 1 : vector<224x28xf32>, vector<224x28xf32>, vector<224x28xf32>, vector<224x28xf32>, vector<224x28xf32> -> vector<224x140xf32>
    %6 = arith.truncf %5 : vector<224x140xf32> to vector<224x140xbf16>
    %c0_1 = arith.constant 0 : index
    %c0_2 = arith.constant 0 : index
    %7 = vector.load %arg2[%c0_1, %c0_2] : memref<140x256xbf16, #tpu.memory_space<vmem>>, vector<140x256xbf16>
    %cst = arith.constant dense<0.000000e+00> : vector<224x256xf32>
    %8 = tpu.matmul %6, %7, %cst {dimension_numbers = #tpu.dot_dimension_numbers<[1], [0], [0], [1], [0, 0, 1, 1], [], []>} : vector<224x140xbf16>, vector<140x256xbf16>, vector<224x256xf32> -> vector<224x256xf32>
    %9 = vector.extract_strided_slice %8 {offsets = [0, 0], sizes = [224, 120], strides = [1, 1]} : vector<224x256xf32> to vector<224x120xf32>
    %10 = vector.extract_strided_slice %8 {offsets = [0, 128], sizes = [224, 120], strides = [1, 1]} : vector<224x256xf32> to vector<224x120xf32>
    %11 = arith.maximumf %9, %10 : vector<224x120xf32>
    %c223_i32_3 = arith.constant 223 : i32
    %12 = tpu.dynamic_rotate %11 by %c223_i32_3 dim 0 : vector<224x120xf32>, i32 -> vector<224x120xf32>
    %13 = arith.maximumf %11, %12 : vector<224x120xf32>
    %c0_4 = arith.constant 0 : index
    %c0_5 = arith.constant 0 : index
    %14 = vector.load %arg3[%c0_4, %c0_5] : memref<1x120xf32, #tpu.memory_space<vmem>>, vector<1x120xf32>
    %15 = vector.broadcast %14 : vector<1x120xf32> to vector<224x120xf32>
    %16 = arith.addf %13, %15 : vector<224x120xf32>
    %cst_6 = arith.constant 0.000000e+00 : f32
    %17 = vector.broadcast %cst_6 : f32 to vector<224x120xf32>
    %18 = arith.maximumf %16, %17 : vector<224x120xf32>
    %c222_i32_7 = arith.constant 222 : i32
    %19 = tpu.dynamic_rotate %18 by %c222_i32_7 dim 0 : vector<224x120xf32>, i32 -> vector<224x120xf32>
    %c220_i32_8 = arith.constant 220 : i32
    %20 = tpu.dynamic_rotate %18 by %c220_i32_8 dim 0 : vector<224x120xf32>, i32 -> vector<224x120xf32>
    %c218_i32 = arith.constant 218 : i32
    %21 = tpu.dynamic_rotate %18 by %c218_i32 dim 0 : vector<224x120xf32>, i32 -> vector<224x120xf32>
    %c216_i32 = arith.constant 216 : i32
    %22 = tpu.dynamic_rotate %18 by %c216_i32 dim 0 : vector<224x120xf32>, i32 -> vector<224x120xf32>
    %23 = tpu.concatenate %18, %19, %20, %21, %22 in 1 : vector<224x120xf32>, vector<224x120xf32>, vector<224x120xf32>, vector<224x120xf32>, vector<224x120xf32> -> vector<224x600xf32>
    %24 = arith.truncf %23 : vector<224x600xf32> to vector<224x600xbf16>
    %c0_9 = arith.constant 0 : index
    %c0_10 = arith.constant 0 : index
    %25 = vector.load %arg4[%c0_9, %c0_10] : memref<600x256xbf16, #tpu.memory_space<vmem>>, vector<600x256xbf16>
    %cst_11 = arith.constant dense<0.000000e+00> : vector<224x256xf32>
    %26 = tpu.matmul %24, %25, %cst_11 {dimension_numbers = #tpu.dot_dimension_numbers<[1], [0], [0], [1], [0, 0, 1, 1], [], []>} : vector<224x600xbf16>, vector<600x256xbf16>, vector<224x256xf32> -> vector<224x256xf32>
    %27 = vector.extract_strided_slice %26 {offsets = [0, 0], sizes = [224, 80], strides = [1, 1]} : vector<224x256xf32> to vector<224x80xf32>
    %28 = vector.extract_strided_slice %26 {offsets = [0, 128], sizes = [224, 80], strides = [1, 1]} : vector<224x256xf32> to vector<224x80xf32>
    %29 = arith.maximumf %27, %28 : vector<224x80xf32>
    %c222_i32_12 = arith.constant 222 : i32
    %30 = tpu.dynamic_rotate %29 by %c222_i32_12 dim 0 : vector<224x80xf32>, i32 -> vector<224x80xf32>
    %31 = arith.maximumf %29, %30 : vector<224x80xf32>
    %c0_13 = arith.constant 0 : index
    %c0_14 = arith.constant 0 : index
    %32 = vector.load %arg5[%c0_13, %c0_14] : memref<1x80xf32, #tpu.memory_space<vmem>>, vector<1x80xf32>
    %33 = vector.broadcast %32 : vector<1x80xf32> to vector<224x80xf32>
    %34 = arith.addf %31, %33 : vector<224x80xf32>
    %cst_15 = arith.constant 0.000000e+00 : f32
    %35 = vector.broadcast %cst_15 : f32 to vector<224x80xf32>
    %36 = arith.maximumf %34, %35 : vector<224x80xf32>
    %c220_i32_16 = arith.constant 220 : i32
    %37 = tpu.dynamic_rotate %36 by %c220_i32_16 dim 0 : vector<224x80xf32>, i32 -> vector<224x80xf32>
    %c216_i32_17 = arith.constant 216 : i32
    %38 = tpu.dynamic_rotate %36 by %c216_i32_17 dim 0 : vector<224x80xf32>, i32 -> vector<224x80xf32>
    %c212_i32 = arith.constant 212 : i32
    %39 = tpu.dynamic_rotate %36 by %c212_i32 dim 0 : vector<224x80xf32>, i32 -> vector<224x80xf32>
    %40 = tpu.concatenate %36, %37, %38, %39 in 1 : vector<224x80xf32>, vector<224x80xf32>, vector<224x80xf32>, vector<224x80xf32> -> vector<224x320xf32>
    %41 = tpu.iota {dimensions = array<i32: 0>} : vector<8x224xi32>
    %42 = tpu.iota {dimensions = array<i32: 1>} : vector<8x224xi32>
    %c28_i32 = arith.constant 28 : i32
    %43 = vector.broadcast %c28_i32 : i32 to vector<8x224xi32>
    %44 = arith.muli %41, %43 : vector<8x224xi32>
    %45 = arith.cmpi eq, %42, %44 : vector<8x224xi32>
    %cst_18 = arith.constant 1.000000e+00 : f32
    %cst_19 = arith.constant 0.000000e+00 : f32
    %46 = vector.broadcast %cst_18 : f32 to vector<8x224xf32>
    %47 = vector.broadcast %cst_19 : f32 to vector<8x224xf32>
    %48 = arith.select %45, %46, %47 : vector<8x224xi1>, vector<8x224xf32>
    %49 = arith.truncf %48 : vector<8x224xf32> to vector<8x224xbf16>
    %50 = arith.truncf %40 : vector<224x320xf32> to vector<224x320xbf16>
    %cst_20 = arith.constant dense<0.000000e+00> : vector<8x320xf32>
    %51 = tpu.matmul %49, %50, %cst_20 {dimension_numbers = #tpu.dot_dimension_numbers<[1], [0], [0], [1], [0, 0, 1, 1], [], []>} : vector<8x224xbf16>, vector<224x320xbf16>, vector<8x320xf32> -> vector<8x320xf32>
    %52 = arith.truncf %51 : vector<8x320xf32> to vector<8x320xbf16>
    %c0_21 = arith.constant 0 : index
    %c0_22 = arith.constant 0 : index
    %53 = vector.load %arg6[%c0_21, %c0_22] : memref<320x50xbf16, #tpu.memory_space<vmem>>, vector<320x50xbf16>
    %cst_23 = arith.constant dense<0.000000e+00> : vector<8x50xf32>
    %54 = tpu.matmul %52, %53, %cst_23 {dimension_numbers = #tpu.dot_dimension_numbers<[1], [0], [0], [1], [0, 0, 1, 1], [], []>} : vector<8x320xbf16>, vector<320x50xbf16>, vector<8x50xf32> -> vector<8x50xf32>
    %c0_24 = arith.constant 0 : index
    %c0_25 = arith.constant 0 : index
    %55 = vector.load %arg7[%c0_24, %c0_25] : memref<1x50xf32, #tpu.memory_space<vmem>>, vector<1x50xf32>
    %56 = vector.broadcast %55 : vector<1x50xf32> to vector<8x50xf32>
    %57 = arith.addf %54, %56 : vector<8x50xf32>
    %cst_26 = arith.constant 0.000000e+00 : f32
    %58 = vector.broadcast %cst_26 : f32 to vector<8x50xf32>
    %59 = arith.maximumf %57, %58 : vector<8x50xf32>
    %c0_27 = arith.constant 0 : index
    %c0_28 = arith.constant 0 : index
    %60 = vector.load %arg8[%c0_27, %c0_28] : memref<50x10xf32, #tpu.memory_space<vmem>>, vector<50x10xf32>
    %cst_29 = arith.constant dense<0.000000e+00> : vector<8x10xf32>
    %61 = tpu.matmul %59, %60, %cst_29 {dimension_numbers = #tpu.dot_dimension_numbers<[1], [0], [0], [1], [0, 0, 1, 1], [], []>} : vector<8x50xf32>, vector<50x10xf32>, vector<8x10xf32> -> vector<8x10xf32>
    %c0_30 = arith.constant 0 : index
    %c0_31 = arith.constant 0 : index
    %62 = vector.load %arg9[%c0_30, %c0_31] : memref<1x10xf32, #tpu.memory_space<vmem>>, vector<1x10xf32>
    %63 = vector.broadcast %62 : vector<1x10xf32> to vector<8x10xf32>
    %64 = arith.addf %61, %63 : vector<8x10xf32>
    %cst_32 = arith.constant dense<0xFF800000> : vector<8xf32>
    %65 = vector.multi_reduction <maximumf>, %64, %cst_32 [1] : vector<8x10xf32> to vector<8xf32>
    %66 = vector.shape_cast %65 : vector<8xf32> to vector<8x1xf32>
    %67 = vector.broadcast %66 : vector<8x1xf32> to vector<8x10xf32>
    %68 = arith.subf %64, %67 : vector<8x10xf32>
    %69 = math.exp %68 : vector<8x10xf32>
    %cst_33 = arith.constant dense<0.000000e+00> : vector<8xf32>
    %70 = vector.multi_reduction <add>, %69, %cst_33 [1] : vector<8x10xf32> to vector<8xf32>
    %71 = vector.shape_cast %70 : vector<8xf32> to vector<8x1xf32>
    %72 = math.log %71 : vector<8x1xf32>
    %73 = arith.addf %66, %72 : vector<8x1xf32>
    %74 = vector.broadcast %73 : vector<8x1xf32> to vector<8x10xf32>
    %75 = arith.subf %64, %74 : vector<8x10xf32>
    %c0_34 = arith.constant 0 : index
    %c0_35 = arith.constant 0 : index
    %76 = vector.load %arg10[%c0_34, %c0_35] : memref<8x10xf32, #tpu.memory_space<vmem>>, vector<8x10xf32>
    tpu.vector_store %arg10[%c0_34, %c0_35], %75 {strides = array<i32>} : memref<8x10xf32, #tpu.memory_space<vmem>>, vector<8x10xf32>,
    return
  }
  func.func @transform_0(%arg0: i32) -> (i32, i32) {
    %c0_i32 = arith.constant 0 : i32
    %c0_i32_0 = arith.constant 0 : i32
    return %arg0, %c0_i32 : i32, i32
  }
  func.func @transform_1(%arg0: i32) -> (i32, i32) {
    %c0_i32 = arith.constant 0 : i32
    %c0_i32_0 = arith.constant 0 : i32
    %c0_i32_1 = arith.constant 0 : i32
    return %c0_i32, %c0_i32_0 : i32, i32
  }
  func.func @transform_2(%arg0: i32) -> (i32, i32) {
    %c0_i32 = arith.constant 0 : i32
    %c0_i32_0 = arith.constant 0 : i32
    %c0_i32_1 = arith.constant 0 : i32
    return %c0_i32, %c0_i32_0 : i32, i32
  }
  func.func @transform_3(%arg0: i32) -> (i32, i32) {
    %c0_i32 = arith.constant 0 : i32
    %c0_i32_0 = arith.constant 0 : i32
    %c0_i32_1 = arith.constant 0 : i32
    return %c0_i32, %c0_i32_0 : i32, i32
  }
  func.func @transform_4(%arg0: i32) -> (i32, i32) {
    %c0_i32 = arith.constant 0 : i32
    %c0_i32_0 = arith.constant 0 : i32
    %c0_i32_1 = arith.constant 0 : i32
    return %c0_i32, %c0_i32_0 : i32, i32
  }
  func.func @transform_5(%arg0: i32) -> (i32, i32) {
    %c0_i32 = arith.constant 0 : i32
    %c0_i32_0 = arith.constant 0 : i32
    %c0_i32_1 = arith.constant 0 : i32
    return %c0_i32, %c0_i32_0 : i32, i32
  }
  func.func @transform_6(%arg0: i32) -> (i32, i32) {
    %c0_i32 = arith.constant 0 : i32
    %c0_i32_0 = arith.constant 0 : i32
    %c0_i32_1 = arith.constant 0 : i32
    return %c0_i32, %c0_i32_0 : i32, i32
  }
  func.func @transform_7(%arg0: i32) -> (i32, i32) {
    %c0_i32 = arith.constant 0 : i32
    %c0_i32_0 = arith.constant 0 : i32
    %c0_i32_1 = arith.constant 0 : i32
    return %c0_i32, %c0_i32_0 : i32, i32
  }
  func.func @transform_8(%arg0: i32) -> (i32, i32) {
    %c0_i32 = arith.constant 0 : i32
    %c0_i32_0 = arith.constant 0 : i32
    %c0_i32_1 = arith.constant 0 : i32
    return %c0_i32, %c0_i32_0 : i32, i32
  }
  func.func @transform_9(%arg0: i32) -> (i32, i32) {
    %c0_i32 = arith.constant 0 : i32
    %c0_i32_0 = arith.constant 0 : i32
    return %arg0, %c0_i32 : i32, i32
  }
}

</mosaic_0001>

<llo_original>
// kernel: net_forward.1
$region0: #{net_forward.1}
  #allocation0 [shape = 'u32[]', space=smem, size = 0x4, offset = 0x4, fixed_abs, tag = 'smem constant byte address 0x4 - core index']
  #allocation1 [shape = 'u32[144,128]{1,0:T(1,128)}', space=vmem, size = 0x12000, scoped, tag = 'internal scratch']
  %s0 = inlined_call_operand.vmem [shape: f32[448,28], index: 0, kind: input, shape index: {}]
  %s1 = inlined_call_operand.vmem [shape: bf16[140,256], index: 1, kind: input, shape index: {}]
  %s2 = inlined_call_operand.vmem [shape: f32[1,120], index: 2, kind: input, shape index: {}]
  %s3 = inlined_call_operand.vmem [shape: bf16[600,256], index: 3, kind: input, shape index: {}]
  %s4 = inlined_call_operand.vmem [shape: f32[1,80], index: 4, kind: input, shape index: {}]
  %s5 = inlined_call_operand.vmem [shape: bf16[320,50], index: 5, kind: input, shape index: {}]
  %s6 = inlined_call_operand.vmem [shape: f32[1,50], index: 6, kind: input, shape index: {}]
  %s7 = inlined_call_operand.vmem [shape: f32[50,10], index: 7, kind: input, shape index: {}]
  %s8 = inlined_call_operand.vmem [shape: f32[1,10], index: 8, kind: input, shape index: {}]
  %s9 = inlined_call_operand.hbm [shape: f32[16,10], index: 9, kind: output, shape index: {}]
  %s10 = sld [smem:[#allocation0]]
  $region69: #{net_forward.1} parent=0
    _
  %s12 = ssub.s32 1, %s10
  %s13 = scalar_select 0, %s12, %s10
  $region1: #{net_forward.1} parent=0
    #allocation2 [shape = 'u8[8192]{0}', space=vmem, size = 0x2000, scoped, tag = 'output window, operand 0']
    #allocation3 [shape = 's32[2]{0}', space=sflag, size = 0x8, scoped, tag = 'scoped memory for net_forward.1']
    %14 = vsyncpa [#allocation3], 0
    %s15 = scalar_lea.sflag [#allocation3], 1
    %16 = vsyncpa %s15, 0
    loop: start=0, step=1, limit=4
    $region2: #{net_forward.1} parent=1 // loop_pre_header
      _
    $region3: #{net_forward.1} parent=1 // loop_header
      %s18 = sphi 0, %s22
      %p19 = scmp.ge.s32.totalorder %s18, 4
      %s28 = sphi 0, %s30
      %s31 = sphi 0, %s28
      %s32 = sphi 0, %s31
      %s48 = sphi 0, %s32
      %s52 = sphi 0, %s52
      %s54 = sphi 0, %s52
      %s55 = sphi 0, %s54
      %s69 = sphi 0, %s55
      %s73 = sphi 0, %s73
      %s75 = sphi 0, %s73
      %s76 = sphi 0, %s75
      %s90 = sphi 0, %s76
      %s94 = sphi 0, %s94
      %s96 = sphi 0, %s94
      %s97 = sphi 0, %s96
      %s111 = sphi 0, %s97
      %s115 = sphi 0, %s115
      %s117 = sphi 0, %s115
      %s118 = sphi 0, %s117
      %s132 = sphi 0, %s118
      %s136 = sphi 0, %s136
      %s138 = sphi 0, %s136
      %s139 = sphi 0, %s138
      %s153 = sphi 0, %s139
      %s157 = sphi 0, %s157
      %s159 = sphi 0, %s157
      %s160 = sphi 0, %s159
      %s174 = sphi 0, %s160
      %s178 = sphi 0, %s178
      %s180 = sphi 0, %s178
      %s181 = sphi 0, %s180
      %s195 = sphi 0, %s181
      %s199 = sphi 0, %s199
      %s201 = sphi 0, %s199
      %s202 = sphi 0, %s201
      %s216 = sphi 0, %s202
      %s222 = sphi 0, %s224
      %s225 = sphi 0, %s222
      %s226 = sphi 0, %s225
      %s242 = sphi 0, %s226
    $region4: #{net_forward.1} parent=1 // loop_header_branch
      %21 = sbr.rel (%p19) target = $region8
    $region5: #{net_forward.1} parent=1 // loop_body
      %s23 = ssub.s32 %s18, 1
      %s24 = ssub.s32 %s18, 2
      %s25 = sadd.s32 %s18, 1
      %s26 = ssub.s32 %s18, %s25
      %p27 = scmp.eq.s32.totalorder %s26, 0
      %s29 = sadd.s32 %s28, 1
      %s30 = scalar_select %p27, %s28, %s29
      %p33 = pneg %p27
      %p34 = scmp.eq.s32.totalorder %s18, 1
      %p35 = por %p33, %p34
      %p36 = scmp.ne.s32.totalorder %s28, %s31
      %p37 = scmp.eq.s32.totalorder %s18, 0
      %p38 = por %p36, %p37
      %p39 = scmp.ne.s32.totalorder %s28, %s31
      %p40 = scmp.eq.s32.totalorder %s23, 1
      %p41 = por %p39, %p40
      %p42 = scmp.ne.s32.totalorder %s31, %s32
      %p43 = scmp.eq.s32.totalorder %s23, 0
      %p44 = por %p42, %p43
      %p45 = scmp.ne.s32.totalorder %s31, %s32
      %p46 = scmp.eq.s32.totalorder %s24, 1
      %p47 = por %p45, %p46
      %p49 = scmp.ne.s32.totalorder %s32, %s48
      %p50 = scmp.eq.s32.totalorder %s24, 0
      %p51 = por %p49, %p50
      %s53 = sadd.s32 %s52, 1
      %p56 = scmp.eq.s32.totalorder %s18, 1
      %p57 = scmp.ne.s32.totalorder %s52, %s54
      %p58 = scmp.eq.s32.totalorder %s18, 0
      %p59 = por %p57, %p58
      %p60 = scmp.ne.s32.totalorder %s52, %s54
      %p61 = scmp.eq.s32.totalorder %s23, 1
      %p62 = por %p60, %p61
      %p63 = scmp.ne.s32.totalorder %s54, %s55
      %p64 = scmp.eq.s32.totalorder %s23, 0
      %p65 = por %p63, %p64
      %p66 = scmp.ne.s32.totalorder %s54, %s55
      %p67 = scmp.eq.s32.totalorder %s24, 1
      %p68 = por %p66, %p67
      %p70 = scmp.ne.s32.totalorder %s55, %s69
      %p71 = scmp.eq.s32.totalorder %s24, 0
      %p72 = por %p70, %p71
      %s74 = sadd.s32 %s73, 1
      %p77 = scmp.eq.s32.totalorder %s18, 1
      %p78 = scmp.ne.s32.totalorder %s73, %s75
      %p79 = scmp.eq.s32.totalorder %s18, 0
      %p80 = por %p78, %p79
      %p81 = scmp.ne.s32.totalorder %s73, %s75
      %p82 = scmp.eq.s32.totalorder %s23, 1
      %p83 = por %p81, %p82
      %p84 = scmp.ne.s32.totalorder %s75, %s76
      %p85 = scmp.eq.s32.totalorder %s23, 0
      %p86 = por %p84, %p85
      %p87 = scmp.ne.s32.totalorder %s75, %s76
      %p88 = scmp.eq.s32.totalorder %s24, 1
      %p89 = por %p87, %p88
      %p91 = scmp.ne.s32.totalorder %s76, %s90
      %p92 = scmp.eq.s32.totalorder %s24, 0
      %p93 = por %p91, %p92
      %s95 = sadd.s32 %s94, 1
      %p98 = scmp.eq.s32.totalorder %s18, 1
      %p99 = scmp.ne.s32.totalorder %s94, %s96
      %p100 = scmp.eq.s32.totalorder %s18, 0
      %p101 = por %p99, %p100
      %p102 = scmp.ne.s32.totalorder %s94, %s96
      %p103 = scmp.eq.s32.totalorder %s23, 1
      %p104 = por %p102, %p103
      %p105 = scmp.ne.s32.totalorder %s96, %s97
      %p106 = scmp.eq.s32.totalorder %s23, 0
      %p107 = por %p105, %p106
      %p108 = scmp.ne.s32.totalorder %s96, %s97
      %p109 = scmp.eq.s32.totalorder %s24, 1
      %p110 = por %p108, %p109
      %p112 = scmp.ne.s32.totalorder %s97, %s111
      %p113 = scmp.eq.s32.totalorder %s24, 0
      %p114 = por %p112, %p113
      %s116 = sadd.s32 %s115, 1
      %p119 = scmp.eq.s32.totalorder %s18, 1
      %p120 = scmp.ne.s32.totalorder %s115, %s117
      %p121 = scmp.eq.s32.totalorder %s18, 0
      %p122 = por %p120, %p121
      %p123 = scmp.ne.s32.totalorder %s115, %s117
      %p124 = scmp.eq.s32.totalorder %s23, 1
      %p125 = por %p123, %p124
      %p126 = scmp.ne.s32.totalorder %s117, %s118
      %p127 = scmp.eq.s32.totalorder %s23, 0
      %p128 = por %p126, %p127
      %p129 = scmp.ne.s32.totalorder %s117, %s118
      %p130 = scmp.eq.s32.totalorder %s24, 1
      %p131 = por %p129, %p130
      %p133 = scmp.ne.s32.totalorder %s118, %s132
      %p134 = scmp.eq.s32.totalorder %s24, 0
      %p135 = por %p133, %p134
      %s137 = sadd.s32 %s136, 1
      %p140 = scmp.eq.s32.totalorder %s18, 1
      %p141 = scmp.ne.s32.totalorder %s136, %s138
      %p142 = scmp.eq.s32.totalorder %s18, 0
      %p143 = por %p141, %p142
      %p144 = scmp.ne.s32.totalorder %s136, %s138
      %p145 = scmp.eq.s32.totalorder %s23, 1
      %p146 = por %p144, %p145
      %p147 = scmp.ne.s32.totalorder %s138, %s139
      %p148 = scmp.eq.s32.totalorder %s23, 0
      %p149 = por %p147, %p148
      %p150 = scmp.ne.s32.totalorder %s138, %s139
      %p151 = scmp.eq.s32.totalorder %s24, 1
      %p152 = por %p150, %p151
      %p154 = scmp.ne.s32.totalorder %s139, %s153
      %p155 = scmp.eq.s32.totalorder %s24, 0
      %p156 = por %p154, %p155
      %s158 = sadd.s32 %s157, 1
      %p161 = scmp.eq.s32.totalorder %s18, 1
      %p162 = scmp.ne.s32.totalorder %s157, %s159
      %p163 = scmp.eq.s32.totalorder %s18, 0
      %p164 = por %p162, %p163
      %p165 = scmp.ne.s32.totalorder %s157, %s159
      %p166 = scmp.eq.s32.totalorder %s23, 1
      %p167 = por %p165, %p166
      %p168 = scmp.ne.s32.totalorder %s159, %s160
      %p169 = scmp.eq.s32.totalorder %s23, 0
      %p170 = por %p168, %p169
      %p171 = scmp.ne.s32.totalorder %s159, %s160
      %p172 = scmp.eq.s32.totalorder %s24, 1
      %p173 = por %p171, %p172
      %p175 = scmp.ne.s32.totalorder %s160, %s174
      %p176 = scmp.eq.s32.totalorder %s24, 0
      %p177 = por %p175, %p176
      %s179 = sadd.s32 %s178, 1
      %p182 = scmp.eq.s32.totalorder %s18, 1
      %p183 = scmp.ne.s32.totalorder %s178, %s180
      %p184 = scmp.eq.s32.totalorder %s18, 0
      %p185 = por %p183, %p184
      %p186 = scmp.ne.s32.totalorder %s178, %s180
      %p187 = scmp.eq.s32.totalorder %s23, 1
      %p188 = por %p186, %p187
      %p189 = scmp.ne.s32.totalorder %s180, %s181
      %p190 = scmp.eq.s32.totalorder %s23, 0
      %p191 = por %p189, %p190
      %p192 = scmp.ne.s32.totalorder %s180, %s181
      %p193 = scmp.eq.s32.totalorder %s24, 1
      %p194 = por %p192, %p193
      %p196 = scmp.ne.s32.totalorder %s181, %s195
      %p197 = scmp.eq.s32.totalorder %s24, 0
      %p198 = por %p196, %p197
      %s200 = sadd.s32 %s199, 1
      %p203 = scmp.eq.s32.totalorder %s18, 1
      %p204 = scmp.ne.s32.totalorder %s199, %s201
      %p205 = scmp.eq.s32.totalorder %s18, 0
      %p206 = por %p204, %p205
      %p207 = scmp.ne.s32.totalorder %s199, %s201
      %p208 = scmp.eq.s32.totalorder %s23, 1
      %p209 = por %p207, %p208
      %p210 = scmp.ne.s32.totalorder %s201, %s202
      %p211 = scmp.eq.s32.totalorder %s23, 0
      %p212 = por %p210, %p211
      %p213 = scmp.ne.s32.totalorder %s201, %s202
      %p214 = scmp.eq.s32.totalorder %s24, 1
      %p215 = por %p213, %p214
      %p217 = scmp.ne.s32.totalorder %s202, %s216
      %p218 = scmp.eq.s32.totalorder %s24, 0
      %p219 = por %p217, %p218
      %s220 = ssub.s32 %s18, %s25
      %p221 = scmp.eq.s32.totalorder %s220, 0
      %s223 = sadd.s32 %s222, 1
      %s224 = scalar_select %p221, %s222, %s223
      %p227 = pneg %p221
      %p228 = scmp.eq.s32.totalorder %s18, 1
      %p229 = por %p227, %p228
      %p230 = scmp.ne.s32.totalorder %s222, %s225
      %p231 = scmp.eq.s32.totalorder %s18, 0
      %p232 = por %p230, %p231
      %p233 = scmp.ne.s32.totalorder %s222, %s225
      %p234 = scmp.eq.s32.totalorder %s23, 1
      %p235 = por %p233, %p234
      %p236 = scmp.ne.s32.totalorder %s225, %s226
      %p237 = scmp.eq.s32.totalorder %s23, 0
      %p238 = por %p236, %p237
      %p239 = scmp.ne.s32.totalorder %s225, %s226
      %p240 = scmp.eq.s32.totalorder %s24, 1
      %p241 = por %p239, %p240
      %p243 = scmp.ne.s32.totalorder %s226, %s242
      %p244 = scmp.eq.s32.totalorder %s24, 0
      %p245 = por %p243, %p244
      %p246 = scmp.le.s32.totalorder 1, %s18
      %p247 = scmp.lt.s32.totalorder %s18, 3
      %p248 = pnand %p246, %p247
      %p249 = pneg %p248
      // Predicated region
      $region9: #{net_forward.1} parent=5 // pred_check
        _
      $region10: #{net_forward.1} parent=5 // pred_check_branch
        %251 = sbr.rel (%p248) target = $region12
      $region11: #{net_forward.1} parent=5 // pred_region
        %s252 = ssub.s32 %s18, 1
        // Predicated region
        $region13: #{net_forward.1} parent=11 // pred_check
          %p253 = pneg %p65
        $region14: #{net_forward.1} parent=11 // pred_check_branch
          %255 = sbr.rel (%p253) target = $region16
        $region15: #{net_forward.1} parent=11 // pred_region
          _
        $region16: #{net_forward.1} parent=11 // pred_fallthru
          _
        // Predicated region
        $region17: #{net_forward.1} parent=11 // pred_check
          %p256 = pneg %p86
        $region18: #{net_forward.1} parent=11 // pred_check_branch
          %258 = sbr.rel (%p256) target = $region20
        $region19: #{net_forward.1} parent=11 // pred_region
          _
        $region20: #{net_forward.1} parent=11 // pred_fallthru
          _
        // Predicated region
        $region21: #{net_forward.1} parent=11 // pred_check
          %p259 = pneg %p107
        $region22: #{net_forward.1} parent=11 // pred_check_branch
          %261 = sbr.rel (%p259) target = $region24
        $region23: #{net_forward.1} parent=11 // pred_region
          _
        $region24: #{net_forward.1} parent=11 // pred_fallthru
          _
        // Predicated region
        $region25: #{net_forward.1} parent=11 // pred_check
          %p262 = pneg %p128
        $region26: #{net_forward.1} parent=11 // pred_check_branch
          %264 = sbr.rel (%p262) target = $region28
        $region27: #{net_forward.1} parent=11 // pred_region
          _
        $region28: #{net_forward.1} parent=11 // pred_fallthru
          _
        // Predicated region
        $region29: #{net_forward.1} parent=11 // pred_check
          %p265 = pneg %p149
        $region30: #{net_forward.1} parent=11 // pred_check_branch
          %267 = sbr.rel (%p265) target = $region32
        $region31: #{net_forward.1} parent=11 // pred_region
          _
        $region32: #{net_forward.1} parent=11 // pred_fallthru
          _
        // Predicated region
        $region33: #{net_forward.1} parent=11 // pred_check
          %p268 = pneg %p170
        $region34: #{net_forward.1} parent=11 // pred_check_branch
          %270 = sbr.rel (%p268) target = $region36
        $region35: #{net_forward.1} parent=11 // pred_region
          _
        $region36: #{net_forward.1} parent=11 // pred_fallthru
          _
        // Predicated region
        $region37: #{net_forward.1} parent=11 // pred_check
          %p271 = pneg %p191
        $region38: #{net_forward.1} parent=11 // pred_check_branch
          %273 = sbr.rel (%p271) target = $region40
        $region39: #{net_forward.1} parent=11 // pred_region
          _
        $region40: #{net_forward.1} parent=11 // pred_fallthru
          _
        // Predicated region
        $region41: #{net_forward.1} parent=11 // pred_check
          %p274 = pneg %p212
        $region42: #{net_forward.1} parent=11 // pred_check_branch
          %276 = sbr.rel (%p274) target = $region44
        $region43: #{net_forward.1} parent=11 // pred_region
          _
        $region44: #{net_forward.1} parent=11 // pred_fallthru
          _
      $region12: #{net_forward.1} parent=5 // pred_fallthru
        _
      %p277 = scmp.lt.s32.totalorder %s18, 2
      // Predicated region
      $region45: #{net_forward.1} parent=5 // pred_check
        %p278 = pneg %p277
      $region46: #{net_forward.1} parent=5 // pred_check_branch
        %280 = sbr.rel (%p278) target = $region48
      $region47: #{net_forward.1} parent=5 // pred_region
        // Predicated region
        $region49: #{net_forward.1} parent=47 // pred_check
          %p281 = pneg %p38
        $region50: #{net_forward.1} parent=47 // pred_check_branch
          %283 = sbr.rel (%p281) target = $region52
        $region51: #{net_forward.1} parent=47 // pred_region
          %s284 = smul.u32 28, %s18
          %p285 = scmp.lt.s32.totalorder %s284, 55
          %s286 = scalar_select %p285, %s284, 55
          %s287 = smul.addr %s286, 8
          %s288 = scalar_lea.vmem %s0, %s287
          %s289 = smul.u32 28, %s18
        $region52: #{net_forward.1} parent=47 // pred_fallthru
          _
      $region48: #{net_forward.1} parent=5 // pred_fallthru
        _
      %p290 = scmp.le.s32.totalorder 1, %s18
      %p291 = scmp.lt.s32.totalorder %s18, 3
      %p292 = pnand %p290, %p291
      %p293 = pneg %p292
      // Predicated region
      $region53: #{net_forward.1} parent=5 // pred_check
        _
      $region54: #{net_forward.1} parent=5 // pred_check_branch
        %295 = sbr.rel (%p292) target = $region56
      $region55: #{net_forward.1} parent=5 // pred_region
        %s296 = ssub.s32 %s18, 1
        %s297 = smul.u32 28, %s23
        %p298 = scmp.lt.s32.totalorder %s297, 55
        %s299 = scalar_select %p298, %s297, 55
        %s300 = smul.addr %s299, 8
        %s301 = scalar_lea.vmem %s0, %s300
        %p302 = pneg %p44
        %p303 = pneg %p41
        %p304 = pneg %p65
        %p305 = pneg %p62
        %p306 = pneg %p86
        %p307 = pneg %p83
        %p308 = pneg %p107
        %p309 = pneg %p104
        %p310 = pneg %p128
        %p311 = pneg %p125
        %p312 = pneg %p149
        %p313 = pneg %p146
        %p314 = pneg %p170
        %p315 = pneg %p167
        %p316 = pneg %p191
        %p317 = pneg %p188
        %p318 = pneg %p212
        %p319 = pneg %p209
        %p320 = pneg %p238
        %p321 = pneg %p235
        %s322 = sand.u32 %s225, 1
        %s323 = scalar_lea.sflag [#allocation3], %s322
        %s324 = sand.u32 %s225, 1
        %s325 = smul.addr %s324, 8
        %s326 = scalar_lea.vmem [#allocation2], %s325
        %s327 = smul.u32 28, %s23
        %p328 = scmp.lt.s32.totalorder %s327, 55
        %s329 = scalar_select %p328, %s327, 55
        %s330 = smul.addr %s329, 8
        %s331 = scalar_lea.vmem %s0, %s330
        %s332 = smul.u32 28, %s23
        %v334 = vld [vmem:[%s331] sm:$0xff]
        %v335 = vld [vmem:[%s331 + $0x8] sm:$0xff]
        %v336 = vld [vmem:[%s331 + $0x10] sm:$0xff]
        %v337 = vld [vmem:[%s331 + $0x18] sm:$0xff]
        %v338 = vld [vmem:[%s331 + $0x20] sm:$0xff]
        %v339 = vld [vmem:[%s331 + $0x28] sm:$0xff]
        %v340 = vld [vmem:[%s331 + $0x30] sm:$0xff]
        %v341 = vld [vmem:[%s331 + $0x38] sm:$0xff]
        %v342 = vld [vmem:[%s331 + $0x40] sm:$0xff]
        %v343 = vld [vmem:[%s331 + $0x48] sm:$0xff]
        %v344 = vld [vmem:[%s331 + $0x50] sm:$0xff]
        %v345 = vld [vmem:[%s331 + $0x58] sm:$0xff]
        %v346 = vld [vmem:[%s331 + $0x60] sm:$0xff]
        %v347 = vld [vmem:[%s331 + $0x68] sm:$0xff]
        %v348 = vld [vmem:[%s331 + $0x70] sm:$0xff]
        %v349 = vld [vmem:[%s331 + $0x78] sm:$0xff]
        %v350 = vld [vmem:[%s331 + $0x80] sm:$0xff]
        %v351 = vld [vmem:[%s331 + $0x88] sm:$0xff]
        %v352 = vld [vmem:[%s331 + $0x90] sm:$0xff]
        %v353 = vld [vmem:[%s331 + $0x98] sm:$0xff]
        %v354 = vld [vmem:[%s331 + $0xa0] sm:$0xff]
        %v355 = vld [vmem:[%s331 + $0xa8] sm:$0xff]
        %v356 = vld [vmem:[%s331 + $0xb0] sm:$0xff]
        %v357 = vld [vmem:[%s331 + $0xb8] sm:$0xff]
        %v358 = vld [vmem:[%s331 + $0xc0] sm:$0xff]
        %v359 = vld [vmem:[%s331 + $0xc8] sm:$0xff]
        %v360 = vld [vmem:[%s331 + $0xd0] sm:$0xff]
        %v361 = vld [vmem:[%s331 + $0xd8] sm:$0xff]
        %v362 = vrot.slane %v334, 1
        %v363 = vrot.slane %v335, 1
        %v364 = vrot.slane %v336, 1
        %v365 = vrot.slane %v337, 1
        %v366 = vrot.slane %v338, 1
        %v367 = vrot.slane %v339, 1
        %v368 = vrot.slane %v340, 1
        %v369 = vrot.slane %v341, 1
        %v370 = vrot.slane %v342, 1
        %v371 = vrot.slane %v343, 1
        %v372 = vrot.slane %v344, 1
        %v373 = vrot.slane %v345, 1
        %v374 = vrot.slane %v346, 1
        %v375 = vrot.slane %v347, 1
        %v376 = vrot.slane %v348, 1
        %v377 = vrot.slane %v349, 1
        %v378 = vrot.slane %v350, 1
        %v379 = vrot.slane %v351, 1
        %v380 = vrot.slane %v352, 1
        %v381 = vrot.slane %v353, 1
        %v382 = vrot.slane %v354, 1
        %v383 = vrot.slane %v355, 1
        %v384 = vrot.slane %v356, 1
        %v385 = vrot.slane %v357, 1
        %v386 = vrot.slane %v358, 1
        %v387 = vrot.slane %v359, 1
        %v388 = vrot.slane %v360, 1
        %v389 = vrot.slane %v361, 1
        %v390 = vlaneseq
        %v391 = vshrl.u32 %v390, 7
        %vm392 = vcmp.lt.s32.totalorder %v391, 7
        %v393 = vsel %vm392, %v388, %v389
        %v394 = vsel %vm392, %v387, %v388
        %v395 = vsel %vm392, %v386, %v387
        %v396 = vsel %vm392, %v385, %v386
        %v397 = vsel %vm392, %v384, %v385
        %v398 = vsel %vm392, %v383, %v384
        %v399 = vsel %vm392, %v382, %v383
        %v400 = vsel %vm392, %v381, %v382
        %v401 = vsel %vm392, %v380, %v381
        %v402 = vsel %vm392, %v379, %v380
        %v403 = vsel %vm392, %v378, %v379
        %v404 = vsel %vm392, %v377, %v378
        %v405 = vsel %vm392, %v376, %v377
        %v406 = vsel %vm392, %v375, %v376
        %v407 = vsel %vm392, %v374, %v375
        %v408 = vsel %vm392, %v373, %v374
        %v409 = vsel %vm392, %v372, %v373
        %v410 = vsel %vm392, %v371, %v372
        %v411 = vsel %vm392, %v370, %v371
        %v412 = vsel %vm392, %v369, %v370
        %v413 = vsel %vm392, %v368, %v369
        %v414 = vsel %vm392, %v367, %v368
        %v415 = vsel %vm392, %v366, %v367
        %v416 = vsel %vm392, %v365, %v366
        %v417 = vsel %vm392, %v364, %v365
        %v418 = vsel %vm392, %v363, %v364
        %v419 = vsel %vm392, %v362, %v363
        %v420 = vsel %vm392, %v389, %v362
        %v421 = vrot.slane %v334, 2
        %v422 = vrot.slane %v335, 2
        %v423 = vrot.slane %v336, 2
        %v424 = vrot.slane %v337, 2
        %v425 = vrot.slane %v338, 2
        %v426 = vrot.slane %v339, 2
        %v427 = vrot.slane %v340, 2
        %v428 = vrot.slane %v341, 2
        %v429 = vrot.slane %v342, 2
        %v430 = vrot.slane %v343, 2
        %v431 = vrot.slane %v344, 2
        %v432 = vrot.slane %v345, 2
        %v433 = vrot.slane %v346, 2
        %v434 = vrot.slane %v347, 2
        %v435 = vrot.slane %v348, 2
        %v436 = vrot.slane %v349, 2
        %v437 = vrot.slane %v350, 2
        %v438 = vrot.slane %v351, 2
        %v439 = vrot.slane %v352, 2
        %v440 = vrot.slane %v353, 2
        %v441 = vrot.slane %v354, 2
        %v442 = vrot.slane %v355, 2
        %v443 = vrot.slane %v356, 2
        %v444 = vrot.slane %v357, 2
        %v445 = vrot.slane %v358, 2
        %v446 = vrot.slane %v359, 2
        %v447 = vrot.slane %v360, 2
        %v448 = vrot.slane %v361, 2
        %vm449 = vcmp.lt.s32.totalorder %v391, 6
        %v450 = vsel %vm449, %v447, %v448
        %v451 = vsel %vm449, %v446, %v447
        %v452 = vsel %vm449, %v445, %v446
        %v453 = vsel %vm449, %v444, %v445
        %v454 = vsel %vm449, %v443, %v444
        %v455 = vsel %vm449, %v442, %v443
        %v456 = vsel %vm449, %v441, %v442
        %v457 = vsel %vm449, %v440, %v441
        %v458 = vsel %vm449, %v439, %v440
        %v459 = vsel %vm449, %v438, %v439
        %v460 = vsel %vm449, %v437, %v438
        %v461 = vsel %vm449, %v436, %v437
        %v462 = vsel %vm449, %v435, %v436
        %v463 = vsel %vm449, %v434, %v435
        %v464 = vsel %vm449, %v433, %v434
        %v465 = vsel %vm449, %v432, %v433
        %v466 = vsel %vm449, %v431, %v432
        %v467 = vsel %vm449, %v430, %v431
        %v468 = vsel %vm449, %v429, %v430
        %v469 = vsel %vm449, %v428, %v429
        %v470 = vsel %vm449, %v427, %v428
        %v471 = vsel %vm449, %v426, %v427
        %v472 = vsel %vm449, %v425, %v426
        %v473 = vsel %vm449, %v424, %v425
        %v474 = vsel %vm449, %v423, %v424
        %v475 = vsel %vm449, %v422, %v423
        %v476 = vsel %vm449, %v421, %v422
        %v477 = vsel %vm449, %v448, %v421
        %v478 = vrot.slane %v334, 3
        %v479 = vrot.slane %v335, 3
        %v480 = vrot.slane %v336, 3
        %v481 = vrot.slane %v337, 3
        %v482 = vrot.slane %v338, 3
        %v483 = vrot.slane %v339, 3
        %v484 = vrot.slane %v340, 3
        %v485 = vrot.slane %v341, 3
        %v486 = vrot.slane %v342, 3
        %v487 = vrot.slane %v343, 3
        %v488 = vrot.slane %v344, 3
        %v489 = vrot.slane %v345, 3
        %v490 = vrot.slane %v346, 3
        %v491 = vrot.slane %v347, 3
        %v492 = vrot.slane %v348, 3
        %v493 = vrot.slane %v349, 3
        %v494 = vrot.slane %v350, 3
        %v495 = vrot.slane %v351, 3
        %v496 = vrot.slane %v352, 3
        %v497 = vrot.slane %v353, 3
        %v498 = vrot.slane %v354, 3
        %v499 = vrot.slane %v355, 3
        %v500 = vrot.slane %v356, 3
        %v501 = vrot.slane %v357, 3
        %v502 = vrot.slane %v358, 3
        %v503 = vrot.slane %v359, 3
        %v504 = vrot.slane %v360, 3
        %v505 = vrot.slane %v361, 3
        %vm506 = vcmp.lt.s32.totalorder %v391, 5
        %v507 = vsel %vm506, %v504, %v505
        %v508 = vsel %vm506, %v503, %v504
        %v509 = vsel %vm506, %v502, %v503
        %v510 = vsel %vm506, %v501, %v502
        %v511 = vsel %vm506, %v500, %v501
        %v512 = vsel %vm506, %v499, %v500
        %v513 = vsel %vm506, %v498, %v499
        %v514 = vsel %vm506, %v497, %v498
        %v515 = vsel %vm506, %v496, %v497
        %v516 = vsel %vm506, %v495, %v496
        %v517 = vsel %vm506, %v494, %v495
        %v518 = vsel %vm506, %v493, %v494
        %v519 = vsel %vm506, %v492, %v493
        %v520 = vsel %vm506, %v491, %v492
        %v521 = vsel %vm506, %v490, %v491
        %v522 = vsel %vm506, %v489, %v490
        %v523 = vsel %vm506, %v488, %v489
        %v524 = vsel %vm506, %v487, %v488
        %v525 = vsel %vm506, %v486, %v487
        %v526 = vsel %vm506, %v485, %v486
        %v527 = vsel %vm506, %v484, %v485
        %v528 = vsel %vm506, %v483, %v484
        %v529 = vsel %vm506, %v482, %v483
        %v530 = vsel %vm506, %v481, %v482
        %v531 = vsel %vm506, %v480, %v481
        %v532 = vsel %vm506, %v479, %v480
        %v533 = vsel %vm506, %v478, %v479
        %v534 = vsel %vm506, %v505, %v478
        %v535 = vrot.slane %v334, 4
        %v536 = vrot.slane %v335, 4
        %v537 = vrot.slane %v336, 4
        %v538 = vrot.slane %v337, 4
        %v539 = vrot.slane %v338, 4
        %v540 = vrot.slane %v339, 4
        %v541 = vrot.slane %v340, 4
        %v542 = vrot.slane %v341, 4
        %v543 = vrot.slane %v342, 4
        %v544 = vrot.slane %v343, 4
        %v545 = vrot.slane %v344, 4
        %v546 = vrot.slane %v345, 4
        %v547 = vrot.slane %v346, 4
        %v548 = vrot.slane %v347, 4
        %v549 = vrot.slane %v348, 4
        %v550 = vrot.slane %v349, 4
        %v551 = vrot.slane %v350, 4
        %v552 = vrot.slane %v351, 4
        %v553 = vrot.slane %v352, 4
        %v554 = vrot.slane %v353, 4
        %v555 = vrot.slane %v354, 4
        %v556 = vrot.slane %v355, 4
        %v557 = vrot.slane %v356, 4
        %v558 = vrot.slane %v357, 4
        %v559 = vrot.slane %v358, 4
        %v560 = vrot.slane %v359, 4
        %v561 = vrot.slane %v360, 4
        %v562 = vrot.slane %v361, 4
        %vm563 = vcmp.lt.s32.totalorder %v391, 4
        %v564 = vsel %vm563, %v561, %v562
        %v565 = vsel %vm563, %v560, %v561
        %v566 = vsel %vm563, %v559, %v560
        %v567 = vsel %vm563, %v558, %v559
        %v568 = vsel %vm563, %v557, %v558
        %v569 = vsel %vm563, %v556, %v557
        %v570 = vsel %vm563, %v555, %v556
        %v571 = vsel %vm563, %v554, %v555
        %v572 = vsel %vm563, %v553, %v554
        %v573 = vsel %vm563, %v552, %v553
        %v574 = vsel %vm563, %v551, %v552
        %v575 = vsel %vm563, %v550, %v551
        %v576 = vsel %vm563, %v549, %v550
        %v577 = vsel %vm563, %v548, %v549
        %v578 = vsel %vm563, %v547, %v548
        %v579 = vsel %vm563, %v546, %v547
        %v580 = vsel %vm563, %v545, %v546
        %v581 = vsel %vm563, %v544, %v545
        %v582 = vsel %vm563, %v543, %v544
        %v583 = vsel %vm563, %v542, %v543
        %v584 = vsel %vm563, %v541, %v542
        %v585 = vsel %vm563, %v540, %v541
        %v586 = vsel %vm563, %v539, %v540
        %v587 = vsel %vm563, %v538, %v539
        %v588 = vsel %vm563, %v537, %v538
        %v589 = vsel %vm563, %v536, %v537
        %v590 = vsel %vm563, %v535, %v536
        %v591 = vsel %vm563, %v562, %v535
        %620 = vrot.lane.b32.xlu0 %v419, 28
        %v621 = vpop.permute.xlu0 %620
        %622 = vrot.lane.b32.xlu0 %v418, 28
        %v623 = vpop.permute.xlu0 %622
        %624 = vrot.lane.b32.xlu0 %v417, 28
        %v625 = vpop.permute.xlu0 %624
        %626 = vrot.lane.b32.xlu0 %v416, 28
        %v627 = vpop.permute.xlu0 %626
        %628 = vrot.lane.b32.xlu0 %v415, 28
        %v629 = vpop.permute.xlu0 %628
        %630 = vrot.lane.b32.xlu0 %v414, 28
        %v631 = vpop.permute.xlu0 %630
        %632 = vrot.lane.b32.xlu0 %v413, 28
        %v633 = vpop.permute.xlu0 %632
        %634 = vrot.lane.b32.xlu0 %v412, 28
        %v635 = vpop.permute.xlu0 %634
        %636 = vrot.lane.b32.xlu0 %v411, 28
        %v637 = vpop.permute.xlu0 %636
        %638 = vrot.lane.b32.xlu0 %v410, 28
        %v639 = vpop.permute.xlu0 %638
        %640 = vrot.lane.b32.xlu0 %v409, 28
        %v641 = vpop.permute.xlu0 %640
        %642 = vrot.lane.b32.xlu0 %v408, 28
        %v643 = vpop.permute.xlu0 %642
        %644 = vrot.lane.b32.xlu0 %v407, 28
        %v645 = vpop.permute.xlu0 %644
        %646 = vrot.lane.b32.xlu0 %v406, 28
        %v647 = vpop.permute.xlu0 %646
        %648 = vrot.lane.b32.xlu0 %v405, 28
        %v649 = vpop.permute.xlu0 %648
        %650 = vrot.lane.b32.xlu0 %v404, 28
        %v651 = vpop.permute.xlu0 %650
        %652 = vrot.lane.b32.xlu0 %v403, 28
        %v653 = vpop.permute.xlu0 %652
        %654 = vrot.lane.b32.xlu0 %v402, 28
        %v655 = vpop.permute.xlu0 %654
        %656 = vrot.lane.b32.xlu0 %v401, 28
        %v657 = vpop.permute.xlu0 %656
        %658 = vrot.lane.b32.xlu0 %v400, 28
        %v659 = vpop.permute.xlu0 %658
        %660 = vrot.lane.b32.xlu0 %v399, 28
        %v661 = vpop.permute.xlu0 %660
        %662 = vrot.lane.b32.xlu0 %v398, 28
        %v663 = vpop.permute.xlu0 %662
        %664 = vrot.lane.b32.xlu0 %v397, 28
        %v665 = vpop.permute.xlu0 %664
        %666 = vrot.lane.b32.xlu0 %v396, 28
        %v667 = vpop.permute.xlu0 %666
        %668 = vrot.lane.b32.xlu0 %v395, 28
        %v669 = vpop.permute.xlu0 %668
        %670 = vrot.lane.b32.xlu0 %v394, 28
        %v671 = vpop.permute.xlu0 %670
        %672 = vrot.lane.b32.xlu0 %v393, 28
        %v673 = vpop.permute.xlu0 %672
        %674 = vrot.lane.b32.xlu0 %v420, 28
        %v675 = vpop.permute.xlu0 %674
        %732 = vrot.lane.b32.xlu0 %v476, 56
        %v733 = vpop.permute.xlu0 %732
        %734 = vrot.lane.b32.xlu0 %v475, 56
        %v735 = vpop.permute.xlu0 %734
        %736 = vrot.lane.b32.xlu0 %v474, 56
        %v737 = vpop.permute.xlu0 %736
        %738 = vrot.lane.b32.xlu0 %v473, 56
        %v739 = vpop.permute.xlu0 %738
        %740 = vrot.lane.b32.xlu0 %v472, 56
        %v741 = vpop.permute.xlu0 %740
        %742 = vrot.lane.b32.xlu0 %v471, 56
        %v743 = vpop.permute.xlu0 %742
        %744 = vrot.lane.b32.xlu0 %v470, 56
        %v745 = vpop.permute.xlu0 %744
        %746 = vrot.lane.b32.xlu0 %v469, 56
        %v747 = vpop.permute.xlu0 %746
        %748 = vrot.lane.b32.xlu0 %v468, 56
        %v749 = vpop.permute.xlu0 %748
        %750 = vrot.lane.b32.xlu0 %v467, 56
        %v751 = vpop.permute.xlu0 %750
        %752 = vrot.lane.b32.xlu0 %v466, 56
        %v753 = vpop.permute.xlu0 %752
        %754 = vrot.lane.b32.xlu0 %v465, 56
        %v755 = vpop.permute.xlu0 %754
        %756 = vrot.lane.b32.xlu0 %v464, 56
        %v757 = vpop.permute.xlu0 %756
        %758 = vrot.lane.b32.xlu0 %v463, 56
        %v759 = vpop.permute.xlu0 %758
        %760 = vrot.lane.b32.xlu0 %v462, 56
        %v761 = vpop.permute.xlu0 %760
        %762 = vrot.lane.b32.xlu0 %v461, 56
        %v763 = vpop.permute.xlu0 %762
        %764 = vrot.lane.b32.xlu0 %v460, 56
        %v765 = vpop.permute.xlu0 %764
        %766 = vrot.lane.b32.xlu0 %v459, 56
        %v767 = vpop.permute.xlu0 %766
        %768 = vrot.lane.b32.xlu0 %v458, 56
        %v769 = vpop.permute.xlu0 %768
        %770 = vrot.lane.b32.xlu0 %v457, 56
        %v771 = vpop.permute.xlu0 %770
        %772 = vrot.lane.b32.xlu0 %v456, 56
        %v773 = vpop.permute.xlu0 %772
        %774 = vrot.lane.b32.xlu0 %v455, 56
        %v775 = vpop.permute.xlu0 %774
        %776 = vrot.lane.b32.xlu0 %v454, 56
        %v777 = vpop.permute.xlu0 %776
        %778 = vrot.lane.b32.xlu0 %v453, 56
        %v779 = vpop.permute.xlu0 %778
        %780 = vrot.lane.b32.xlu0 %v452, 56
        %v781 = vpop.permute.xlu0 %780
        %782 = vrot.lane.b32.xlu0 %v451, 56
        %v783 = vpop.permute.xlu0 %782
        %784 = vrot.lane.b32.xlu0 %v450, 56
        %v785 = vpop.permute.xlu0 %784
        %786 = vrot.lane.b32.xlu0 %v477, 56
        %v787 = vpop.permute.xlu0 %786
        %844 = vrot.lane.b32.xlu0 %v533, 84
        %v845 = vpop.permute.xlu0 %844
        %846 = vrot.lane.b32.xlu0 %v532, 84
        %v847 = vpop.permute.xlu0 %846
        %848 = vrot.lane.b32.xlu0 %v531, 84
        %v849 = vpop.permute.xlu0 %848
        %850 = vrot.lane.b32.xlu0 %v530, 84
        %v851 = vpop.permute.xlu0 %850
        %852 = vrot.lane.b32.xlu0 %v529, 84
        %v853 = vpop.permute.xlu0 %852
        %854 = vrot.lane.b32.xlu0 %v528, 84
        %v855 = vpop.permute.xlu0 %854
        %856 = vrot.lane.b32.xlu0 %v527, 84
        %v857 = vpop.permute.xlu0 %856
        %858 = vrot.lane.b32.xlu0 %v526, 84
        %v859 = vpop.permute.xlu0 %858
        %860 = vrot.lane.b32.xlu0 %v525, 84
        %v861 = vpop.permute.xlu0 %860
        %862 = vrot.lane.b32.xlu0 %v524, 84
        %v863 = vpop.permute.xlu0 %862
        %864 = vrot.lane.b32.xlu0 %v523, 84
        %v865 = vpop.permute.xlu0 %864
        %866 = vrot.lane.b32.xlu0 %v522, 84
        %v867 = vpop.permute.xlu0 %866
        %868 = vrot.lane.b32.xlu0 %v521, 84
        %v869 = vpop.permute.xlu0 %868
        %870 = vrot.lane.b32.xlu0 %v520, 84
        %v871 = vpop.permute.xlu0 %870
        %872 = vrot.lane.b32.xlu0 %v519, 84
        %v873 = vpop.permute.xlu0 %872
        %874 = vrot.lane.b32.xlu0 %v518, 84
        %v875 = vpop.permute.xlu0 %874
        %876 = vrot.lane.b32.xlu0 %v517, 84
        %v877 = vpop.permute.xlu0 %876
        %878 = vrot.lane.b32.xlu0 %v516, 84
        %v879 = vpop.permute.xlu0 %878
        %880 = vrot.lane.b32.xlu0 %v515, 84
        %v881 = vpop.permute.xlu0 %880
        %882 = vrot.lane.b32.xlu0 %v514, 84
        %v883 = vpop.permute.xlu0 %882
        %884 = vrot.lane.b32.xlu0 %v513, 84
        %v885 = vpop.permute.xlu0 %884
        %886 = vrot.lane.b32.xlu0 %v512, 84
        %v887 = vpop.permute.xlu0 %886
        %888 = vrot.lane.b32.xlu0 %v511, 84
        %v889 = vpop.permute.xlu0 %888
        %890 = vrot.lane.b32.xlu0 %v510, 84
        %v891 = vpop.permute.xlu0 %890
        %892 = vrot.lane.b32.xlu0 %v509, 84
        %v893 = vpop.permute.xlu0 %892
        %894 = vrot.lane.b32.xlu0 %v508, 84
        %v895 = vpop.permute.xlu0 %894
        %896 = vrot.lane.b32.xlu0 %v507, 84
        %v897 = vpop.permute.xlu0 %896
        %898 = vrot.lane.b32.xlu0 %v534, 84
        %v899 = vpop.permute.xlu0 %898
        %956 = vrot.lane.b32.xlu0 %v590, 112
        %v957 = vpop.permute.xlu0 %956
        %958 = vrot.lane.b32.xlu0 %v589, 112
        %v959 = vpop.permute.xlu0 %958
        %960 = vrot.lane.b32.xlu0 %v588, 112
        %v961 = vpop.permute.xlu0 %960
        %962 = vrot.lane.b32.xlu0 %v587, 112
        %v963 = vpop.permute.xlu0 %962
        %964 = vrot.lane.b32.xlu0 %v586, 112
        %v965 = vpop.permute.xlu0 %964
        %966 = vrot.lane.b32.xlu0 %v585, 112
        %v967 = vpop.permute.xlu0 %966
        %968 = vrot.lane.b32.xlu0 %v584, 112
        %v969 = vpop.permute.xlu0 %968
        %970 = vrot.lane.b32.xlu0 %v583, 112
        %v971 = vpop.permute.xlu0 %970
        %972 = vrot.lane.b32.xlu0 %v582, 112
        %v973 = vpop.permute.xlu0 %972
        %974 = vrot.lane.b32.xlu0 %v581, 112
        %v975 = vpop.permute.xlu0 %974
        %976 = vrot.lane.b32.xlu0 %v580, 112
        %v977 = vpop.permute.xlu0 %976
        %978 = vrot.lane.b32.xlu0 %v579, 112
        %v979 = vpop.permute.xlu0 %978
        %980 = vrot.lane.b32.xlu0 %v578, 112
        %v981 = vpop.permute.xlu0 %980
        %982 = vrot.lane.b32.xlu0 %v577, 112
        %v983 = vpop.permute.xlu0 %982
        %984 = vrot.lane.b32.xlu0 %v576, 112
        %v985 = vpop.permute.xlu0 %984
        %986 = vrot.lane.b32.xlu0 %v575, 112
        %v987 = vpop.permute.xlu0 %986
        %988 = vrot.lane.b32.xlu0 %v574, 112
        %v989 = vpop.permute.xlu0 %988
        %990 = vrot.lane.b32.xlu0 %v573, 112
        %v991 = vpop.permute.xlu0 %990
        %992 = vrot.lane.b32.xlu0 %v572, 112
        %v993 = vpop.permute.xlu0 %992
        %994 = vrot.lane.b32.xlu0 %v571, 112
        %v995 = vpop.permute.xlu0 %994
        %996 = vrot.lane.b32.xlu0 %v570, 112
        %v997 = vpop.permute.xlu0 %996
        %998 = vrot.lane.b32.xlu0 %v569, 112
        %v999 = vpop.permute.xlu0 %998
        %1000 = vrot.lane.b32.xlu0 %v568, 112
        %v1001 = vpop.permute.xlu0 %1000
        %1002 = vrot.lane.b32.xlu0 %v567, 112
        %v1003 = vpop.permute.xlu0 %1002
        %1004 = vrot.lane.b32.xlu0 %v566, 112
        %v1005 = vpop.permute.xlu0 %1004
        %1006 = vrot.lane.b32.xlu0 %v565, 112
        %v1007 = vpop.permute.xlu0 %1006
        %1008 = vrot.lane.b32.xlu0 %v564, 112
        %v1009 = vpop.permute.xlu0 %1008
        %1010 = vrot.lane.b32.xlu0 %v591, 112
        %v1011 = vpop.permute.xlu0 %1010
        %vm1040 = vcmask 228352
        %v1041 = vsel %vm1040, %v334, %v621
        %v1042 = vsel %vm1040, %v335, %v623
        %v1043 = vsel %vm1040, %v336, %v625
        %v1044 = vsel %vm1040, %v337, %v627
        %v1045 = vsel %vm1040, %v338, %v629
        %v1046 = vsel %vm1040, %v339, %v631
        %v1047 = vsel %vm1040, %v340, %v633
        %v1048 = vsel %vm1040, %v341, %v635
        %v1049 = vsel %vm1040, %v342, %v637
        %v1050 = vsel %vm1040, %v343, %v639
        %v1051 = vsel %vm1040, %v344, %v641
        %v1052 = vsel %vm1040, %v345, %v643
        %v1053 = vsel %vm1040, %v346, %v645
        %v1054 = vsel %vm1040, %v347, %v647
        %v1055 = vsel %vm1040, %v348, %v649
        %v1056 = vsel %vm1040, %v349, %v651
        %v1057 = vsel %vm1040, %v350, %v653
        %v1058 = vsel %vm1040, %v351, %v655
        %v1059 = vsel %vm1040, %v352, %v657
        %v1060 = vsel %vm1040, %v353, %v659
        %v1061 = vsel %vm1040, %v354, %v661
        %v1062 = vsel %vm1040, %v355, %v663
        %v1063 = vsel %vm1040, %v356, %v665
        %v1064 = vsel %vm1040, %v357, %v667
        %v1065 = vsel %vm1040, %v358, %v669
        %v1066 = vsel %vm1040, %v359, %v671
        %v1067 = vsel %vm1040, %v360, %v673
        %v1068 = vsel %vm1040, %v361, %v675
        %vm1069 = vcmask 457728
        %v1070 = vsel %vm1069, %v1041, %v733
        %v1071 = vsel %vm1069, %v1042, %v735
        %v1072 = vsel %vm1069, %v1043, %v737
        %v1073 = vsel %vm1069, %v1044, %v739
        %v1074 = vsel %vm1069, %v1045, %v741
        %v1075 = vsel %vm1069, %v1046, %v743
        %v1076 = vsel %vm1069, %v1047, %v745
        %v1077 = vsel %vm1069, %v1048, %v747
        %v1078 = vsel %vm1069, %v1049, %v749
        %v1079 = vsel %vm1069, %v1050, %v751
        %v1080 = vsel %vm1069, %v1051, %v753
        %v1081 = vsel %vm1069, %v1052, %v755
        %v1082 = vsel %vm1069, %v1053, %v757
        %v1083 = vsel %vm1069, %v1054, %v759
        %v1084 = vsel %vm1069, %v1055, %v761
        %v1085 = vsel %vm1069, %v1056, %v763
        %v1086 = vsel %vm1069, %v1057, %v765
        %v1087 = vsel %vm1069, %v1058, %v767
        %v1088 = vsel %vm1069, %v1059, %v769
        %v1089 = vsel %vm1069, %v1060, %v771
        %v1090 = vsel %vm1069, %v1061, %v773
        %v1091 = vsel %vm1069, %v1062, %v775
        %v1092 = vsel %vm1069, %v1063, %v777
        %v1093 = vsel %vm1069, %v1064, %v779
        %v1094 = vsel %vm1069, %v1065, %v781
        %v1095 = vsel %vm1069, %v1066, %v783
        %v1096 = vsel %vm1069, %v1067, %v785
        %v1097 = vsel %vm1069, %v1068, %v787
        %vm1098 = vcmask 687104
        %v1099 = vsel %vm1098, %v1070, %v845
        %v1100 = vsel %vm1098, %v1071, %v847
        %v1101 = vsel %vm1098, %v1072, %v849
        %v1102 = vsel %vm1098, %v1073, %v851
        %v1103 = vsel %vm1098, %v1074, %v853
        %v1104 = vsel %vm1098, %v1075, %v855
        %v1105 = vsel %vm1098, %v1076, %v857
        %v1106 = vsel %vm1098, %v1077, %v859
        %v1107 = vsel %vm1098, %v1078, %v861
        %v1108 = vsel %vm1098, %v1079, %v863
        %v1109 = vsel %vm1098, %v1080, %v865
        %v1110 = vsel %vm1098, %v1081, %v867
        %v1111 = vsel %vm1098, %v1082, %v869
        %v1112 = vsel %vm1098, %v1083, %v871
        %v1113 = vsel %vm1098, %v1084, %v873
        %v1114 = vsel %vm1098, %v1085, %v875
        %v1115 = vsel %vm1098, %v1086, %v877
        %v1116 = vsel %vm1098, %v1087, %v879
        %v1117 = vsel %vm1098, %v1088, %v881
        %v1118 = vsel %vm1098, %v1089, %v883
        %v1119 = vsel %vm1098, %v1090, %v885
        %v1120 = vsel %vm1098, %v1091, %v887
        %v1121 = vsel %vm1098, %v1092, %v889
        %v1122 = vsel %vm1098, %v1093, %v891
        %v1123 = vsel %vm1098, %v1094, %v893
        %v1124 = vsel %vm1098, %v1095, %v895
        %v1125 = vsel %vm1098, %v1096, %v897
        %v1126 = vsel %vm1098, %v1097, %v899
        %vm1127 = vcmask 916480
        %v1128 = vsel %vm1127, %v1099, %v957
        %v1129 = vsel %vm1127, %v1100, %v959
        %v1130 = vsel %vm1127, %v1101, %v961
        %v1131 = vsel %vm1127, %v1102, %v963
        %v1132 = vsel %vm1127, %v1103, %v965
        %v1133 = vsel %vm1127, %v1104, %v967
        %v1134 = vsel %vm1127, %v1105, %v969
        %v1135 = vsel %vm1127, %v1106, %v971
        %v1136 = vsel %vm1127, %v1107, %v973
        %v1137 = vsel %vm1127, %v1108, %v975
        %v1138 = vsel %vm1127, %v1109, %v977
        %v1139 = vsel %vm1127, %v1110, %v979
        %v1140 = vsel %vm1127, %v1111, %v981
        %v1141 = vsel %vm1127, %v1112, %v983
        %v1142 = vsel %vm1127, %v1113, %v985
        %v1143 = vsel %vm1127, %v1114, %v987
        %v1144 = vsel %vm1127, %v1115, %v989
        %v1145 = vsel %vm1127, %v1116, %v991
        %v1146 = vsel %vm1127, %v1117, %v993
        %v1147 = vsel %vm1127, %v1118, %v995
        %v1148 = vsel %vm1127, %v1119, %v997
        %v1149 = vsel %vm1127, %v1120, %v999
        %v1150 = vsel %vm1127, %v1121, %v1001
        %v1151 = vsel %vm1127, %v1122, %v1003
        %v1152 = vsel %vm1127, %v1123, %v1005
        %v1153 = vsel %vm1127, %v1124, %v1007
        %v1154 = vsel %vm1127, %v1125, %v1009
        %v1155 = vsel %vm1127, %v1126, %v1011
        %v1156 = vpack.c.bf16 %v1129, %v1128
        %v1157 = vpack.c.bf16 %v959, %v957
        %v1158 = vpack.c.bf16 %v1131, %v1130
        %v1159 = vpack.c.bf16 %v963, %v961
        %v1160 = vpack.c.bf16 %v1133, %v1132
        %v1161 = vpack.c.bf16 %v967, %v965
        %v1162 = vpack.c.bf16 %v1135, %v1134
        %v1163 = vpack.c.bf16 %v971, %v969
        %v1164 = vpack.c.bf16 %v1137, %v1136
        %v1165 = vpack.c.bf16 %v975, %v973
        %v1166 = vpack.c.bf16 %v1139, %v1138
        %v1167 = vpack.c.bf16 %v979, %v977
        %v1168 = vpack.c.bf16 %v1141, %v1140
        %v1169 = vpack.c.bf16 %v983, %v981
        %v1170 = vpack.c.bf16 %v1143, %v1142
        %v1171 = vpack.c.bf16 %v987, %v985
        %v1172 = vpack.c.bf16 %v1145, %v1144
        %v1173 = vpack.c.bf16 %v991, %v989
        %v1174 = vpack.c.bf16 %v1147, %v1146
        %v1175 = vpack.c.bf16 %v995, %v993
        %v1176 = vpack.c.bf16 %v1149, %v1148
        %v1177 = vpack.c.bf16 %v999, %v997
        %v1178 = vpack.c.bf16 %v1151, %v1150
        %v1179 = vpack.c.bf16 %v1003, %v1001
        %v1180 = vpack.c.bf16 %v1153, %v1152
        %v1181 = vpack.c.bf16 %v1007, %v1005
        %v1182 = vpack.c.bf16 %v1155, %v1154
        %v1183 = vpack.c.bf16 %v1011, %v1009
        %v1184 = vld [vmem:[%s1] sm:$0xff]
        %v1185 = vld [vmem:[%s1 + $0x8] sm:$0xff]
        %v1186 = vld [vmem:[%s1 + $0x10] sm:$0xff]
        %v1187 = vld [vmem:[%s1 + $0x18] sm:$0xff]
        %v1188 = vld [vmem:[%s1 + $0x20] sm:$0xff]
        %v1189 = vld [vmem:[%s1 + $0x28] sm:$0xff]
        %v1190 = vld [vmem:[%s1 + $0x30] sm:$0xff]
        %v1191 = vld [vmem:[%s1 + $0x38] sm:$0xff]
        %v1192 = vld [vmem:[%s1 + $0x40] sm:$0xff]
        %v1193 = vld [vmem:[%s1 + $0x48] sm:$0xff]
        %v1194 = vld [vmem:[%s1 + $0x50] sm:$0xff]
        %v1195 = vld [vmem:[%s1 + $0x58] sm:$0xff]
        %v1196 = vld [vmem:[%s1 + $0x60] sm:$0xff]
        %v1197 = vld [vmem:[%s1 + $0x68] sm:$0xff]
        %v1198 = vld [vmem:[%s1 + $0x70] sm:$0xff]
        %v1199 = vld [vmem:[%s1 + $0x78] sm:$0xff]
        %v1200 = vld [vmem:[%s1 + $0x80] sm:$0xff]
        %v1201 = vld [vmem:[%s1 + $0x88] sm:$0x33]
        %v1220 = vunpack.c.l.b16 %v1184
        %v1221 = vunpack.c.h.b16 %v1184
        %v1222 = vunpack.c.l.b16 %v1185
        %v1223 = vunpack.c.h.b16 %v1185
        %v1224 = vunpack.c.l.b16 %v1186
        %v1225 = vunpack.c.h.b16 %v1186
        %v1226 = vunpack.c.l.b16 %v1187
        %v1227 = vunpack.c.h.b16 %v1187
        %v1228 = vunpack.c.l.b16 %v1188
        %v1229 = vunpack.c.h.b16 %v1188
        %v1230 = vunpack.c.l.b16 %v1189
        %v1231 = vunpack.c.h.b16 %v1189
        %v1232 = vunpack.c.l.b16 %v1190
        %v1233 = vunpack.c.h.b16 %v1190
        %v1234 = vunpack.c.l.b16 %v1191
        %v1235 = vunpack.c.h.b16 %v1191
        %v1236 = vunpack.c.l.b16 %v1192
        %v1237 = vunpack.c.h.b16 %v1192
        %v1238 = vunpack.c.l.b16 %v1193
        %v1239 = vunpack.c.h.b16 %v1193
        %v1240 = vunpack.c.l.b16 %v1194
        %v1241 = vunpack.c.h.b16 %v1194
        %v1242 = vunpack.c.l.b16 %v1195
        %v1243 = vunpack.c.h.b16 %v1195
        %v1244 = vunpack.c.l.b16 %v1196
        %v1245 = vunpack.c.h.b16 %v1196
        %v1246 = vunpack.c.l.b16 %v1197
        %v1247 = vunpack.c.h.b16 %v1197
        %v1248 = vunpack.c.l.b16 %v1198
        %v1249 = vunpack.c.h.b16 %v1198
        %v1250 = vunpack.c.l.b16 %v1199
        %v1251 = vunpack.c.h.b16 %v1199
        %v1252 = vunpack.c.l.b16 %v1200
        %v1253 = vunpack.c.h.b16 %v1200
        %v1254 = vunpack.c.l.b16 %v1201
        %v1255 = vunpack.c.h.b16 %v1201
        %v1256 = vpack.c.b16 %v1222, %v1220
        %v1257 = vpack.c.b16 %v1223, %v1221
        %v1258 = vpack.c.b16 %v1226, %v1224
        %v1259 = vpack.c.b16 %v1227, %v1225
        %v1260 = vpack.c.b16 %v1230, %v1228
        %v1261 = vpack.c.b16 %v1231, %v1229
        %v1262 = vpack.c.b16 %v1234, %v1232
        %v1263 = vpack.c.b16 %v1235, %v1233
        %v1264 = vpack.c.b16 %v1238, %v1236
        %v1265 = vpack.c.b16 %v1239, %v1237
        %v1266 = vpack.c.b16 %v1242, %v1240
        %v1267 = vpack.c.b16 %v1243, %v1241
        %v1268 = vpack.c.b16 %v1246, %v1244
        %v1269 = vpack.c.b16 %v1247, %v1245
        %v1270 = vpack.c.b16 %v1250, %v1248
        %v1271 = vpack.c.b16 %v1251, %v1249
        %v1272 = vpack.c.b16 %v1254, %v1252
        %v1273 = vpack.c.b16 %v1255, %v1253
        %vm1290 = vcmask 97280
        %v1292 = vsel %vm1290, %v1157, 0
        %v1295 = vsel %vm1290, %v1159, 0
        %v1298 = vsel %vm1290, %v1161, 0
        %v1301 = vsel %vm1290, %v1163, 0
        %v1304 = vsel %vm1290, %v1165, 0
        %v1307 = vsel %vm1290, %v1167, 0
        %v1310 = vsel %vm1290, %v1169, 0
        %v1313 = vsel %vm1290, %v1171, 0
        %v1316 = vsel %vm1290, %v1173, 0
        %v1319 = vsel %vm1290, %v1175, 0
        %v1322 = vsel %vm1290, %v1177, 0
        %v1325 = vsel %vm1290, %v1179, 0
        %v1328 = vsel %vm1290, %v1181, 0
        %v1331 = vsel %vm1290, %v1183, 0
        %vm1333 = vcmask 1045504
        %v1335 = vsel %vm1333, %v1272, 0
        %v1338 = vsel %vm1333, %v1273, 0
        %1340 = vmatprep.subr.bf16.mxu0 %v1271
        %1341 = vmatpush1.bf16.msra.mxu0 %v1270
        %1342 = vmatprep.subr.bf16.mxu0 %v1269
        %1343 = vmatpush1.bf16.msra.mxu0 %v1268
        %1344 = vmatprep.subr.bf16.mxu0 %v1267
        %1345 = vmatpush1.bf16.msra.mxu0 %v1266
        %1346 = vmatprep.subr.bf16.mxu0 %v1265
        %1347 = vmatpush1.bf16.msra.mxu0 %v1264
        %1348 = vmatprep.subr.bf16.mxu0 %v1263
        %1349 = vmatpush1.bf16.msra.mxu0 %v1262
        %1350 = vmatprep.subr.bf16.mxu0 %v1261
        %1351 = vmatpush1.bf16.msra.mxu0 %v1260
        %1352 = vmatprep.subr.bf16.mxu0 %v1259
        %1353 = vmatpush1.bf16.msra.mxu0 %v1258
        %1354 = vmatprep.subr.bf16.mxu0 %v1257
        %1355 = vmatpush1.bf16.msra.mxu0 %v1256
        %1356 = vmatprep.subr.bf16.mxu0 0
        %1357 = vmatpush2.bf16.msra.mxu0 0
        %1358 = vmatprep.subr.bf16.mxu0 0
        %1359 = vmatpush2.bf16.msra.mxu0 0
        %1360 = vmatprep.subr.bf16.mxu0 0
        %1361 = vmatpush2.bf16.msra.mxu0 0
        %1362 = vmatprep.subr.bf16.mxu0 0
        %1363 = vmatpush2.bf16.msra.mxu0 0
        %1364 = vmatprep.subr.bf16.mxu0 0
        %1365 = vmatpush2.bf16.msra.mxu0 0
        %1366 = vmatprep.subr.bf16.mxu0 0
        %1367 = vmatpush2.bf16.msra.mxu0 0
        %1368 = vmatprep.subr.bf16.mxu0 0
        %1369 = vmatpush2.bf16.msra.mxu0 0
        %1370 = vmatprep.subr.bf16.mxu0 %v1338
        %1371 = vmatpush2.bf16.msra.mxu0 %v1335
        %1372 = vmatprep.mubr.bf16.mxu0 %v1292
        %1373 = vmatmul.mubr.bf16.gmra.mxu0 %v1156
        %v1374 = vpop.f32.mrf.mxu0
        %v1375 = vadd.f32 0.0, %v1374
        %v1376 = vpop.f32.mrf.mxu0
        %v1377 = vadd.f32 0.0, %v1376
        %v1378 = vpop.f32.mrf.mxu0
        %v1379 = vadd.f32 0.0, %v1378
        %v1380 = vpop.f32.mrf.mxu0
        %v1381 = vadd.f32 0.0, %v1380
        %1382 = vmatprep.mubr.bf16.mxu0 %v1295
        %1383 = vmatmul.mubr.bf16.gmra.mxu0 %v1158
        %v1384 = vpop.f32.mrf.mxu0
        %v1385 = vadd.f32 0.0, %v1384
        %v1386 = vpop.f32.mrf.mxu0
        %v1387 = vadd.f32 0.0, %v1386
        %v1388 = vpop.f32.mrf.mxu0
        %v1389 = vadd.f32 0.0, %v1388
        %v1390 = vpop.f32.mrf.mxu0
        %v1391 = vadd.f32 0.0, %v1390
        %1392 = vmatprep.mubr.bf16.mxu0 %v1298
        %1393 = vmatmul.mubr.bf16.gmra.mxu0 %v1160
        %v1394 = vpop.f32.mrf.mxu0
        %v1395 = vadd.f32 0.0, %v1394
        %v1396 = vpop.f32.mrf.mxu0
        %v1397 = vadd.f32 0.0, %v1396
        %v1398 = vpop.f32.mrf.mxu0
        %v1399 = vadd.f32 0.0, %v1398
        %v1400 = vpop.f32.mrf.mxu0
        %v1401 = vadd.f32 0.0, %v1400
        %1402 = vmatprep.mubr.bf16.mxu0 %v1301
        %1403 = vmatmul.mubr.bf16.gmra.mxu0 %v1162
        %v1404 = vpop.f32.mrf.mxu0
        %v1405 = vadd.f32 0.0, %v1404
        %v1406 = vpop.f32.mrf.mxu0
        %v1407 = vadd.f32 0.0, %v1406
        %v1408 = vpop.f32.mrf.mxu0
        %v1409 = vadd.f32 0.0, %v1408
        %v1410 = vpop.f32.mrf.mxu0
        %v1411 = vadd.f32 0.0, %v1410
        %1412 = vmatprep.mubr.bf16.mxu0 %v1304
        %1413 = vmatmul.mubr.bf16.gmra.mxu0 %v1164
        %v1414 = vpop.f32.mrf.mxu0
        %v1415 = vadd.f32 0.0, %v1414
        %v1416 = vpop.f32.mrf.mxu0
        %v1417 = vadd.f32 0.0, %v1416
        %v1418 = vpop.f32.mrf.mxu0
        %v1419 = vadd.f32 0.0, %v1418
        %v1420 = vpop.f32.mrf.mxu0
        %v1421 = vadd.f32 0.0, %v1420
        %1422 = vmatprep.mubr.bf16.mxu0 %v1307
        %1423 = vmatmul.mubr.bf16.gmra.mxu0 %v1166
        %v1424 = vpop.f32.mrf.mxu0
        %v1425 = vadd.f32 0.0, %v1424
        %v1426 = vpop.f32.mrf.mxu0
        %v1427 = vadd.f32 0.0, %v1426
        %v1428 = vpop.f32.mrf.mxu0
        %v1429 = vadd.f32 0.0, %v1428
        %v1430 = vpop.f32.mrf.mxu0
        %v1431 = vadd.f32 0.0, %v1430
        %1432 = vmatprep.mubr.bf16.mxu0 %v1310
        %1433 = vmatmul.mubr.bf16.gmra.mxu0 %v1168
        %v1434 = vpop.f32.mrf.mxu0
        %v1435 = vadd.f32 0.0, %v1434
        %v1436 = vpop.f32.mrf.mxu0
        %v1437 = vadd.f32 0.0, %v1436
        %v1438 = vpop.f32.mrf.mxu0
        %v1439 = vadd.f32 0.0, %v1438
        %v1440 = vpop.f32.mrf.mxu0
        %v1441 = vadd.f32 0.0, %v1440
        %1442 = vmatprep.mubr.bf16.mxu0 %v1313
        %1443 = vmatmul.mubr.bf16.gmra.mxu0 %v1170
        %v1444 = vpop.f32.mrf.mxu0
        %v1445 = vadd.f32 0.0, %v1444
        %v1446 = vpop.f32.mrf.mxu0
        %v1447 = vadd.f32 0.0, %v1446
        %v1448 = vpop.f32.mrf.mxu0
        %v1449 = vadd.f32 0.0, %v1448
        %v1450 = vpop.f32.mrf.mxu0
        %v1451 = vadd.f32 0.0, %v1450
        %1452 = vmatprep.mubr.bf16.mxu0 %v1316
        %1453 = vmatmul.mubr.bf16.gmra.mxu0 %v1172
        %v1454 = vpop.f32.mrf.mxu0
        %v1455 = vadd.f32 0.0, %v1454
        %v1456 = vpop.f32.mrf.mxu0
        %v1457 = vadd.f32 0.0, %v1456
        %v1458 = vpop.f32.mrf.mxu0
        %v1459 = vadd.f32 0.0, %v1458
        %v1460 = vpop.f32.mrf.mxu0
        %v1461 = vadd.f32 0.0, %v1460
        %1462 = vmatprep.mubr.bf16.mxu0 %v1319
        %1463 = vmatmul.mubr.bf16.gmra.mxu0 %v1174
        %v1464 = vpop.f32.mrf.mxu0
        %v1465 = vadd.f32 0.0, %v1464
        %v1466 = vpop.f32.mrf.mxu0
        %v1467 = vadd.f32 0.0, %v1466
        %v1468 = vpop.f32.mrf.mxu0
        %v1469 = vadd.f32 0.0, %v1468
        %v1470 = vpop.f32.mrf.mxu0
        %v1471 = vadd.f32 0.0, %v1470
        %1472 = vmatprep.mubr.bf16.mxu0 %v1322
        %1473 = vmatmul.mubr.bf16.gmra.mxu0 %v1176
        %v1474 = vpop.f32.mrf.mxu0
        %v1475 = vadd.f32 0.0, %v1474
        %v1476 = vpop.f32.mrf.mxu0
        %v1477 = vadd.f32 0.0, %v1476
        %v1478 = vpop.f32.mrf.mxu0
        %v1479 = vadd.f32 0.0, %v1478
        %v1480 = vpop.f32.mrf.mxu0
        %v1481 = vadd.f32 0.0, %v1480
        %1482 = vmatprep.mubr.bf16.mxu0 %v1325
        %1483 = vmatmul.mubr.bf16.gmra.mxu0 %v1178
        %v1484 = vpop.f32.mrf.mxu0
        %v1485 = vadd.f32 0.0, %v1484
        %v1486 = vpop.f32.mrf.mxu0
        %v1487 = vadd.f32 0.0, %v1486
        %v1488 = vpop.f32.mrf.mxu0
        %v1489 = vadd.f32 0.0, %v1488
        %v1490 = vpop.f32.mrf.mxu0
        %v1491 = vadd.f32 0.0, %v1490
        %1492 = vmatprep.mubr.bf16.mxu0 %v1328
        %1493 = vmatmul.mubr.bf16.gmra.mxu0 %v1180
        %v1494 = vpop.f32.mrf.mxu0
        %v1495 = vadd.f32 0.0, %v1494
        %v1496 = vpop.f32.mrf.mxu0
        %v1497 = vadd.f32 0.0, %v1496
        %v1498 = vpop.f32.mrf.mxu0
        %v1499 = vadd.f32 0.0, %v1498
        %v1500 = vpop.f32.mrf.mxu0
        %v1501 = vadd.f32 0.0, %v1500
        %1502 = vmatprep.mubr.bf16.mxu0 %v1331
        %1503 = vmatmul.mubr.bf16.gmra.mxu0 %v1182
        %v1504 = vpop.f32.mrf.mxu0
        %v1505 = vadd.f32 0.0, %v1504
        %v1506 = vpop.f32.mrf.mxu0
        %v1507 = vadd.f32 0.0, %v1506
        %v1508 = vpop.f32.mrf.mxu0
        %v1509 = vadd.f32 0.0, %v1508
        %v1510 = vpop.f32.mrf.mxu0
        %v1511 = vadd.f32 0.0, %v1510
        %1512 = vdwg.mxu0
        %v1513 = vmax.f32 %v1375, %v1377
        %v1514 = vmax.f32 %v1379, %v1381
        %v1515 = vmax.f32 %v1385, %v1387
        %v1516 = vmax.f32 %v1389, %v1391
        %v1517 = vmax.f32 %v1395, %v1397
        %v1518 = vmax.f32 %v1399, %v1401
        %v1519 = vmax.f32 %v1405, %v1407
        %v1520 = vmax.f32 %v1409, %v1411
        %v1521 = vmax.f32 %v1415, %v1417
        %v1522 = vmax.f32 %v1419, %v1421
        %v1523 = vmax.f32 %v1425, %v1427
        %v1524 = vmax.f32 %v1429, %v1431
        %v1525 = vmax.f32 %v1435, %v1437
        %v1526 = vmax.f32 %v1439, %v1441
        %v1527 = vmax.f32 %v1445, %v1447
        %v1528 = vmax.f32 %v1449, %v1451
        %v1529 = vmax.f32 %v1455, %v1457
        %v1530 = vmax.f32 %v1459, %v1461
        %v1531 = vmax.f32 %v1465, %v1467
        %v1532 = vmax.f32 %v1469, %v1471
        %v1533 = vmax.f32 %v1475, %v1477
        %v1534 = vmax.f32 %v1479, %v1481
        %v1535 = vmax.f32 %v1485, %v1487
        %v1536 = vmax.f32 %v1489, %v1491
        %v1537 = vmax.f32 %v1495, %v1497
        %v1538 = vmax.f32 %v1499, %v1501
        %v1539 = vmax.f32 %v1505, %v1507
        %v1540 = vmax.f32 %v1509, %v1511
        %v1541 = vrot.slane %v1513, 1
        %v1542 = vrot.slane %v1514, 1
        %v1543 = vrot.slane %v1515, 1
        %v1544 = vrot.slane %v1516, 1
        %v1545 = vrot.slane %v1517, 1
        %v1546 = vrot.slane %v1518, 1
        %v1547 = vrot.slane %v1519, 1
        %v1548 = vrot.slane %v1520, 1
        %v1549 = vrot.slane %v1521, 1
        %v1550 = vrot.slane %v1522, 1
        %v1551 = vrot.slane %v1523, 1
        %v1552 = vrot.slane %v1524, 1
        %v1553 = vrot.slane %v1525, 1
        %v1554 = vrot.slane %v1526, 1
        %v1555 = vrot.slane %v1527, 1
        %v1556 = vrot.slane %v1528, 1
        %v1557 = vrot.slane %v1529, 1
        %v1558 = vrot.slane %v1530, 1
        %v1559 = vrot.slane %v1531, 1
        %v1560 = vrot.slane %v1532, 1
        %v1561 = vrot.slane %v1533, 1
        %v1562 = vrot.slane %v1534, 1
        %v1563 = vrot.slane %v1535, 1
        %v1564 = vrot.slane %v1536, 1
        %v1565 = vrot.slane %v1537, 1
        %v1566 = vrot.slane %v1538, 1
        %v1567 = vrot.slane %v1539, 1
        %v1568 = vrot.slane %v1540, 1
        %v1569 = vsel %vm392, %v1567, %v1568
        %v1570 = vsel %vm392, %v1566, %v1567
        %v1571 = vsel %vm392, %v1565, %v1566
        %v1572 = vsel %vm392, %v1564, %v1565
        %v1573 = vsel %vm392, %v1563, %v1564
        %v1574 = vsel %vm392, %v1562, %v1563
        %v1575 = vsel %vm392, %v1561, %v1562
        %v1576 = vsel %vm392, %v1560, %v1561
        %v1577 = vsel %vm392, %v1559, %v1560
        %v1578 = vsel %vm392, %v1558, %v1559
        %v1579 = vsel %vm392, %v1557, %v1558
        %v1580 = vsel %vm392, %v1556, %v1557
        %v1581 = vsel %vm392, %v1555, %v1556
        %v1582 = vsel %vm392, %v1554, %v1555
        %v1583 = vsel %vm392, %v1553, %v1554
        %v1584 = vsel %vm392, %v1552, %v1553
        %v1585 = vsel %vm392, %v1551, %v1552
        %v1586 = vsel %vm392, %v1550, %v1551
        %v1587 = vsel %vm392, %v1549, %v1550
        %v1588 = vsel %vm392, %v1548, %v1549
        %v1589 = vsel %vm392, %v1547, %v1548
        %v1590 = vsel %vm392, %v1546, %v1547
        %v1591 = vsel %vm392, %v1545, %v1546
        %v1592 = vsel %vm392, %v1544, %v1545
        %v1593 = vsel %vm392, %v1543, %v1544
        %v1594 = vsel %vm392, %v1542, %v1543
        %v1595 = vsel %vm392, %v1541, %v1542
        %v1596 = vsel %vm392, %v1568, %v1541
        %v1597 = vmax.f32 %v1513, %v1595
        %v1598 = vmax.f32 %v1514, %v1594
        %v1599 = vmax.f32 %v1515, %v1593
        %v1600 = vmax.f32 %v1516, %v1592
        %v1601 = vmax.f32 %v1517, %v1591
        %v1602 = vmax.f32 %v1518, %v1590
        %v1603 = vmax.f32 %v1519, %v1589
        %v1604 = vmax.f32 %v1520, %v1588
        %v1605 = vmax.f32 %v1521, %v1587
        %v1606 = vmax.f32 %v1522, %v1586
        %v1607 = vmax.f32 %v1523, %v1585
        %v1608 = vmax.f32 %v1524, %v1584
        %v1609 = vmax.f32 %v1525, %v1583
        %v1610 = vmax.f32 %v1526, %v1582
        %v1611 = vmax.f32 %v1527, %v1581
        %v1612 = vmax.f32 %v1528, %v1580
        %v1613 = vmax.f32 %v1529, %v1579
        %v1614 = vmax.f32 %v1530, %v1578
        %v1615 = vmax.f32 %v1531, %v1577
        %v1616 = vmax.f32 %v1532, %v1576
        %v1617 = vmax.f32 %v1533, %v1575
        %v1618 = vmax.f32 %v1534, %v1574
        %v1619 = vmax.f32 %v1535, %v1573
        %v1620 = vmax.f32 %v1536, %v1572
        %v1621 = vmax.f32 %v1537, %v1571
        %v1622 = vmax.f32 %v1538, %v1570
        %v1623 = vmax.f32 %v1539, %v1569
        %v1624 = vmax.f32 %v1540, %v1596
        %v1625 = vld [vmem:[%s2] sm:$0x1]
        %v1627 = vlaneseq
        %v1628 = vshrl.u32 %v1627, 7
        %v1629 = vsub.s32 0, %v1628
        %v1630 = vrot.slane %v1625, %v1629
        %v1632 = vadd.f32 %v1597, %v1630
        %v1633 = vadd.f32 %v1598, %v1630
        %v1634 = vadd.f32 %v1599, %v1630
        %v1635 = vadd.f32 %v1600, %v1630
        %v1636 = vadd.f32 %v1601, %v1630
        %v1637 = vadd.f32 %v1602, %v1630
        %v1638 = vadd.f32 %v1603, %v1630
        %v1639 = vadd.f32 %v1604, %v1630
        %v1640 = vadd.f32 %v1605, %v1630
        %v1641 = vadd.f32 %v1606, %v1630
        %v1642 = vadd.f32 %v1607, %v1630
        %v1643 = vadd.f32 %v1608, %v1630
        %v1644 = vadd.f32 %v1609, %v1630
        %v1645 = vadd.f32 %v1610, %v1630
        %v1646 = vadd.f32 %v1611, %v1630
        %v1647 = vadd.f32 %v1612, %v1630
        %v1648 = vadd.f32 %v1613, %v1630
        %v1649 = vadd.f32 %v1614, %v1630
        %v1650 = vadd.f32 %v1615, %v1630
        %v1651 = vadd.f32 %v1616, %v1630
        %v1652 = vadd.f32 %v1617, %v1630
        %v1653 = vadd.f32 %v1618, %v1630
        %v1654 = vadd.f32 %v1619, %v1630
        %v1655 = vadd.f32 %v1620, %v1630
        %v1656 = vadd.f32 %v1621, %v1630
        %v1657 = vadd.f32 %v1622, %v1630
        %v1658 = vadd.f32 %v1623, %v1630
        %v1659 = vadd.f32 %v1624, %v1630
        %v1660 = vmax.f32 %v1632, 0.0
        %v1661 = vmax.f32 %v1633, 0.0
        %v1662 = vmax.f32 %v1634, 0.0
        %v1663 = vmax.f32 %v1635, 0.0
        %v1664 = vmax.f32 %v1636, 0.0
        %v1665 = vmax.f32 %v1637, 0.0
        %v1666 = vmax.f32 %v1638, 0.0
        %v1667 = vmax.f32 %v1639, 0.0
        %v1668 = vmax.f32 %v1640, 0.0
        %v1669 = vmax.f32 %v1641, 0.0
        %v1670 = vmax.f32 %v1642, 0.0
        %v1671 = vmax.f32 %v1643, 0.0
        %v1672 = vmax.f32 %v1644, 0.0
        %v1673 = vmax.f32 %v1645, 0.0
        %v1674 = vmax.f32 %v1646, 0.0
        %v1675 = vmax.f32 %v1647, 0.0
        %v1676 = vmax.f32 %v1648, 0.0
        %v1677 = vmax.f32 %v1649, 0.0
        %v1678 = vmax.f32 %v1650, 0.0
        %v1679 = vmax.f32 %v1651, 0.0
        %v1680 = vmax.f32 %v1652, 0.0
        %v1681 = vmax.f32 %v1653, 0.0
        %v1682 = vmax.f32 %v1654, 0.0
        %v1683 = vmax.f32 %v1655, 0.0
        %v1684 = vmax.f32 %v1656, 0.0
        %v1685 = vmax.f32 %v1657, 0.0
        %v1686 = vmax.f32 %v1658, 0.0
        %v1687 = vmax.f32 %v1659, 0.0
        %v1688 = vrot.slane %v1660, 2
        %v1689 = vrot.slane %v1661, 2
        %v1690 = vrot.slane %v1662, 2
        %v1691 = vrot.slane %v1663, 2
        %v1692 = vrot.slane %v1664, 2
        %v1693 = vrot.slane %v1665, 2
        %v1694 = vrot.slane %v1666, 2
        %v1695 = vrot.slane %v1667, 2
        %v1696 = vrot.slane %v1668, 2
        %v1697 = vrot.slane %v1669, 2
        %v1698 = vrot.slane %v1670, 2
        %v1699 = vrot.slane %v1671, 2
        %v1700 = vrot.slane %v1672, 2
        %v1701 = vrot.slane %v1673, 2
        %v1702 = vrot.slane %v1674, 2
        %v1703 = vrot.slane %v1675, 2
        %v1704 = vrot.slane %v1676, 2
        %v1705 = vrot.slane %v1677, 2
        %v1706 = vrot.slane %v1678, 2
        %v1707 = vrot.slane %v1679, 2
        %v1708 = vrot.slane %v1680, 2
        %v1709 = vrot.slane %v1681, 2
        %v1710 = vrot.slane %v1682, 2
        %v1711 = vrot.slane %v1683, 2
        %v1712 = vrot.slane %v1684, 2
        %v1713 = vrot.slane %v1685, 2
        %v1714 = vrot.slane %v1686, 2
        %v1715 = vrot.slane %v1687, 2
        %v1716 = vsel %vm449, %v1714, %v1715
        %v1717 = vsel %vm449, %v1713, %v1714
        %v1718 = vsel %vm449, %v1712, %v1713
        %v1719 = vsel %vm449, %v1711, %v1712
        %v1720 = vsel %vm449, %v1710, %v1711
        %v1721 = vsel %vm449, %v1709, %v1710
        %v1722 = vsel %vm449, %v1708, %v1709
        %v1723 = vsel %vm449, %v1707, %v1708
        %v1724 = vsel %vm449, %v1706, %v1707
        %v1725 = vsel %vm449, %v1705, %v1706
        %v1726 = vsel %vm449, %v1704, %v1705
        %v1727 = vsel %vm449, %v1703, %v1704
        %v1728 = vsel %vm449, %v1702, %v1703
        %v1729 = vsel %vm449, %v1701, %v1702
        %v1730 = vsel %vm449, %v1700, %v1701
        %v1731 = vsel %vm449, %v1699, %v1700
        %v1732 = vsel %vm449, %v1698, %v1699
        %v1733 = vsel %vm449, %v1697, %v1698
        %v1734 = vsel %vm449, %v1696, %v1697
        %v1735 = vsel %vm449, %v1695, %v1696
        %v1736 = vsel %vm449, %v1694, %v1695
        %v1737 = vsel %vm449, %v1693, %v1694
        %v1738 = vsel %vm449, %v1692, %v1693
        %v1739 = vsel %vm449, %v1691, %v1692
        %v1740 = vsel %vm449, %v1690, %v1691
        %v1741 = vsel %vm449, %v1689, %v1690
        %v1742 = vsel %vm449, %v1688, %v1689
        %v1743 = vsel %vm449, %v1715, %v1688
        %v1744 = vrot.slane %v1660, 4
        %v1745 = vrot.slane %v1661, 4
        %v1746 = vrot.slane %v1662, 4
        %v1747 = vrot.slane %v1663, 4
        %v1748 = vrot.slane %v1664, 4
        %v1749 = vrot.slane %v1665, 4
        %v1750 = vrot.slane %v1666, 4
        %v1751 = vrot.slane %v1667, 4
        %v1752 = vrot.slane %v1668, 4
        %v1753 = vrot.slane %v1669, 4
        %v1754 = vrot.slane %v1670, 4
        %v1755 = vrot.slane %v1671, 4
        %v1756 = vrot.slane %v1672, 4
        %v1757 = vrot.slane %v1673, 4
        %v1758 = vrot.slane %v1674, 4
        %v1759 = vrot.slane %v1675, 4
        %v1760 = vrot.slane %v1676, 4
        %v1761 = vrot.slane %v1677, 4
        %v1762 = vrot.slane %v1678, 4
        %v1763 = vrot.slane %v1679, 4
        %v1764 = vrot.slane %v1680, 4
        %v1765 = vrot.slane %v1681, 4
        %v1766 = vrot.slane %v1682, 4
        %v1767 = vrot.slane %v1683, 4
        %v1768 = vrot.slane %v1684, 4
        %v1769 = vrot.slane %v1685, 4
        %v1770 = vrot.slane %v1686, 4
        %v1771 = vrot.slane %v1687, 4
        %v1772 = vsel %vm563, %v1770, %v1771
        %v1773 = vsel %vm563, %v1769, %v1770
        %v1774 = vsel %vm563, %v1768, %v1769
        %v1775 = vsel %vm563, %v1767, %v1768
        %v1776 = vsel %vm563, %v1766, %v1767
        %v1777 = vsel %vm563, %v1765, %v1766
        %v1778 = vsel %vm563, %v1764, %v1765
        %v1779 = vsel %vm563, %v1763, %v1764
        %v1780 = vsel %vm563, %v1762, %v1763
        %v1781 = vsel %vm563, %v1761, %v1762
        %v1782 = vsel %vm563, %v1760, %v1761
        %v1783 = vsel %vm563, %v1759, %v1760
        %v1784 = vsel %vm563, %v1758, %v1759
        %v1785 = vsel %vm563, %v1757, %v1758
        %v1786 = vsel %vm563, %v1756, %v1757
        %v1787 = vsel %vm563, %v1755, %v1756
        %v1788 = vsel %vm563, %v1754, %v1755
        %v1789 = vsel %vm563, %v1753, %v1754
        %v1790 = vsel %vm563, %v1752, %v1753
        %v1791 = vsel %vm563, %v1751, %v1752
        %v1792 = vsel %vm563, %v1750, %v1751
        %v1793 = vsel %vm563, %v1749, %v1750
        %v1794 = vsel %vm563, %v1748, %v1749
        %v1795 = vsel %vm563, %v1747, %v1748
        %v1796 = vsel %vm563, %v1746, %v1747
        %v1797 = vsel %vm563, %v1745, %v1746
        %v1798 = vsel %vm563, %v1744, %v1745
        %v1799 = vsel %vm563, %v1771, %v1744
        %v1800 = vrot.slane %v1660, 6
        %v1801 = vrot.slane %v1661, 6
        %v1802 = vrot.slane %v1662, 6
        %v1803 = vrot.slane %v1663, 6
        %v1804 = vrot.slane %v1664, 6
        %v1805 = vrot.slane %v1665, 6
        %v1806 = vrot.slane %v1666, 6
        %v1807 = vrot.slane %v1667, 6
        %v1808 = vrot.slane %v1668, 6
        %v1809 = vrot.slane %v1669, 6
        %v1810 = vrot.slane %v1670, 6
        %v1811 = vrot.slane %v1671, 6
        %v1812 = vrot.slane %v1672, 6
        %v1813 = vrot.slane %v1673, 6
        %v1814 = vrot.slane %v1674, 6
        %v1815 = vrot.slane %v1675, 6
        %v1816 = vrot.slane %v1676, 6
        %v1817 = vrot.slane %v1677, 6
        %v1818 = vrot.slane %v1678, 6
        %v1819 = vrot.slane %v1679, 6
        %v1820 = vrot.slane %v1680, 6
        %v1821 = vrot.slane %v1681, 6
        %v1822 = vrot.slane %v1682, 6
        %v1823 = vrot.slane %v1683, 6
        %v1824 = vrot.slane %v1684, 6
        %v1825 = vrot.slane %v1685, 6
        %v1826 = vrot.slane %v1686, 6
        %v1827 = vrot.slane %v1687, 6
        %vm1828 = vcmp.lt.s32.totalorder %v391, 2
        %v1829 = vsel %vm1828, %v1826, %v1827
        %v1830 = vsel %vm1828, %v1825, %v1826
        %v1831 = vsel %vm1828, %v1824, %v1825
        %v1832 = vsel %vm1828, %v1823, %v1824
        %v1833 = vsel %vm1828, %v1822, %v1823
        %v1834 = vsel %vm1828, %v1821, %v1822
        %v1835 = vsel %vm1828, %v1820, %v1821
        %v1836 = vsel %vm1828, %v1819, %v1820
        %v1837 = vsel %vm1828, %v1818, %v1819
        %v1838 = vsel %vm1828, %v1817, %v1818
        %v1839 = vsel %vm1828, %v1816, %v1817
        %v1840 = vsel %vm1828, %v1815, %v1816
        %v1841 = vsel %vm1828, %v1814, %v1815
        %v1842 = vsel %vm1828, %v1813, %v1814
        %v1843 = vsel %vm1828, %v1812, %v1813
        %v1844 = vsel %vm1828, %v1811, %v1812
        %v1845 = vsel %vm1828, %v1810, %v1811
        %v1846 = vsel %vm1828, %v1809, %v1810
        %v1847 = vsel %vm1828, %v1808, %v1809
        %v1848 = vsel %vm1828, %v1807, %v1808
        %v1849 = vsel %vm1828, %v1806, %v1807
        %v1850 = vsel %vm1828, %v1805, %v1806
        %v1851 = vsel %vm1828, %v1804, %v1805
        %v1852 = vsel %vm1828, %v1803, %v1804
        %v1853 = vsel %vm1828, %v1802, %v1803
        %v1854 = vsel %vm1828, %v1801, %v1802
        %v1855 = vsel %vm1828, %v1800, %v1801
        %v1856 = vsel %vm1828, %v1827, %v1800
        %1885 = vrot.lane.b32.xlu0 %v1742, 120
        %v1886 = vpop.permute.xlu0 %1885
        %1887 = vrot.lane.b32.xlu0 %v1741, 120
        %v1888 = vpop.permute.xlu0 %1887
        %1889 = vrot.lane.b32.xlu0 %v1740, 120
        %v1890 = vpop.permute.xlu0 %1889
        %1891 = vrot.lane.b32.xlu0 %v1739, 120
        %v1892 = vpop.permute.xlu0 %1891
        %1893 = vrot.lane.b32.xlu0 %v1738, 120
        %v1894 = vpop.permute.xlu0 %1893
        %1895 = vrot.lane.b32.xlu0 %v1737, 120
        %v1896 = vpop.permute.xlu0 %1895
        %1897 = vrot.lane.b32.xlu0 %v1736, 120
        %v1898 = vpop.permute.xlu0 %1897
        %1899 = vrot.lane.b32.xlu0 %v1735, 120
        %v1900 = vpop.permute.xlu0 %1899
        %1901 = vrot.lane.b32.xlu0 %v1734, 120
        %v1902 = vpop.permute.xlu0 %1901
        %1903 = vrot.lane.b32.xlu0 %v1733, 120
        %v1904 = vpop.permute.xlu0 %1903
        %1905 = vrot.lane.b32.xlu0 %v1732, 120
        %v1906 = vpop.permute.xlu0 %1905
        %1907 = vrot.lane.b32.xlu0 %v1731, 120
        %v1908 = vpop.permute.xlu0 %1907
        %1909 = vrot.lane.b32.xlu0 %v1730, 120
        %v1910 = vpop.permute.xlu0 %1909
        %1911 = vrot.lane.b32.xlu0 %v1729, 120
        %v1912 = vpop.permute.xlu0 %1911
        %1913 = vrot.lane.b32.xlu0 %v1728, 120
        %v1914 = vpop.permute.xlu0 %1913
        %1915 = vrot.lane.b32.xlu0 %v1727, 120
        %v1916 = vpop.permute.xlu0 %1915
        %1917 = vrot.lane.b32.xlu0 %v1726, 120
        %v1918 = vpop.permute.xlu0 %1917
        %1919 = vrot.lane.b32.xlu0 %v1725, 120
        %v1920 = vpop.permute.xlu0 %1919
        %1921 = vrot.lane.b32.xlu0 %v1724, 120
        %v1922 = vpop.permute.xlu0 %1921
        %1923 = vrot.lane.b32.xlu0 %v1723, 120
        %v1924 = vpop.permute.xlu0 %1923
        %1925 = vrot.lane.b32.xlu0 %v1722, 120
        %v1926 = vpop.permute.xlu0 %1925
        %1927 = vrot.lane.b32.xlu0 %v1721, 120
        %v1928 = vpop.permute.xlu0 %1927
        %1929 = vrot.lane.b32.xlu0 %v1720, 120
        %v1930 = vpop.permute.xlu0 %1929
        %1931 = vrot.lane.b32.xlu0 %v1719, 120
        %v1932 = vpop.permute.xlu0 %1931
        %1933 = vrot.lane.b32.xlu0 %v1718, 120
        %v1934 = vpop.permute.xlu0 %1933
        %1935 = vrot.lane.b32.xlu0 %v1717, 120
        %v1936 = vpop.permute.xlu0 %1935
        %1937 = vrot.lane.b32.xlu0 %v1716, 120
        %v1938 = vpop.permute.xlu0 %1937
        %1939 = vrot.lane.b32.xlu0 %v1743, 120
        %v1940 = vpop.permute.xlu0 %1939
        %1997 = vrot.lane.b32.xlu0 %v1798, 112
        %v1998 = vpop.permute.xlu0 %1997
        %1999 = vrot.lane.b32.xlu0 %v1797, 112
        %v2000 = vpop.permute.xlu0 %1999
        %2001 = vrot.lane.b32.xlu0 %v1796, 112
        %v2002 = vpop.permute.xlu0 %2001
        %2003 = vrot.lane.b32.xlu0 %v1795, 112
        %v2004 = vpop.permute.xlu0 %2003
        %2005 = vrot.lane.b32.xlu0 %v1794, 112
        %v2006 = vpop.permute.xlu0 %2005
        %2007 = vrot.lane.b32.xlu0 %v1793, 112
        %v2008 = vpop.permute.xlu0 %2007
        %2009 = vrot.lane.b32.xlu0 %v1792, 112
        %v2010 = vpop.permute.xlu0 %2009
        %2011 = vrot.lane.b32.xlu0 %v1791, 112
        %v2012 = vpop.permute.xlu0 %2011
        %2013 = vrot.lane.b32.xlu0 %v1790, 112
        %v2014 = vpop.permute.xlu0 %2013
        %2015 = vrot.lane.b32.xlu0 %v1789, 112
        %v2016 = vpop.permute.xlu0 %2015
        %2017 = vrot.lane.b32.xlu0 %v1788, 112
        %v2018 = vpop.permute.xlu0 %2017
        %2019 = vrot.lane.b32.xlu0 %v1787, 112
        %v2020 = vpop.permute.xlu0 %2019
        %2021 = vrot.lane.b32.xlu0 %v1786, 112
        %v2022 = vpop.permute.xlu0 %2021
        %2023 = vrot.lane.b32.xlu0 %v1785, 112
        %v2024 = vpop.permute.xlu0 %2023
        %2025 = vrot.lane.b32.xlu0 %v1784, 112
        %v2026 = vpop.permute.xlu0 %2025
        %2027 = vrot.lane.b32.xlu0 %v1783, 112
        %v2028 = vpop.permute.xlu0 %2027
        %2029 = vrot.lane.b32.xlu0 %v1782, 112
        %v2030 = vpop.permute.xlu0 %2029
        %2031 = vrot.lane.b32.xlu0 %v1781, 112
        %v2032 = vpop.permute.xlu0 %2031
        %2033 = vrot.lane.b32.xlu0 %v1780, 112
        %v2034 = vpop.permute.xlu0 %2033
        %2035 = vrot.lane.b32.xlu0 %v1779, 112
        %v2036 = vpop.permute.xlu0 %2035
        %2037 = vrot.lane.b32.xlu0 %v1778, 112
        %v2038 = vpop.permute.xlu0 %2037
        %2039 = vrot.lane.b32.xlu0 %v1777, 112
        %v2040 = vpop.permute.xlu0 %2039
        %2041 = vrot.lane.b32.xlu0 %v1776, 112
        %v2042 = vpop.permute.xlu0 %2041
        %2043 = vrot.lane.b32.xlu0 %v1775, 112
        %v2044 = vpop.permute.xlu0 %2043
        %2045 = vrot.lane.b32.xlu0 %v1774, 112
        %v2046 = vpop.permute.xlu0 %2045
        %2047 = vrot.lane.b32.xlu0 %v1773, 112
        %v2048 = vpop.permute.xlu0 %2047
        %2049 = vrot.lane.b32.xlu0 %v1772, 112
        %v2050 = vpop.permute.xlu0 %2049
        %2051 = vrot.lane.b32.xlu0 %v1799, 112
        %v2052 = vpop.permute.xlu0 %2051
        %2109 = vrot.lane.b32.xlu0 %v1855, 104
        %v2110 = vpop.permute.xlu0 %2109
        %2111 = vrot.lane.b32.xlu0 %v1854, 104
        %v2112 = vpop.permute.xlu0 %2111
        %2113 = vrot.lane.b32.xlu0 %v1853, 104
        %v2114 = vpop.permute.xlu0 %2113
        %2115 = vrot.lane.b32.xlu0 %v1852, 104
        %v2116 = vpop.permute.xlu0 %2115
        %2117 = vrot.lane.b32.xlu0 %v1851, 104
        %v2118 = vpop.permute.xlu0 %2117
        %2119 = vrot.lane.b32.xlu0 %v1850, 104
        %v2120 = vpop.permute.xlu0 %2119
        %2121 = vrot.lane.b32.xlu0 %v1849, 104
        %v2122 = vpop.permute.xlu0 %2121
        %2123 = vrot.lane.b32.xlu0 %v1848, 104
        %v2124 = vpop.permute.xlu0 %2123
        %2125 = vrot.lane.b32.xlu0 %v1847, 104
        %v2126 = vpop.permute.xlu0 %2125
        %2127 = vrot.lane.b32.xlu0 %v1846, 104
        %v2128 = vpop.permute.xlu0 %2127
        %2129 = vrot.lane.b32.xlu0 %v1845, 104
        %v2130 = vpop.permute.xlu0 %2129
        %2131 = vrot.lane.b32.xlu0 %v1844, 104
        %v2132 = vpop.permute.xlu0 %2131
        %2133 = vrot.lane.b32.xlu0 %v1843, 104
        %v2134 = vpop.permute.xlu0 %2133
        %2135 = vrot.lane.b32.xlu0 %v1842, 104
        %v2136 = vpop.permute.xlu0 %2135
        %2137 = vrot.lane.b32.xlu0 %v1841, 104
        %v2138 = vpop.permute.xlu0 %2137
        %2139 = vrot.lane.b32.xlu0 %v1840, 104
        %v2140 = vpop.permute.xlu0 %2139
        %2141 = vrot.lane.b32.xlu0 %v1839, 104
        %v2142 = vpop.permute.xlu0 %2141
        %2143 = vrot.lane.b32.xlu0 %v1838, 104
        %v2144 = vpop.permute.xlu0 %2143
        %2145 = vrot.lane.b32.xlu0 %v1837, 104
        %v2146 = vpop.permute.xlu0 %2145
        %2147 = vrot.lane.b32.xlu0 %v1836, 104
        %v2148 = vpop.permute.xlu0 %2147
        %2149 = vrot.lane.b32.xlu0 %v1835, 104
        %v2150 = vpop.permute.xlu0 %2149
        %2151 = vrot.lane.b32.xlu0 %v1834, 104
        %v2152 = vpop.permute.xlu0 %2151
        %2153 = vrot.lane.b32.xlu0 %v1833, 104
        %v2154 = vpop.permute.xlu0 %2153
        %2155 = vrot.lane.b32.xlu0 %v1832, 104
        %v2156 = vpop.permute.xlu0 %2155
        %2157 = vrot.lane.b32.xlu0 %v1831, 104
        %v2158 = vpop.permute.xlu0 %2157
        %2159 = vrot.lane.b32.xlu0 %v1830, 104
        %v2160 = vpop.permute.xlu0 %2159
        %2161 = vrot.lane.b32.xlu0 %v1829, 104
        %v2162 = vpop.permute.xlu0 %2161
        %2163 = vrot.lane.b32.xlu0 %v1856, 104
        %v2164 = vpop.permute.xlu0 %2163
        %2221 = vrot.lane.b32.xlu0 %v1661, 96
        %v2222 = vpop.permute.xlu0 %2221
        %2223 = vrot.lane.b32.xlu0 %v1662, 96
        %v2224 = vpop.permute.xlu0 %2223
        %2225 = vrot.lane.b32.xlu0 %v1663, 96
        %v2226 = vpop.permute.xlu0 %2225
        %2227 = vrot.lane.b32.xlu0 %v1664, 96
        %v2228 = vpop.permute.xlu0 %2227
        %2229 = vrot.lane.b32.xlu0 %v1665, 96
        %v2230 = vpop.permute.xlu0 %2229
        %2231 = vrot.lane.b32.xlu0 %v1666, 96
        %v2232 = vpop.permute.xlu0 %2231
        %2233 = vrot.lane.b32.xlu0 %v1667, 96
        %v2234 = vpop.permute.xlu0 %2233
        %2235 = vrot.lane.b32.xlu0 %v1668, 96
        %v2236 = vpop.permute.xlu0 %2235
        %2237 = vrot.lane.b32.xlu0 %v1669, 96
        %v2238 = vpop.permute.xlu0 %2237
        %2239 = vrot.lane.b32.xlu0 %v1670, 96
        %v2240 = vpop.permute.xlu0 %2239
        %2241 = vrot.lane.b32.xlu0 %v1671, 96
        %v2242 = vpop.permute.xlu0 %2241
        %2243 = vrot.lane.b32.xlu0 %v1672, 96
        %v2244 = vpop.permute.xlu0 %2243
        %2245 = vrot.lane.b32.xlu0 %v1673, 96
        %v2246 = vpop.permute.xlu0 %2245
        %2247 = vrot.lane.b32.xlu0 %v1674, 96
        %v2248 = vpop.permute.xlu0 %2247
        %2249 = vrot.lane.b32.xlu0 %v1675, 96
        %v2250 = vpop.permute.xlu0 %2249
        %2251 = vrot.lane.b32.xlu0 %v1676, 96
        %v2252 = vpop.permute.xlu0 %2251
        %2253 = vrot.lane.b32.xlu0 %v1677, 96
        %v2254 = vpop.permute.xlu0 %2253
        %2255 = vrot.lane.b32.xlu0 %v1678, 96
        %v2256 = vpop.permute.xlu0 %2255
        %2257 = vrot.lane.b32.xlu0 %v1679, 96
        %v2258 = vpop.permute.xlu0 %2257
        %2259 = vrot.lane.b32.xlu0 %v1680, 96
        %v2260 = vpop.permute.xlu0 %2259
        %2261 = vrot.lane.b32.xlu0 %v1681, 96
        %v2262 = vpop.permute.xlu0 %2261
        %2263 = vrot.lane.b32.xlu0 %v1682, 96
        %v2264 = vpop.permute.xlu0 %2263
        %2265 = vrot.lane.b32.xlu0 %v1683, 96
        %v2266 = vpop.permute.xlu0 %2265
        %2267 = vrot.lane.b32.xlu0 %v1684, 96
        %v2268 = vpop.permute.xlu0 %2267
        %2269 = vrot.lane.b32.xlu0 %v1685, 96
        %v2270 = vpop.permute.xlu0 %2269
        %2271 = vrot.lane.b32.xlu0 %v1686, 96
        %v2272 = vpop.permute.xlu0 %2271
        %2273 = vrot.lane.b32.xlu0 %v1687, 96
        %v2274 = vpop.permute.xlu0 %2273
        %2275 = vrot.lane.b32.xlu0 %v1660, 96
        %v2276 = vpop.permute.xlu0 %2275
        %vm2305 = vcmask 982016
        %v2306 = vsel %vm2305, %v1660, %v1886
        %v2307 = vsel %vm2305, %v1661, %v1888
        %v2308 = vsel %vm2305, %v1662, %v1890
        %v2309 = vsel %vm2305, %v1663, %v1892
        %v2310 = vsel %vm2305, %v1664, %v1894
        %v2311 = vsel %vm2305, %v1665, %v1896
        %v2312 = vsel %vm2305, %v1666, %v1898
        %v2313 = vsel %vm2305, %v1667, %v1900
        %v2314 = vsel %vm2305, %v1668, %v1902
        %v2315 = vsel %vm2305, %v1669, %v1904
        %v2316 = vsel %vm2305, %v1670, %v1906
        %v2317 = vsel %vm2305, %v1671, %v1908
        %v2318 = vsel %vm2305, %v1672, %v1910
        %v2319 = vsel %vm2305, %v1673, %v1912
        %v2320 = vsel %vm2305, %v1674, %v1914
        %v2321 = vsel %vm2305, %v1675, %v1916
        %v2322 = vsel %vm2305, %v1676, %v1918
        %v2323 = vsel %vm2305, %v1677, %v1920
        %v2324 = vsel %vm2305, %v1678, %v1922
        %v2325 = vsel %vm2305, %v1679, %v1924
        %v2326 = vsel %vm2305, %v1680, %v1926
        %v2327 = vsel %vm2305, %v1681, %v1928
        %v2328 = vsel %vm2305, %v1682, %v1930
        %v2329 = vsel %vm2305, %v1683, %v1932
        %v2330 = vsel %vm2305, %v1684, %v1934
        %v2331 = vsel %vm2305, %v1685, %v1936
        %v2332 = vsel %vm2305, %v1686, %v1938
        %v2333 = vsel %vm2305, %v1687, %v1940
        %v2334 = vsel %vm1127, %v1886, %v1998
        %v2335 = vsel %vm1127, %v1888, %v2000
        %v2336 = vsel %vm1127, %v1890, %v2002
        %v2337 = vsel %vm1127, %v1892, %v2004
        %v2338 = vsel %vm1127, %v1894, %v2006
        %v2339 = vsel %vm1127, %v1896, %v2008
        %v2340 = vsel %vm1127, %v1898, %v2010
        %v2341 = vsel %vm1127, %v1900, %v2012
        %v2342 = vsel %vm1127, %v1902, %v2014
        %v2343 = vsel %vm1127, %v1904, %v2016
        %v2344 = vsel %vm1127, %v1906, %v2018
        %v2345 = vsel %vm1127, %v1908, %v2020
        %v2346 = vsel %vm1127, %v1910, %v2022
        %v2347 = vsel %vm1127, %v1912, %v2024
        %v2348 = vsel %vm1127, %v1914, %v2026
        %v2349 = vsel %vm1127, %v1916, %v2028
        %v2350 = vsel %vm1127, %v1918, %v2030
        %v2351 = vsel %vm1127, %v1920, %v2032
        %v2352 = vsel %vm1127, %v1922, %v2034
        %v2353 = vsel %vm1127, %v1924, %v2036
        %v2354 = vsel %vm1127, %v1926, %v2038
        %v2355 = vsel %vm1127, %v1928, %v2040
        %v2356 = vsel %vm1127, %v1930, %v2042
        %v2357 = vsel %vm1127, %v1932, %v2044
        %v2358 = vsel %vm1127, %v1934, %v2046
        %v2359 = vsel %vm1127, %v1936, %v2048
        %v2360 = vsel %vm1127, %v1938, %v2050
        %v2361 = vsel %vm1127, %v1940, %v2052
        %vm2362 = vcmask 850944
        %v2363 = vsel %vm2362, %v1998, %v2110
        %v2364 = vsel %vm2362, %v2000, %v2112
        %v2365 = vsel %vm2362, %v2002, %v2114
        %v2366 = vsel %vm2362, %v2004, %v2116
        %v2367 = vsel %vm2362, %v2006, %v2118
        %v2368 = vsel %vm2362, %v2008, %v2120
        %v2369 = vsel %vm2362, %v2010, %v2122
        %v2370 = vsel %vm2362, %v2012, %v2124
        %v2371 = vsel %vm2362, %v2014, %v2126
        %v2372 = vsel %vm2362, %v2016, %v2128
        %v2373 = vsel %vm2362, %v2018, %v2130
        %v2374 = vsel %vm2362, %v2020, %v2132
        %v2375 = vsel %vm2362, %v2022, %v2134
        %v2376 = vsel %vm2362, %v2024, %v2136
        %v2377 = vsel %vm2362, %v2026, %v2138
        %v2378 = vsel %vm2362, %v2028, %v2140
        %v2379 = vsel %vm2362, %v2030, %v2142
        %v2380 = vsel %vm2362, %v2032, %v2144
        %v2381 = vsel %vm2362, %v2034, %v2146
        %v2382 = vsel %vm2362, %v2036, %v2148
        %v2383 = vsel %vm2362, %v2038, %v2150
        %v2384 = vsel %vm2362, %v2040, %v2152
        %v2385 = vsel %vm2362, %v2042, %v2154
        %v2386 = vsel %vm2362, %v2044, %v2156
        %v2387 = vsel %vm2362, %v2046, %v2158
        %v2388 = vsel %vm2362, %v2048, %v2160
        %v2389 = vsel %vm2362, %v2050, %v2162
        %v2390 = vsel %vm2362, %v2052, %v2164
        %vm2391 = vcmask 785408
        %v2392 = vsel %vm2391, %v2110, %v2222
        %v2393 = vsel %vm2391, %v2112, %v2224
        %v2394 = vsel %vm2391, %v2114, %v2226
        %v2395 = vsel %vm2391, %v2116, %v2228
        %v2396 = vsel %vm2391, %v2118, %v2230
        %v2397 = vsel %vm2391, %v2120, %v2232
        %v2398 = vsel %vm2391, %v2122, %v2234
        %v2399 = vsel %vm2391, %v2124, %v2236
        %v2400 = vsel %vm2391, %v2126, %v2238
        %v2401 = vsel %vm2391, %v2128, %v2240
        %v2402 = vsel %vm2391, %v2130, %v2242
        %v2403 = vsel %vm2391, %v2132, %v2244
        %v2404 = vsel %vm2391, %v2134, %v2246
        %v2405 = vsel %vm2391, %v2136, %v2248
        %v2406 = vsel %vm2391, %v2138, %v2250
        %v2407 = vsel %vm2391, %v2140, %v2252
        %v2408 = vsel %vm2391, %v2142, %v2254
        %v2409 = vsel %vm2391, %v2144, %v2256
        %v2410 = vsel %vm2391, %v2146, %v2258
        %v2411 = vsel %vm2391, %v2148, %v2260
        %v2412 = vsel %vm2391, %v2150, %v2262
        %v2413 = vsel %vm2391, %v2152, %v2264
        %v2414 = vsel %vm2391, %v2154, %v2266
        %v2415 = vsel %vm2391, %v2156, %v2268
        %v2416 = vsel %vm2391, %v2158, %v2270
        %v2417 = vsel %vm2391, %v2160, %v2272
        %v2418 = vsel %vm2391, %v2162, %v2274
        %v2419 = vsel %vm2391, %v2164, %v2276
        %v2420 = vpack.c.bf16 %v2307, %v2306
        %v2421 = vpack.c.bf16 %v2335, %v2334
        %v2422 = vpack.c.bf16 %v2364, %v2363
        %v2423 = vpack.c.bf16 %v2393, %v2392
        %v2424 = vpack.c.bf16 %v2224, %v2222
        %v2425 = vpack.c.bf16 %v2309, %v2308
        %v2426 = vpack.c.bf16 %v2337, %v2336
        %v2427 = vpack.c.bf16 %v2366, %v2365
        %v2428 = vpack.c.bf16 %v2395, %v2394
        %v2429 = vpack.c.bf16 %v2228, %v2226
        %v2430 = vpack.c.bf16 %v2311, %v2310
        %v2431 = vpack.c.bf16 %v2339, %v2338
        %v2432 = vpack.c.bf16 %v2368, %v2367
        %v2433 = vpack.c.bf16 %v2397, %v2396
        %v2434 = vpack.c.bf16 %v2232, %v2230
        %v2435 = vpack.c.bf16 %v2313, %v2312
        %v2436 = vpack.c.bf16 %v2341, %v2340
        %v2437 = vpack.c.bf16 %v2370, %v2369
        %v2438 = vpack.c.bf16 %v2399, %v2398
        %v2439 = vpack.c.bf16 %v2236, %v2234
        %v2440 = vpack.c.bf16 %v2315, %v2314
        %v2441 = vpack.c.bf16 %v2343, %v2342
        %v2442 = vpack.c.bf16 %v2372, %v2371
        %v2443 = vpack.c.bf16 %v2401, %v2400
        %v2444 = vpack.c.bf16 %v2240, %v2238
        %v2445 = vpack.c.bf16 %v2317, %v2316
        %v2446 = vpack.c.bf16 %v2345, %v2344
        %v2447 = vpack.c.bf16 %v2374, %v2373
        %v2448 = vpack.c.bf16 %v2403, %v2402
        %v2449 = vpack.c.bf16 %v2244, %v2242
        %v2450 = vpack.c.bf16 %v2319, %v2318
        %v2451 = vpack.c.bf16 %v2347, %v2346
        %v2452 = vpack.c.bf16 %v2376, %v2375
        %v2453 = vpack.c.bf16 %v2405, %v2404
        %v2454 = vpack.c.bf16 %v2248, %v2246
        %v2455 = vpack.c.bf16 %v2321, %v2320
        %v2456 = vpack.c.bf16 %v2349, %v2348
        %v2457 = vpack.c.bf16 %v2378, %v2377
        %v2458 = vpack.c.bf16 %v2407, %v2406
        %v2459 = vpack.c.bf16 %v2252, %v2250
        %v2460 = vpack.c.bf16 %v2323, %v2322
        %v2461 = vpack.c.bf16 %v2351, %v2350
        %v2462 = vpack.c.bf16 %v2380, %v2379
        %v2463 = vpack.c.bf16 %v2409, %v2408
        %v2464 = vpack.c.bf16 %v2256, %v2254
        %v2465 = vpack.c.bf16 %v2325, %v2324
        %v2466 = vpack.c.bf16 %v2353, %v2352
        %v2467 = vpack.c.bf16 %v2382, %v2381
        %v2468 = vpack.c.bf16 %v2411, %v2410
        %v2469 = vpack.c.bf16 %v2260, %v2258
        %v2470 = vpack.c.bf16 %v2327, %v2326
        %v2471 = vpack.c.bf16 %v2355, %v2354
        %v2472 = vpack.c.bf16 %v2384, %v2383
        %v2473 = vpack.c.bf16 %v2413, %v2412
        %v2474 = vpack.c.bf16 %v2264, %v2262
        %v2475 = vpack.c.bf16 %v2329, %v2328
        %v2476 = vpack.c.bf16 %v2357, %v2356
        %v2477 = vpack.c.bf16 %v2386, %v2385
        %v2478 = vpack.c.bf16 %v2415, %v2414
        %v2479 = vpack.c.bf16 %v2268, %v2266
        %v2480 = vpack.c.bf16 %v2331, %v2330
        %v2481 = vpack.c.bf16 %v2359, %v2358
        %v2482 = vpack.c.bf16 %v2388, %v2387
        %v2483 = vpack.c.bf16 %v2417, %v2416
        %v2484 = vpack.c.bf16 %v2272, %v2270
        %v2485 = vpack.c.bf16 %v2333, %v2332
        %v2486 = vpack.c.bf16 %v2361, %v2360
        %v2487 = vpack.c.bf16 %v2390, %v2389
        %v2488 = vpack.c.bf16 %v2419, %v2418
        %v2489 = vpack.c.bf16 %v2276, %v2274
        %v2490 = vld [vmem:[%s3] sm:$0xff]
        %v2491 = vld [vmem:[%s3 + $0x8] sm:$0xff]
        %v2492 = vld [vmem:[%s3 + $0x10] sm:$0xff]
        %v2493 = vld [vmem:[%s3 + $0x18] sm:$0xff]
        %v2494 = vld [vmem:[%s3 + $0x20] sm:$0xff]
        %v2495 = vld [vmem:[%s3 + $0x28] sm:$0xff]
        %v2496 = vld [vmem:[%s3 + $0x30] sm:$0xff]
        %v2497 = vld [vmem:[%s3 + $0x38] sm:$0xff]
        %v2498 = vld [vmem:[%s3 + $0x40] sm:$0xff]
        %v2499 = vld [vmem:[%s3 + $0x48] sm:$0xff]
        %v2500 = vld [vmem:[%s3 + $0x50] sm:$0xff]
        %v2501 = vld [vmem:[%s3 + $0x58] sm:$0xff]
        %v2502 = vld [vmem:[%s3 + $0x60] sm:$0xff]
        %v2503 = vld [vmem:[%s3 + $0x68] sm:$0xff]
        %v2504 = vld [vmem:[%s3 + $0x70] sm:$0xff]
        %v2505 = vld [vmem:[%s3 + $0x78] sm:$0xff]
        %v2506 = vld [vmem:[%s3 + $0x80] sm:$0xff]
        %v2507 = vld [vmem:[%s3 + $0x88] sm:$0xff]
        %v2508 = vld [vmem:[%s3 + $0x90] sm:$0xff]
        %v2509 = vld [vmem:[%s3 + $0x98] sm:$0xff]
        %v2510 = vld [vmem:[%s3 + $0xa0] sm:$0xff]
        %v2511 = vld [vmem:[%s3 + $0xa8] sm:$0xff]
        %v2512 = vld [vmem:[%s3 + $0xb0] sm:$0xff]
        %v2513 = vld [vmem:[%s3 + $0xb8] sm:$0xff]
        %v2514 = vld [vmem:[%s3 + $0xc0] sm:$0xff]
        %v2515 = vld [vmem:[%s3 + $0xc8] sm:$0xff]
        %v2516 = vld [vmem:[%s3 + $0xd0] sm:$0xff]
        %v2517 = vld [vmem:[%s3 + $0xd8] sm:$0xff]
        %v2518 = vld [vmem:[%s3 + $0xe0] sm:$0xff]
        %v2519 = vld [vmem:[%s3 + $0xe8] sm:$0xff]
        %v2520 = vld [vmem:[%s3 + $0xf0] sm:$0xff]
        %v2521 = vld [vmem:[%s3 + $0xf8] sm:$0xff]
        %v2522 = vld [vmem:[%s3 + $0x100] sm:$0xff]
        %v2523 = vld [vmem:[%s3 + $0x108] sm:$0xff]
        %v2524 = vld [vmem:[%s3 + $0x110] sm:$0xff]
        %v2525 = vld [vmem:[%s3 + $0x118] sm:$0xff]
        %v2526 = vld [vmem:[%s3 + $0x120] sm:$0xff]
        %v2527 = vld [vmem:[%s3 + $0x128] sm:$0xff]
        %v2528 = vld [vmem:[%s3 + $0x130] sm:$0xff]
        %v2529 = vld [vmem:[%s3 + $0x138] sm:$0xff]
        %v2530 = vld [vmem:[%s3 + $0x140] sm:$0xff]
        %v2531 = vld [vmem:[%s3 + $0x148] sm:$0xff]
        %v2532 = vld [vmem:[%s3 + $0x150] sm:$0xff]
        %v2533 = vld [vmem:[%s3 + $0x158] sm:$0xff]
        %v2534 = vld [vmem:[%s3 + $0x160] sm:$0xff]
        %v2535 = vld [vmem:[%s3 + $0x168] sm:$0xff]
        %v2536 = vld [vmem:[%s3 + $0x170] sm:$0xff]
        %v2537 = vld [vmem:[%s3 + $0x178] sm:$0xff]
        %v2538 = vld [vmem:[%s3 + $0x180] sm:$0xff]
        %v2539 = vld [vmem:[%s3 + $0x188] sm:$0xff]
        %v2540 = vld [vmem:[%s3 + $0x190] sm:$0xff]
        %v2541 = vld [vmem:[%s3 + $0x198] sm:$0xff]
        %v2542 = vld [vmem:[%s3 + $0x1a0] sm:$0xff]
        %v2543 = vld [vmem:[%s3 + $0x1a8] sm:$0xff]
        %v2544 = vld [vmem:[%s3 + $0x1b0] sm:$0xff]
        %v2545 = vld [vmem:[%s3 + $0x1b8] sm:$0xff]
        %v2546 = vld [vmem:[%s3 + $0x1c0] sm:$0xff]
        %v2547 = vld [vmem:[%s3 + $0x1c8] sm:$0xff]
        %v2548 = vld [vmem:[%s3 + $0x1d0] sm:$0xff]
        %v2549 = vld [vmem:[%s3 + $0x1d8] sm:$0xff]
        %v2550 = vld [vmem:[%s3 + $0x1e0] sm:$0xff]
        %v2551 = vld [vmem:[%s3 + $0x1e8] sm:$0xff]
        %v2552 = vld [vmem:[%s3 + $0x1f0] sm:$0xff]
        %v2553 = vld [vmem:[%s3 + $0x1f8] sm:$0xff]
        %v2554 = vld [vmem:[%s3 + $0x200] sm:$0xff]
        %v2555 = vld [vmem:[%s3 + $0x208] sm:$0xff]
        %v2556 = vld [vmem:[%s3 + $0x210] sm:$0xff]
        %v2557 = vld [vmem:[%s3 + $0x218] sm:$0xff]
        %v2558 = vld [vmem:[%s3 + $0x220] sm:$0xff]
        %v2559 = vld [vmem:[%s3 + $0x228] sm:$0xff]
        %v2560 = vld [vmem:[%s3 + $0x230] sm:$0xff]
        %v2561 = vld [vmem:[%s3 + $0x238] sm:$0xff]
        %v2562 = vld [vmem:[%s3 + $0x240] sm:$0xff]
        %v2563 = vld [vmem:[%s3 + $0x248] sm:$0xff]
        %v2564 = vld [vmem:[%s3 + $0x250] sm:$0xff]
        %v2640 = vunpack.c.l.b16 %v2490
        %v2641 = vunpack.c.h.b16 %v2490
        %v2642 = vunpack.c.l.b16 %v2491
        %v2643 = vunpack.c.h.b16 %v2491
        %v2644 = vunpack.c.l.b16 %v2492
        %v2645 = vunpack.c.h.b16 %v2492
        %v2646 = vunpack.c.l.b16 %v2493
        %v2647 = vunpack.c.h.b16 %v2493
        %v2648 = vunpack.c.l.b16 %v2494
        %v2649 = vunpack.c.h.b16 %v2494
        %v2650 = vunpack.c.l.b16 %v2495
        %v2651 = vunpack.c.h.b16 %v2495
        %v2652 = vunpack.c.l.b16 %v2496
        %v2653 = vunpack.c.h.b16 %v2496
        %v2654 = vunpack.c.l.b16 %v2497
        %v2655 = vunpack.c.h.b16 %v2497
        %v2656 = vunpack.c.l.b16 %v2498
        %v2657 = vunpack.c.h.b16 %v2498
        %v2658 = vunpack.c.l.b16 %v2499
        %v2659 = vunpack.c.h.b16 %v2499
        %v2660 = vunpack.c.l.b16 %v2500
        %v2661 = vunpack.c.h.b16 %v2500
        %v2662 = vunpack.c.l.b16 %v2501
        %v2663 = vunpack.c.h.b16 %v2501
        %v2664 = vunpack.c.l.b16 %v2502
        %v2665 = vunpack.c.h.b16 %v2502
        %v2666 = vunpack.c.l.b16 %v2503
        %v2667 = vunpack.c.h.b16 %v2503
        %v2668 = vunpack.c.l.b16 %v2504
        %v2669 = vunpack.c.h.b16 %v2504
        %v2670 = vunpack.c.l.b16 %v2505
        %v2671 = vunpack.c.h.b16 %v2505
        %v2672 = vunpack.c.l.b16 %v2506
        %v2673 = vunpack.c.h.b16 %v2506
        %v2674 = vunpack.c.l.b16 %v2507
        %v2675 = vunpack.c.h.b16 %v2507
        %v2676 = vunpack.c.l.b16 %v2508
        %v2677 = vunpack.c.h.b16 %v2508
        %v2678 = vunpack.c.l.b16 %v2509
        %v2679 = vunpack.c.h.b16 %v2509
        %v2680 = vunpack.c.l.b16 %v2510
        %v2681 = vunpack.c.h.b16 %v2510
        %v2682 = vunpack.c.l.b16 %v2511
        %v2683 = vunpack.c.h.b16 %v2511
        %v2684 = vunpack.c.l.b16 %v2512
        %v2685 = vunpack.c.h.b16 %v2512
        %v2686 = vunpack.c.l.b16 %v2513
        %v2687 = vunpack.c.h.b16 %v2513
        %v2688 = vunpack.c.l.b16 %v2514
        %v2689 = vunpack.c.h.b16 %v2514
        %v2690 = vunpack.c.l.b16 %v2515
        %v2691 = vunpack.c.h.b16 %v2515
        %v2692 = vunpack.c.l.b16 %v2516
        %v2693 = vunpack.c.h.b16 %v2516
        %v2694 = vunpack.c.l.b16 %v2517
        %v2695 = vunpack.c.h.b16 %v2517
        %v2696 = vunpack.c.l.b16 %v2518
        %v2697 = vunpack.c.h.b16 %v2518
        %v2698 = vunpack.c.l.b16 %v2519
        %v2699 = vunpack.c.h.b16 %v2519
        %v2700 = vunpack.c.l.b16 %v2520
        %v2701 = vunpack.c.h.b16 %v2520
        %v2702 = vunpack.c.l.b16 %v2521
        %v2703 = vunpack.c.h.b16 %v2521
        %v2704 = vunpack.c.l.b16 %v2522
        %v2705 = vunpack.c.h.b16 %v2522
        %v2706 = vunpack.c.l.b16 %v2523
        %v2707 = vunpack.c.h.b16 %v2523
        %v2708 = vunpack.c.l.b16 %v2524
        %v2709 = vunpack.c.h.b16 %v2524
        %v2710 = vunpack.c.l.b16 %v2525
        %v2711 = vunpack.c.h.b16 %v2525
        %v2712 = vunpack.c.l.b16 %v2526
        %v2713 = vunpack.c.h.b16 %v2526
        %v2714 = vunpack.c.l.b16 %v2527
        %v2715 = vunpack.c.h.b16 %v2527
        %v2716 = vunpack.c.l.b16 %v2528
        %v2717 = vunpack.c.h.b16 %v2528
        %v2718 = vunpack.c.l.b16 %v2529
        %v2719 = vunpack.c.h.b16 %v2529
        %v2720 = vunpack.c.l.b16 %v2530
        %v2721 = vunpack.c.h.b16 %v2530
        %v2722 = vunpack.c.l.b16 %v2531
        %v2723 = vunpack.c.h.b16 %v2531
        %v2724 = vunpack.c.l.b16 %v2532
        %v2725 = vunpack.c.h.b16 %v2532
        %v2726 = vunpack.c.l.b16 %v2533
        %v2727 = vunpack.c.h.b16 %v2533
        %v2728 = vunpack.c.l.b16 %v2534
        %v2729 = vunpack.c.h.b16 %v2534
        %v2730 = vunpack.c.l.b16 %v2535
        %v2731 = vunpack.c.h.b16 %v2535
        %v2732 = vunpack.c.l.b16 %v2536
        %v2733 = vunpack.c.h.b16 %v2536
        %v2734 = vunpack.c.l.b16 %v2537
        %v2735 = vunpack.c.h.b16 %v2537
        %v2736 = vunpack.c.l.b16 %v2538
        %v2737 = vunpack.c.h.b16 %v2538
        %v2738 = vunpack.c.l.b16 %v2539
        %v2739 = vunpack.c.h.b16 %v2539
        %v2740 = vunpack.c.l.b16 %v2540
        %v2741 = vunpack.c.h.b16 %v2540
        %v2742 = vunpack.c.l.b16 %v2541
        %v2743 = vunpack.c.h.b16 %v2541
        %v2744 = vunpack.c.l.b16 %v2542
        %v2745 = vunpack.c.h.b16 %v2542
        %v2746 = vunpack.c.l.b16 %v2543
        %v2747 = vunpack.c.h.b16 %v2543
        %v2748 = vunpack.c.l.b16 %v2544
        %v2749 = vunpack.c.h.b16 %v2544
        %v2750 = vunpack.c.l.b16 %v2545
        %v2751 = vunpack.c.h.b16 %v2545
        %v2752 = vunpack.c.l.b16 %v2546
        %v2753 = vunpack.c.h.b16 %v2546
        %v2754 = vunpack.c.l.b16 %v2547
        %v2755 = vunpack.c.h.b16 %v2547
        %v2756 = vunpack.c.l.b16 %v2548
        %v2757 = vunpack.c.h.b16 %v2548
        %v2758 = vunpack.c.l.b16 %v2549
        %v2759 = vunpack.c.h.b16 %v2549
        %v2760 = vunpack.c.l.b16 %v2550
        %v2761 = vunpack.c.h.b16 %v2550
        %v2762 = vunpack.c.l.b16 %v2551
        %v2763 = vunpack.c.h.b16 %v2551
        %v2764 = vunpack.c.l.b16 %v2552
        %v2765 = vunpack.c.h.b16 %v2552
        %v2766 = vunpack.c.l.b16 %v2553
        %v2767 = vunpack.c.h.b16 %v2553
        %v2768 = vunpack.c.l.b16 %v2554
        %v2769 = vunpack.c.h.b16 %v2554
        %v2770 = vunpack.c.l.b16 %v2555
        %v2771 = vunpack.c.h.b16 %v2555
        %v2772 = vunpack.c.l.b16 %v2556
        %v2773 = vunpack.c.h.b16 %v2556
        %v2774 = vunpack.c.l.b16 %v2557
        %v2775 = vunpack.c.h.b16 %v2557
        %v2776 = vunpack.c.l.b16 %v2558
        %v2777 = vunpack.c.h.b16 %v2558
        %v2778 = vunpack.c.l.b16 %v2559
        %v2779 = vunpack.c.h.b16 %v2559
        %v2780 = vunpack.c.l.b16 %v2560
        %v2781 = vunpack.c.h.b16 %v2560
        %v2782 = vunpack.c.l.b16 %v2561
        %v2783 = vunpack.c.h.b16 %v2561
        %v2784 = vunpack.c.l.b16 %v2562
        %v2785 = vunpack.c.h.b16 %v2562
        %v2786 = vunpack.c.l.b16 %v2563
        %v2787 = vunpack.c.h.b16 %v2563
        %v2788 = vunpack.c.l.b16 %v2564
        %v2789 = vunpack.c.h.b16 %v2564
        %v2790 = vpack.c.b16 %v2642, %v2640
        %v2791 = vpack.c.b16 %v2643, %v2641
        %v2792 = vpack.c.b16 %v2646, %v2644
        %v2793 = vpack.c.b16 %v2647, %v2645
        %v2794 = vpack.c.b16 %v2650, %v2648
        %v2795 = vpack.c.b16 %v2651, %v2649
        %v2796 = vpack.c.b16 %v2654, %v2652
        %v2797 = vpack.c.b16 %v2655, %v2653
        %v2798 = vpack.c.b16 %v2658, %v2656
        %v2799 = vpack.c.b16 %v2659, %v2657
        %v2800 = vpack.c.b16 %v2662, %v2660
        %v2801 = vpack.c.b16 %v2663, %v2661
        %v2802 = vpack.c.b16 %v2666, %v2664
        %v2803 = vpack.c.b16 %v2667, %v2665
        %v2804 = vpack.c.b16 %v2670, %v2668
        %v2805 = vpack.c.b16 %v2671, %v2669
        %v2806 = vpack.c.b16 %v2674, %v2672
        %v2807 = vpack.c.b16 %v2675, %v2673
        %v2808 = vpack.c.b16 %v2678, %v2676
        %v2809 = vpack.c.b16 %v2679, %v2677
        %v2810 = vpack.c.b16 %v2682, %v2680
        %v2811 = vpack.c.b16 %v2683, %v2681
        %v2812 = vpack.c.b16 %v2686, %v2684
        %v2813 = vpack.c.b16 %v2687, %v2685
        %v2814 = vpack.c.b16 %v2690, %v2688
        %v2815 = vpack.c.b16 %v2691, %v2689
        %v2816 = vpack.c.b16 %v2694, %v2692
        %v2817 = vpack.c.b16 %v2695, %v2693
        %v2818 = vpack.c.b16 %v2698, %v2696
        %v2819 = vpack.c.b16 %v2699, %v2697
        %v2820 = vpack.c.b16 %v2702, %v2700
        %v2821 = vpack.c.b16 %v2703, %v2701
        %v2822 = vpack.c.b16 %v2706, %v2704
        %v2823 = vpack.c.b16 %v2707, %v2705
        %v2824 = vpack.c.b16 %v2710, %v2708
        %v2825 = vpack.c.b16 %v2711, %v2709
        %v2826 = vpack.c.b16 %v2714, %v2712
        %v2827 = vpack.c.b16 %v2715, %v2713
        %v2828 = vpack.c.b16 %v2718, %v2716
        %v2829 = vpack.c.b16 %v2719, %v2717
        %v2830 = vpack.c.b16 %v2722, %v2720
        %v2831 = vpack.c.b16 %v2723, %v2721
        %v2832 = vpack.c.b16 %v2726, %v2724
        %v2833 = vpack.c.b16 %v2727, %v2725
        %v2834 = vpack.c.b16 %v2730, %v2728
        %v2835 = vpack.c.b16 %v2731, %v2729
        %v2836 = vpack.c.b16 %v2734, %v2732
        %v2837 = vpack.c.b16 %v2735, %v2733
        %v2838 = vpack.c.b16 %v2738, %v2736
        %v2839 = vpack.c.b16 %v2739, %v2737
        %v2840 = vpack.c.b16 %v2742, %v2740
        %v2841 = vpack.c.b16 %v2743, %v2741
        %v2842 = vpack.c.b16 %v2746, %v2744
        %v2843 = vpack.c.b16 %v2747, %v2745
        %v2844 = vpack.c.b16 %v2750, %v2748
        %v2845 = vpack.c.b16 %v2751, %v2749
        %v2846 = vpack.c.b16 %v2754, %v2752
        %v2847 = vpack.c.b16 %v2755, %v2753
        %v2848 = vpack.c.b16 %v2758, %v2756
        %v2849 = vpack.c.b16 %v2759, %v2757
        %v2850 = vpack.c.b16 %v2762, %v2760
        %v2851 = vpack.c.b16 %v2763, %v2761
        %v2852 = vpack.c.b16 %v2766, %v2764
        %v2853 = vpack.c.b16 %v2767, %v2765
        %v2854 = vpack.c.b16 %v2770, %v2768
        %v2855 = vpack.c.b16 %v2771, %v2769
        %v2856 = vpack.c.b16 %v2774, %v2772
        %v2857 = vpack.c.b16 %v2775, %v2773
        %v2858 = vpack.c.b16 %v2778, %v2776
        %v2859 = vpack.c.b16 %v2779, %v2777
        %v2860 = vpack.c.b16 %v2782, %v2780
        %v2861 = vpack.c.b16 %v2783, %v2781
        %v2862 = vpack.c.b16 %v2786, %v2784
        %v2863 = vpack.c.b16 %v2787, %v2785
        %v2864 = vpack.c.b16 %v2788, %v2788
        %v2865 = vpack.c.b16 %v2789, %v2789
        %vm2940 = vcmask 719872
        %v2942 = vsel %vm2940, %v2424, 0
        %v2945 = vsel %vm2940, %v2429, 0
        %v2948 = vsel %vm2940, %v2434, 0
        %v2951 = vsel %vm2940, %v2439, 0
        %v2954 = vsel %vm2940, %v2444, 0
        %v2957 = vsel %vm2940, %v2449, 0
        %v2960 = vsel %vm2940, %v2454, 0
        %v2963 = vsel %vm2940, %v2459, 0
        %v2966 = vsel %vm2940, %v2464, 0
        %v2969 = vsel %vm2940, %v2469, 0
        %v2972 = vsel %vm2940, %v2474, 0
        %v2975 = vsel %vm2940, %v2479, 0
        %v2978 = vsel %vm2940, %v2484, 0
        %v2981 = vsel %vm2940, %v2489, 0
        %vm2983 = vcmask 1043456
        %v2985 = vsel %vm2983, %v2864, 0
        %v2988 = vsel %vm2983, %v2865, 0
        %2990 = vmatprep.subr.bf16.mxu0 %v2805
        %2991 = vmatpush1.bf16.msra.mxu0 %v2804
        %2992 = vmatprep.subr.bf16.mxu0 %v2803
        %2993 = vmatpush1.bf16.msra.mxu0 %v2802
        %2994 = vmatprep.subr.bf16.mxu0 %v2801
        %2995 = vmatpush1.bf16.msra.mxu0 %v2800
        %2996 = vmatprep.subr.bf16.mxu0 %v2799
        %2997 = vmatpush1.bf16.msra.mxu0 %v2798
        %2998 = vmatprep.subr.bf16.mxu0 %v2797
        %2999 = vmatpush1.bf16.msra.mxu0 %v2796
        %3000 = vmatprep.subr.bf16.mxu0 %v2795
        %3001 = vmatpush1.bf16.msra.mxu0 %v2794
        %3002 = vmatprep.subr.bf16.mxu0 %v2793
        %3003 = vmatpush1.bf16.msra.mxu0 %v2792
        %3004 = vmatprep.subr.bf16.mxu0 %v2791
        %3005 = vmatpush1.bf16.msra.mxu0 %v2790
        %3006 = vmatprep.subr.bf16.mxu0 %v2821
        %3007 = vmatpush2.bf16.msra.mxu0 %v2820
        %3008 = vmatprep.subr.bf16.mxu0 %v2819
        %3009 = vmatpush2.bf16.msra.mxu0 %v2818
        %3010 = vmatprep.subr.bf16.mxu0 %v2817
        %3011 = vmatpush2.bf16.msra.mxu0 %v2816
        %3012 = vmatprep.subr.bf16.mxu0 %v2815
        %3013 = vmatpush2.bf16.msra.mxu0 %v2814
        %3014 = vmatprep.subr.bf16.mxu0 %v2813
        %3015 = vmatpush2.bf16.msra.mxu0 %v2812
        %3016 = vmatprep.subr.bf16.mxu0 %v2811
        %3017 = vmatpush2.bf16.msra.mxu0 %v2810
        %3018 = vmatprep.subr.bf16.mxu0 %v2809
        %3019 = vmatpush2.bf16.msra.mxu0 %v2808
        %3020 = vmatprep.subr.bf16.mxu0 %v2807
        %3021 = vmatpush2.bf16.msra.mxu0 %v2806
        %3022 = vmatprep.mubr.bf16.mxu0 %v2421
        %3023 = vmatmul.mubr.bf16.gmra.mxu0 %v2420
        %v3024 = vpop.f32.mrf.mxu0
        %v3025 = vadd.f32 0.0, %v3024
        %v3026 = vpop.f32.mrf.mxu0
        %v3027 = vadd.f32 0.0, %v3026
        %v3028 = vpop.f32.mrf.mxu0
        %v3029 = vadd.f32 0.0, %v3028
        %v3030 = vpop.f32.mrf.mxu0
        %v3031 = vadd.f32 0.0, %v3030
        %3032 = vmatprep.mubr.bf16.mxu0 %v2426
        %3033 = vmatmul.mubr.bf16.gmra.mxu0 %v2425
        %v3034 = vpop.f32.mrf.mxu0
        %v3035 = vadd.f32 0.0, %v3034
        %v3036 = vpop.f32.mrf.mxu0
        %v3037 = vadd.f32 0.0, %v3036
        %v3038 = vpop.f32.mrf.mxu0
        %v3039 = vadd.f32 0.0, %v3038
        %v3040 = vpop.f32.mrf.mxu0
        %v3041 = vadd.f32 0.0, %v3040
        %3042 = vmatprep.mubr.bf16.mxu0 %v2431
        %3043 = vmatmul.mubr.bf16.gmra.mxu0 %v2430
        %v3044 = vpop.f32.mrf.mxu0
        %v3045 = vadd.f32 0.0, %v3044
        %v3046 = vpop.f32.mrf.mxu0
        %v3047 = vadd.f32 0.0, %v3046
        %v3048 = vpop.f32.mrf.mxu0
        %v3049 = vadd.f32 0.0, %v3048
        %v3050 = vpop.f32.mrf.mxu0
        %v3051 = vadd.f32 0.0, %v3050
        %3052 = vmatprep.mubr.bf16.mxu0 %v2436
        %3053 = vmatmul.mubr.bf16.gmra.mxu0 %v2435
        %v3054 = vpop.f32.mrf.mxu0
        %v3055 = vadd.f32 0.0, %v3054
        %v3056 = vpop.f32.mrf.mxu0
        %v3057 = vadd.f32 0.0, %v3056
        %v3058 = vpop.f32.mrf.mxu0
        %v3059 = vadd.f32 0.0, %v3058
        %v3060 = vpop.f32.mrf.mxu0
        %v3061 = vadd.f32 0.0, %v3060
        %3062 = vmatprep.mubr.bf16.mxu0 %v2441
        %3063 = vmatmul.mubr.bf16.gmra.mxu0 %v2440
        %v3064 = vpop.f32.mrf.mxu0
        %v3065 = vadd.f32 0.0, %v3064
        %v3066 = vpop.f32.mrf.mxu0
        %v3067 = vadd.f32 0.0, %v3066
        %v3068 = vpop.f32.mrf.mxu0
        %v3069 = vadd.f32 0.0, %v3068
        %v3070 = vpop.f32.mrf.mxu0
        %v3071 = vadd.f32 0.0, %v3070
        %3072 = vmatprep.mubr.bf16.mxu0 %v2446
        %3073 = vmatmul.mubr.bf16.gmra.mxu0 %v2445
        %v3074 = vpop.f32.mrf.mxu0
        %v3075 = vadd.f32 0.0, %v3074
        %v3076 = vpop.f32.mrf.mxu0
        %v3077 = vadd.f32 0.0, %v3076
        %v3078 = vpop.f32.mrf.mxu0
        %v3079 = vadd.f32 0.0, %v3078
        %v3080 = vpop.f32.mrf.mxu0
        %v3081 = vadd.f32 0.0, %v3080
        %3082 = vmatprep.mubr.bf16.mxu0 %v2451
        %3083 = vmatmul.mubr.bf16.gmra.mxu0 %v2450
        %v3084 = vpop.f32.mrf.mxu0
        %v3085 = vadd.f32 0.0, %v3084
        %v3086 = vpop.f32.mrf.mxu0
        %v3087 = vadd.f32 0.0, %v3086
        %v3088 = vpop.f32.mrf.mxu0
        %v3089 = vadd.f32 0.0, %v3088
        %v3090 = vpop.f32.mrf.mxu0
        %v3091 = vadd.f32 0.0, %v3090
        %3092 = vmatprep.mubr.bf16.mxu0 %v2456
        %3093 = vmatmul.mubr.bf16.gmra.mxu0 %v2455
        %v3094 = vpop.f32.mrf.mxu0
        %v3095 = vadd.f32 0.0, %v3094
        %v3096 = vpop.f32.mrf.mxu0
        %v3097 = vadd.f32 0.0, %v3096
        %v3098 = vpop.f32.mrf.mxu0
        %v3099 = vadd.f32 0.0, %v3098
        %v3100 = vpop.f32.mrf.mxu0
        %v3101 = vadd.f32 0.0, %v3100
        %3102 = vmatprep.mubr.bf16.mxu0 %v2461
        %3103 = vmatmul.mubr.bf16.gmra.mxu0 %v2460
        %v3104 = vpop.f32.mrf.mxu0
        %v3105 = vadd.f32 0.0, %v3104
        %v3106 = vpop.f32.mrf.mxu0
        %v3107 = vadd.f32 0.0, %v3106
        %v3108 = vpop.f32.mrf.mxu0
        %v3109 = vadd.f32 0.0, %v3108
        %v3110 = vpop.f32.mrf.mxu0
        %v3111 = vadd.f32 0.0, %v3110
        %3112 = vmatprep.mubr.bf16.mxu0 %v2466
        %3113 = vmatmul.mubr.bf16.gmra.mxu0 %v2465
        %v3114 = vpop.f32.mrf.mxu0
        %v3115 = vadd.f32 0.0, %v3114
        %v3116 = vpop.f32.mrf.mxu0
        %v3117 = vadd.f32 0.0, %v3116
        %v3118 = vpop.f32.mrf.mxu0
        %v3119 = vadd.f32 0.0, %v3118
        %v3120 = vpop.f32.mrf.mxu0
        %v3121 = vadd.f32 0.0, %v3120
        %3122 = vmatprep.mubr.bf16.mxu0 %v2471
        %3123 = vmatmul.mubr.bf16.gmra.mxu0 %v2470
        %v3124 = vpop.f32.mrf.mxu0
        %v3125 = vadd.f32 0.0, %v3124
        %v3126 = vpop.f32.mrf.mxu0
        %v3127 = vadd.f32 0.0, %v3126
        %v3128 = vpop.f32.mrf.mxu0
        %v3129 = vadd.f32 0.0, %v3128
        %v3130 = vpop.f32.mrf.mxu0
        %v3131 = vadd.f32 0.0, %v3130
        %3132 = vmatprep.mubr.bf16.mxu0 %v2476
        %3133 = vmatmul.mubr.bf16.gmra.mxu0 %v2475
        %v3134 = vpop.f32.mrf.mxu0
        %v3135 = vadd.f32 0.0, %v3134
        %v3136 = vpop.f32.mrf.mxu0
        %v3137 = vadd.f32 0.0, %v3136
        %v3138 = vpop.f32.mrf.mxu0
        %v3139 = vadd.f32 0.0, %v3138
        %v3140 = vpop.f32.mrf.mxu0
        %v3141 = vadd.f32 0.0, %v3140
        %3142 = vmatprep.mubr.bf16.mxu0 %v2481
        %3143 = vmatmul.mubr.bf16.gmra.mxu0 %v2480
        %v3144 = vpop.f32.mrf.mxu0
        %v3145 = vadd.f32 0.0, %v3144
        %v3146 = vpop.f32.mrf.mxu0
        %v3147 = vadd.f32 0.0, %v3146
        %v3148 = vpop.f32.mrf.mxu0
        %v3149 = vadd.f32 0.0, %v3148
        %v3150 = vpop.f32.mrf.mxu0
        %v3151 = vadd.f32 0.0, %v3150
        %3152 = vmatprep.mubr.bf16.mxu0 %v2486
        %3153 = vmatmul.mubr.bf16.gmra.mxu0 %v2485
        %v3154 = vpop.f32.mrf.mxu0
        %v3155 = vadd.f32 0.0, %v3154
        %v3156 = vpop.f32.mrf.mxu0
        %v3157 = vadd.f32 0.0, %v3156
        %v3158 = vpop.f32.mrf.mxu0
        %v3159 = vadd.f32 0.0, %v3158
        %v3160 = vpop.f32.mrf.mxu0
        %v3161 = vadd.f32 0.0, %v3160
        %3162 = vdwg.mxu0
        %3163 = vmatprep.subr.bf16.mxu0 %v2837
        %3164 = vmatpush1.bf16.msra.mxu0 %v2836
        %3165 = vmatprep.subr.bf16.mxu0 %v2835
        %3166 = vmatpush1.bf16.msra.mxu0 %v2834
        %3167 = vmatprep.subr.bf16.mxu0 %v2833
        %3168 = vmatpush1.bf16.msra.mxu0 %v2832
        %3169 = vmatprep.subr.bf16.mxu0 %v2831
        %3170 = vmatpush1.bf16.msra.mxu0 %v2830
        %3171 = vmatprep.subr.bf16.mxu0 %v2829
        %3172 = vmatpush1.bf16.msra.mxu0 %v2828
        %3173 = vmatprep.subr.bf16.mxu0 %v2827
        %3174 = vmatpush1.bf16.msra.mxu0 %v2826
        %3175 = vmatprep.subr.bf16.mxu0 %v2825
        %3176 = vmatpush1.bf16.msra.mxu0 %v2824
        %3177 = vmatprep.subr.bf16.mxu0 %v2823
        %3178 = vmatpush1.bf16.msra.mxu0 %v2822
        %3179 = vmatprep.subr.bf16.mxu0 %v2853
        %3180 = vmatpush2.bf16.msra.mxu0 %v2852
        %3181 = vmatprep.subr.bf16.mxu0 %v2851
        %3182 = vmatpush2.bf16.msra.mxu0 %v2850
        %3183 = vmatprep.subr.bf16.mxu0 %v2849
        %3184 = vmatpush2.bf16.msra.mxu0 %v2848
        %3185 = vmatprep.subr.bf16.mxu0 %v2847
        %3186 = vmatpush2.bf16.msra.mxu0 %v2846
        %3187 = vmatprep.subr.bf16.mxu0 %v2845
        %3188 = vmatpush2.bf16.msra.mxu0 %v2844
        %3189 = vmatprep.subr.bf16.mxu0 %v2843
        %3190 = vmatpush2.bf16.msra.mxu0 %v2842
        %3191 = vmatprep.subr.bf16.mxu0 %v2841
        %3192 = vmatpush2.bf16.msra.mxu0 %v2840
        %3193 = vmatprep.subr.bf16.mxu0 %v2839
        %3194 = vmatpush2.bf16.msra.mxu0 %v2838
        %3195 = vmatprep.mubr.bf16.mxu0 %v2423
        %3196 = vmatmul.mubr.bf16.gmra.mxu0 %v2422
        %v3197 = vpop.f32.mrf.mxu0
        %v3198 = vadd.f32 %v3025, %v3197
        %v3199 = vpop.f32.mrf.mxu0
        %v3200 = vadd.f32 %v3027, %v3199
        %v3201 = vpop.f32.mrf.mxu0
        %v3202 = vadd.f32 %v3029, %v3201
        %v3203 = vpop.f32.mrf.mxu0
        %v3204 = vadd.f32 %v3031, %v3203
        %3205 = vmatprep.mubr.bf16.mxu0 %v2428
        %3206 = vmatmul.mubr.bf16.gmra.mxu0 %v2427
        %v3207 = vpop.f32.mrf.mxu0
        %v3208 = vadd.f32 %v3035, %v3207
        %v3209 = vpop.f32.mrf.mxu0
        %v3210 = vadd.f32 %v3037, %v3209
        %v3211 = vpop.f32.mrf.mxu0
        %v3212 = vadd.f32 %v3039, %v3211
        %v3213 = vpop.f32.mrf.mxu0
        %v3214 = vadd.f32 %v3041, %v3213
        %3215 = vmatprep.mubr.bf16.mxu0 %v2433
        %3216 = vmatmul.mubr.bf16.gmra.mxu0 %v2432
        %v3217 = vpop.f32.mrf.mxu0
        %v3218 = vadd.f32 %v3045, %v3217
        %v3219 = vpop.f32.mrf.mxu0
        %v3220 = vadd.f32 %v3047, %v3219
        %v3221 = vpop.f32.mrf.mxu0
        %v3222 = vadd.f32 %v3049, %v3221
        %v3223 = vpop.f32.mrf.mxu0
        %v3224 = vadd.f32 %v3051, %v3223
        %3225 = vmatprep.mubr.bf16.mxu0 %v2438
        %3226 = vmatmul.mubr.bf16.gmra.mxu0 %v2437
        %v3227 = vpop.f32.mrf.mxu0
        %v3228 = vadd.f32 %v3055, %v3227
        %v3229 = vpop.f32.mrf.mxu0
        %v3230 = vadd.f32 %v3057, %v3229
        %v3231 = vpop.f32.mrf.mxu0
        %v3232 = vadd.f32 %v3059, %v3231
        %v3233 = vpop.f32.mrf.mxu0
        %v3234 = vadd.f32 %v3061, %v3233
        %3235 = vmatprep.mubr.bf16.mxu0 %v2443
        %3236 = vmatmul.mubr.bf16.gmra.mxu0 %v2442
        %v3237 = vpop.f32.mrf.mxu0
        %v3238 = vadd.f32 %v3065, %v3237
        %v3239 = vpop.f32.mrf.mxu0
        %v3240 = vadd.f32 %v3067, %v3239
        %v3241 = vpop.f32.mrf.mxu0
        %v3242 = vadd.f32 %v3069, %v3241
        %v3243 = vpop.f32.mrf.mxu0
        %v3244 = vadd.f32 %v3071, %v3243
        %3245 = vmatprep.mubr.bf16.mxu0 %v2448
        %3246 = vmatmul.mubr.bf16.gmra.mxu0 %v2447
        %v3247 = vpop.f32.mrf.mxu0
        %v3248 = vadd.f32 %v3075, %v3247
        %v3249 = vpop.f32.mrf.mxu0
        %v3250 = vadd.f32 %v3077, %v3249
        %v3251 = vpop.f32.mrf.mxu0
        %v3252 = vadd.f32 %v3079, %v3251
        %v3253 = vpop.f32.mrf.mxu0
        %v3254 = vadd.f32 %v3081, %v3253
        %3255 = vmatprep.mubr.bf16.mxu0 %v2453
        %3256 = vmatmul.mubr.bf16.gmra.mxu0 %v2452
        %v3257 = vpop.f32.mrf.mxu0
        %v3258 = vadd.f32 %v3085, %v3257
        %v3259 = vpop.f32.mrf.mxu0
        %v3260 = vadd.f32 %v3087, %v3259
        %v3261 = vpop.f32.mrf.mxu0
        %v3262 = vadd.f32 %v3089, %v3261
        %v3263 = vpop.f32.mrf.mxu0
        %v3264 = vadd.f32 %v3091, %v3263
        %3265 = vmatprep.mubr.bf16.mxu0 %v2458
        %3266 = vmatmul.mubr.bf16.gmra.mxu0 %v2457
        %v3267 = vpop.f32.mrf.mxu0
        %v3268 = vadd.f32 %v3095, %v3267
        %v3269 = vpop.f32.mrf.mxu0
        %v3270 = vadd.f32 %v3097, %v3269
        %v3271 = vpop.f32.mrf.mxu0
        %v3272 = vadd.f32 %v3099, %v3271
        %v3273 = vpop.f32.mrf.mxu0
        %v3274 = vadd.f32 %v3101, %v3273
        %3275 = vmatprep.mubr.bf16.mxu0 %v2463
        %3276 = vmatmul.mubr.bf16.gmra.mxu0 %v2462
        %v3277 = vpop.f32.mrf.mxu0
        %v3278 = vadd.f32 %v3105, %v3277
        %v3279 = vpop.f32.mrf.mxu0
        %v3280 = vadd.f32 %v3107, %v3279
        %v3281 = vpop.f32.mrf.mxu0
        %v3282 = vadd.f32 %v3109, %v3281
        %v3283 = vpop.f32.mrf.mxu0
        %v3284 = vadd.f32 %v3111, %v3283
        %3285 = vmatprep.mubr.bf16.mxu0 %v2468
        %3286 = vmatmul.mubr.bf16.gmra.mxu0 %v2467
        %v3287 = vpop.f32.mrf.mxu0
        %v3288 = vadd.f32 %v3115, %v3287
        %v3289 = vpop.f32.mrf.mxu0
        %v3290 = vadd.f32 %v3117, %v3289
        %v3291 = vpop.f32.mrf.mxu0
        %v3292 = vadd.f32 %v3119, %v3291
        %v3293 = vpop.f32.mrf.mxu0
        %v3294 = vadd.f32 %v3121, %v3293
        %3295 = vmatprep.mubr.bf16.mxu0 %v2473
        %3296 = vmatmul.mubr.bf16.gmra.mxu0 %v2472
        %v3297 = vpop.f32.mrf.mxu0
        %v3298 = vadd.f32 %v3125, %v3297
        %v3299 = vpop.f32.mrf.mxu0
        %v3300 = vadd.f32 %v3127, %v3299
        %v3301 = vpop.f32.mrf.mxu0
        %v3302 = vadd.f32 %v3129, %v3301
        %v3303 = vpop.f32.mrf.mxu0
        %v3304 = vadd.f32 %v3131, %v3303
        %3305 = vmatprep.mubr.bf16.mxu0 %v2478
        %3306 = vmatmul.mubr.bf16.gmra.mxu0 %v2477
        %v3307 = vpop.f32.mrf.mxu0
        %v3308 = vadd.f32 %v3135, %v3307
        %v3309 = vpop.f32.mrf.mxu0
        %v3310 = vadd.f32 %v3137, %v3309
        %v3311 = vpop.f32.mrf.mxu0
        %v3312 = vadd.f32 %v3139, %v3311
        %v3313 = vpop.f32.mrf.mxu0
        %v3314 = vadd.f32 %v3141, %v3313
        %3315 = vmatprep.mubr.bf16.mxu0 %v2483
        %3316 = vmatmul.mubr.bf16.gmra.mxu0 %v2482
        %v3317 = vpop.f32.mrf.mxu0
        %v3318 = vadd.f32 %v3145, %v3317
        %v3319 = vpop.f32.mrf.mxu0
        %v3320 = vadd.f32 %v3147, %v3319
        %v3321 = vpop.f32.mrf.mxu0
        %v3322 = vadd.f32 %v3149, %v3321
        %v3323 = vpop.f32.mrf.mxu0
        %v3324 = vadd.f32 %v3151, %v3323
        %3325 = vmatprep.mubr.bf16.mxu0 %v2488
        %3326 = vmatmul.mubr.bf16.gmra.mxu0 %v2487
        %v3327 = vpop.f32.mrf.mxu0
        %v3328 = vadd.f32 %v3155, %v3327
        %v3329 = vpop.f32.mrf.mxu0
        %v3330 = vadd.f32 %v3157, %v3329
        %v3331 = vpop.f32.mrf.mxu0
        %v3332 = vadd.f32 %v3159, %v3331
        %v3333 = vpop.f32.mrf.mxu0
        %v3334 = vadd.f32 %v3161, %v3333
        %3335 = vdwg.mxu0
        %3336 = vmatprep.subr.bf16.mxu0 0
        %3337 = vmatpush1.bf16.msra.mxu0 0
        %3338 = vmatprep.subr.bf16.mxu0 0
        %3339 = vmatpush1.bf16.msra.mxu0 0
        %3340 = vmatprep.subr.bf16.mxu0 %v2988
        %3341 = vmatpush1.bf16.msra.mxu0 %v2985
        %3342 = vmatprep.subr.bf16.mxu0 %v2863
        %3343 = vmatpush1.bf16.msra.mxu0 %v2862
        %3344 = vmatprep.subr.bf16.mxu0 %v2861
        %3345 = vmatpush1.bf16.msra.mxu0 %v2860
        %3346 = vmatprep.subr.bf16.mxu0 %v2859
        %3347 = vmatpush1.bf16.msra.mxu0 %v2858
        %3348 = vmatprep.subr.bf16.mxu0 %v2857
        %3349 = vmatpush1.bf16.msra.mxu0 %v2856
        %3350 = vmatprep.subr.bf16.mxu0 %v2855
        %3351 = vmatpush1.bf16.msra.mxu0 %v2854
        %3352 = vmatprep.subr.bf16.mxu0 0
        %3353 = vmatpush2.bf16.msra.mxu0 0
        %3354 = vmatprep.subr.bf16.mxu0 0
        %3355 = vmatpush2.bf16.msra.mxu0 0
        %3356 = vmatprep.subr.bf16.mxu0 0
        %3357 = vmatpush2.bf16.msra.mxu0 0
        %3358 = vmatprep.subr.bf16.mxu0 0
        %3359 = vmatpush2.bf16.msra.mxu0 0
        %3360 = vmatprep.subr.bf16.mxu0 0
        %3361 = vmatpush2.bf16.msra.mxu0 0
        %3362 = vmatprep.subr.bf16.mxu0 0
        %3363 = vmatpush2.bf16.msra.mxu0 0
        %3364 = vmatprep.subr.bf16.mxu0 0
        %3365 = vmatpush2.bf16.msra.mxu0 0
        %3366 = vmatprep.subr.bf16.mxu0 0
        %3367 = vmatpush2.bf16.msra.mxu0 0
        %3368 = vmatprep.mubr.bf16.mxu0 0
        %3369 = vmatmul.mubr.bf16.gmra.mxu0 %v2942
        %v3370 = vpop.f32.mrf.mxu0
        %v3371 = vadd.f32 %v3198, %v3370
        %v3372 = vpop.f32.mrf.mxu0
        %v3373 = vadd.f32 %v3200, %v3372
        %v3374 = vpop.f32.mrf.mxu0
        %v3375 = vadd.f32 %v3202, %v3374
        %v3376 = vpop.f32.mrf.mxu0
        %v3377 = vadd.f32 %v3204, %v3376
        %3378 = vmatprep.mubr.bf16.mxu0 0
        %3379 = vmatmul.mubr.bf16.gmra.mxu0 %v2945
        %v3380 = vpop.f32.mrf.mxu0
        %v3381 = vadd.f32 %v3208, %v3380
        %v3382 = vpop.f32.mrf.mxu0
        %v3383 = vadd.f32 %v3210, %v3382
        %v3384 = vpop.f32.mrf.mxu0
        %v3385 = vadd.f32 %v3212, %v3384
        %v3386 = vpop.f32.mrf.mxu0
        %v3387 = vadd.f32 %v3214, %v3386
        %3388 = vmatprep.mubr.bf16.mxu0 0
        %3389 = vmatmul.mubr.bf16.gmra.mxu0 %v2948
        %v3390 = vpop.f32.mrf.mxu0
        %v3391 = vadd.f32 %v3218, %v3390
        %v3392 = vpop.f32.mrf.mxu0
        %v3393 = vadd.f32 %v3220, %v3392
        %v3394 = vpop.f32.mrf.mxu0
        %v3395 = vadd.f32 %v3222, %v3394
        %v3396 = vpop.f32.mrf.mxu0
        %v3397 = vadd.f32 %v3224, %v3396
        %3398 = vmatprep.mubr.bf16.mxu0 0
        %3399 = vmatmul.mubr.bf16.gmra.mxu0 %v2951
        %v3400 = vpop.f32.mrf.mxu0
        %v3401 = vadd.f32 %v3228, %v3400
        %v3402 = vpop.f32.mrf.mxu0
        %v3403 = vadd.f32 %v3230, %v3402
        %v3404 = vpop.f32.mrf.mxu0
        %v3405 = vadd.f32 %v3232, %v3404
        %v3406 = vpop.f32.mrf.mxu0
        %v3407 = vadd.f32 %v3234, %v3406
        %3408 = vmatprep.mubr.bf16.mxu0 0
        %3409 = vmatmul.mubr.bf16.gmra.mxu0 %v2954
        %v3410 = vpop.f32.mrf.mxu0
        %v3411 = vadd.f32 %v3238, %v3410
        %v3412 = vpop.f32.mrf.mxu0
        %v3413 = vadd.f32 %v3240, %v3412
        %v3414 = vpop.f32.mrf.mxu0
        %v3415 = vadd.f32 %v3242, %v3414
        %v3416 = vpop.f32.mrf.mxu0
        %v3417 = vadd.f32 %v3244, %v3416
        %3418 = vmatprep.mubr.bf16.mxu0 0
        %3419 = vmatmul.mubr.bf16.gmra.mxu0 %v2957
        %v3420 = vpop.f32.mrf.mxu0
        %v3421 = vadd.f32 %v3248, %v3420
        %v3422 = vpop.f32.mrf.mxu0
        %v3423 = vadd.f32 %v3250, %v3422
        %v3424 = vpop.f32.mrf.mxu0
        %v3425 = vadd.f32 %v3252, %v3424
        %v3426 = vpop.f32.mrf.mxu0
        %v3427 = vadd.f32 %v3254, %v3426
        %3428 = vmatprep.mubr.bf16.mxu0 0
        %3429 = vmatmul.mubr.bf16.gmra.mxu0 %v2960
        %v3430 = vpop.f32.mrf.mxu0
        %v3431 = vadd.f32 %v3258, %v3430
        %v3432 = vpop.f32.mrf.mxu0
        %v3433 = vadd.f32 %v3260, %v3432
        %v3434 = vpop.f32.mrf.mxu0
        %v3435 = vadd.f32 %v3262, %v3434
        %v3436 = vpop.f32.mrf.mxu0
        %v3437 = vadd.f32 %v3264, %v3436
        %3438 = vmatprep.mubr.bf16.mxu0 0
        %3439 = vmatmul.mubr.bf16.gmra.mxu0 %v2963
        %v3440 = vpop.f32.mrf.mxu0
        %v3441 = vadd.f32 %v3268, %v3440
        %v3442 = vpop.f32.mrf.mxu0
        %v3443 = vadd.f32 %v3270, %v3442
        %v3444 = vpop.f32.mrf.mxu0
        %v3445 = vadd.f32 %v3272, %v3444
        %v3446 = vpop.f32.mrf.mxu0
        %v3447 = vadd.f32 %v3274, %v3446
        %3448 = vmatprep.mubr.bf16.mxu0 0
        %3449 = vmatmul.mubr.bf16.gmra.mxu0 %v2966
        %v3450 = vpop.f32.mrf.mxu0
        %v3451 = vadd.f32 %v3278, %v3450
        %v3452 = vpop.f32.mrf.mxu0
        %v3453 = vadd.f32 %v3280, %v3452
        %v3454 = vpop.f32.mrf.mxu0
        %v3455 = vadd.f32 %v3282, %v3454
        %v3456 = vpop.f32.mrf.mxu0
        %v3457 = vadd.f32 %v3284, %v3456
        %3458 = vmatprep.mubr.bf16.mxu0 0
        %3459 = vmatmul.mubr.bf16.gmra.mxu0 %v2969
        %v3460 = vpop.f32.mrf.mxu0
        %v3461 = vadd.f32 %v3288, %v3460
        %v3462 = vpop.f32.mrf.mxu0
        %v3463 = vadd.f32 %v3290, %v3462
        %v3464 = vpop.f32.mrf.mxu0
        %v3465 = vadd.f32 %v3292, %v3464
        %v3466 = vpop.f32.mrf.mxu0
        %v3467 = vadd.f32 %v3294, %v3466
        %3468 = vmatprep.mubr.bf16.mxu0 0
        %3469 = vmatmul.mubr.bf16.gmra.mxu0 %v2972
        %v3470 = vpop.f32.mrf.mxu0
        %v3471 = vadd.f32 %v3298, %v3470
        %v3472 = vpop.f32.mrf.mxu0
        %v3473 = vadd.f32 %v3300, %v3472
        %v3474 = vpop.f32.mrf.mxu0
        %v3475 = vadd.f32 %v3302, %v3474
        %v3476 = vpop.f32.mrf.mxu0
        %v3477 = vadd.f32 %v3304, %v3476
        %3478 = vmatprep.mubr.bf16.mxu0 0
        %3479 = vmatmul.mubr.bf16.gmra.mxu0 %v2975
        %v3480 = vpop.f32.mrf.mxu0
        %v3481 = vadd.f32 %v3308, %v3480
        %v3482 = vpop.f32.mrf.mxu0
        %v3483 = vadd.f32 %v3310, %v3482
        %v3484 = vpop.f32.mrf.mxu0
        %v3485 = vadd.f32 %v3312, %v3484
        %v3486 = vpop.f32.mrf.mxu0
        %v3487 = vadd.f32 %v3314, %v3486
        %3488 = vmatprep.mubr.bf16.mxu0 0
        %3489 = vmatmul.mubr.bf16.gmra.mxu0 %v2978
        %v3490 = vpop.f32.mrf.mxu0
        %v3491 = vadd.f32 %v3318, %v3490
        %v3492 = vpop.f32.mrf.mxu0
        %v3493 = vadd.f32 %v3320, %v3492
        %v3494 = vpop.f32.mrf.mxu0
        %v3495 = vadd.f32 %v3322, %v3494
        %v3496 = vpop.f32.mrf.mxu0
        %v3497 = vadd.f32 %v3324, %v3496
        %3498 = vmatprep.mubr.bf16.mxu0 0
        %3499 = vmatmul.mubr.bf16.gmra.mxu0 %v2981
        %v3500 = vpop.f32.mrf.mxu0
        %v3501 = vadd.f32 %v3328, %v3500
        %v3502 = vpop.f32.mrf.mxu0
        %v3503 = vadd.f32 %v3330, %v3502
        %v3504 = vpop.f32.mrf.mxu0
        %v3505 = vadd.f32 %v3332, %v3504
        %v3506 = vpop.f32.mrf.mxu0
        %v3507 = vadd.f32 %v3334, %v3506
        %3508 = vdwg.mxu0
        %v3509 = vmax.f32 %v3371, %v3373
        %v3510 = vmax.f32 %v3375, %v3377
        %v3511 = vmax.f32 %v3381, %v3383
        %v3512 = vmax.f32 %v3385, %v3387
        %v3513 = vmax.f32 %v3391, %v3393
        %v3514 = vmax.f32 %v3395, %v3397
        %v3515 = vmax.f32 %v3401, %v3403
        %v3516 = vmax.f32 %v3405, %v3407
        %v3517 = vmax.f32 %v3411, %v3413
        %v3518 = vmax.f32 %v3415, %v3417
        %v3519 = vmax.f32 %v3421, %v3423
        %v3520 = vmax.f32 %v3425, %v3427
        %v3521 = vmax.f32 %v3431, %v3433
        %v3522 = vmax.f32 %v3435, %v3437
        %v3523 = vmax.f32 %v3441, %v3443
        %v3524 = vmax.f32 %v3445, %v3447
        %v3525 = vmax.f32 %v3451, %v3453
        %v3526 = vmax.f32 %v3455, %v3457
        %v3527 = vmax.f32 %v3461, %v3463
        %v3528 = vmax.f32 %v3465, %v3467
        %v3529 = vmax.f32 %v3471, %v3473
        %v3530 = vmax.f32 %v3475, %v3477
        %v3531 = vmax.f32 %v3481, %v3483
        %v3532 = vmax.f32 %v3485, %v3487
        %v3533 = vmax.f32 %v3491, %v3493
        %v3534 = vmax.f32 %v3495, %v3497
        %v3535 = vmax.f32 %v3501, %v3503
        %v3536 = vmax.f32 %v3505, %v3507
        %v3537 = vrot.slane %v3509, 2
        %v3538 = vrot.slane %v3510, 2
        %v3539 = vrot.slane %v3511, 2
        %v3540 = vrot.slane %v3512, 2
        %v3541 = vrot.slane %v3513, 2
        %v3542 = vrot.slane %v3514, 2
        %v3543 = vrot.slane %v3515, 2
        %v3544 = vrot.slane %v3516, 2
        %v3545 = vrot.slane %v3517, 2
        %v3546 = vrot.slane %v3518, 2
        %v3547 = vrot.slane %v3519, 2
        %v3548 = vrot.slane %v3520, 2
        %v3549 = vrot.slane %v3521, 2
        %v3550 = vrot.slane %v3522, 2
        %v3551 = vrot.slane %v3523, 2
        %v3552 = vrot.slane %v3524, 2
        %v3553 = vrot.slane %v3525, 2
        %v3554 = vrot.slane %v3526, 2
        %v3555 = vrot.slane %v3527, 2
        %v3556 = vrot.slane %v3528, 2
        %v3557 = vrot.slane %v3529, 2
        %v3558 = vrot.slane %v3530, 2
        %v3559 = vrot.slane %v3531, 2
        %v3560 = vrot.slane %v3532, 2
        %v3561 = vrot.slane %v3533, 2
        %v3562 = vrot.slane %v3534, 2
        %v3563 = vrot.slane %v3535, 2
        %v3564 = vrot.slane %v3536, 2
        %v3565 = vsel %vm449, %v3563, %v3564
        %v3566 = vsel %vm449, %v3562, %v3563
        %v3567 = vsel %vm449, %v3561, %v3562
        %v3568 = vsel %vm449, %v3560, %v3561
        %v3569 = vsel %vm449, %v3559, %v3560
        %v3570 = vsel %vm449, %v3558, %v3559
        %v3571 = vsel %vm449, %v3557, %v3558
        %v3572 = vsel %vm449, %v3556, %v3557
        %v3573 = vsel %vm449, %v3555, %v3556
        %v3574 = vsel %vm449, %v3554, %v3555
        %v3575 = vsel %vm449, %v3553, %v3554
        %v3576 = vsel %vm449, %v3552, %v3553
        %v3577 = vsel %vm449, %v3551, %v3552
        %v3578 = vsel %vm449, %v3550, %v3551
        %v3579 = vsel %vm449, %v3549, %v3550
        %v3580 = vsel %vm449, %v3548, %v3549
        %v3581 = vsel %vm449, %v3547, %v3548
        %v3582 = vsel %vm449, %v3546, %v3547
        %v3583 = vsel %vm449, %v3545, %v3546
        %v3584 = vsel %vm449, %v3544, %v3545
        %v3585 = vsel %vm449, %v3543, %v3544
        %v3586 = vsel %vm449, %v3542, %v3543
        %v3587 = vsel %vm449, %v3541, %v3542
        %v3588 = vsel %vm449, %v3540, %v3541
        %v3589 = vsel %vm449, %v3539, %v3540
        %v3590 = vsel %vm449, %v3538, %v3539
        %v3591 = vsel %vm449, %v3537, %v3538
        %v3592 = vsel %vm449, %v3564, %v3537
        %v3593 = vmax.f32 %v3509, %v3591
        %v3594 = vmax.f32 %v3510, %v3590
        %v3595 = vmax.f32 %v3511, %v3589
        %v3596 = vmax.f32 %v3512, %v3588
        %v3597 = vmax.f32 %v3513, %v3587
        %v3598 = vmax.f32 %v3514, %v3586
        %v3599 = vmax.f32 %v3515, %v3585
        %v3600 = vmax.f32 %v3516, %v3584
        %v3601 = vmax.f32 %v3517, %v3583
        %v3602 = vmax.f32 %v3518, %v3582
        %v3603 = vmax.f32 %v3519, %v3581
        %v3604 = vmax.f32 %v3520, %v3580
        %v3605 = vmax.f32 %v3521, %v3579
        %v3606 = vmax.f32 %v3522, %v3578
        %v3607 = vmax.f32 %v3523, %v3577
        %v3608 = vmax.f32 %v3524, %v3576
        %v3609 = vmax.f32 %v3525, %v3575
        %v3610 = vmax.f32 %v3526, %v3574
        %v3611 = vmax.f32 %v3527, %v3573
        %v3612 = vmax.f32 %v3528, %v3572
        %v3613 = vmax.f32 %v3529, %v3571
        %v3614 = vmax.f32 %v3530, %v3570
        %v3615 = vmax.f32 %v3531, %v3569
        %v3616 = vmax.f32 %v3532, %v3568
        %v3617 = vmax.f32 %v3533, %v3567
        %v3618 = vmax.f32 %v3534, %v3566
        %v3619 = vmax.f32 %v3535, %v3565
        %v3620 = vmax.f32 %v3536, %v3592
        %v3621 = vld [vmem:[%s4] sm:$0x1]
        %v3623 = vlaneseq
        %v3624 = vshrl.u32 %v3623, 7
        %v3625 = vsub.s32 0, %v3624
        %v3626 = vrot.slane %v3621, %v3625
        %v3628 = vadd.f32 %v3593, %v3626
        %v3629 = vadd.f32 %v3594, %v3626
        %v3630 = vadd.f32 %v3595, %v3626
        %v3631 = vadd.f32 %v3596, %v3626
        %v3632 = vadd.f32 %v3597, %v3626
        %v3633 = vadd.f32 %v3598, %v3626
        %v3634 = vadd.f32 %v3599, %v3626
        %v3635 = vadd.f32 %v3600, %v3626
        %v3636 = vadd.f32 %v3601, %v3626
        %v3637 = vadd.f32 %v3602, %v3626
        %v3638 = vadd.f32 %v3603, %v3626
        %v3639 = vadd.f32 %v3604, %v3626
        %v3640 = vadd.f32 %v3605, %v3626
        %v3641 = vadd.f32 %v3606, %v3626
        %v3642 = vadd.f32 %v3607, %v3626
        %v3643 = vadd.f32 %v3608, %v3626
        %v3644 = vadd.f32 %v3609, %v3626
        %v3645 = vadd.f32 %v3610, %v3626
        %v3646 = vadd.f32 %v3611, %v3626
        %v3647 = vadd.f32 %v3612, %v3626
        %v3648 = vadd.f32 %v3613, %v3626
        %v3649 = vadd.f32 %v3614, %v3626
        %v3650 = vadd.f32 %v3615, %v3626
        %v3651 = vadd.f32 %v3616, %v3626
        %v3652 = vadd.f32 %v3617, %v3626
        %v3653 = vadd.f32 %v3618, %v3626
        %v3654 = vadd.f32 %v3619, %v3626
        %v3655 = vadd.f32 %v3620, %v3626
        %v3656 = vmax.f32 %v3628, 0.0
        %v3657 = vmax.f32 %v3629, 0.0
        %v3658 = vmax.f32 %v3630, 0.0
        %v3659 = vmax.f32 %v3631, 0.0
        %v3660 = vmax.f32 %v3632, 0.0
        %v3661 = vmax.f32 %v3633, 0.0
        %v3662 = vmax.f32 %v3634, 0.0
        %v3663 = vmax.f32 %v3635, 0.0
        %v3664 = vmax.f32 %v3636, 0.0
        %v3665 = vmax.f32 %v3637, 0.0
        %v3666 = vmax.f32 %v3638, 0.0
        %v3667 = vmax.f32 %v3639, 0.0
        %v3668 = vmax.f32 %v3640, 0.0
        %v3669 = vmax.f32 %v3641, 0.0
        %v3670 = vmax.f32 %v3642, 0.0
        %v3671 = vmax.f32 %v3643, 0.0
        %v3672 = vmax.f32 %v3644, 0.0
        %v3673 = vmax.f32 %v3645, 0.0
        %v3674 = vmax.f32 %v3646, 0.0
        %v3675 = vmax.f32 %v3647, 0.0
        %v3676 = vmax.f32 %v3648, 0.0
        %v3677 = vmax.f32 %v3649, 0.0
        %v3678 = vmax.f32 %v3650, 0.0
        %v3679 = vmax.f32 %v3651, 0.0
        %v3680 = vmax.f32 %v3652, 0.0
        %v3681 = vmax.f32 %v3653, 0.0
        %v3682 = vmax.f32 %v3654, 0.0
        %v3683 = vmax.f32 %v3655, 0.0
        %v3684 = vrot.slane %v3656, 4
        %v3685 = vrot.slane %v3657, 4
        %v3686 = vrot.slane %v3658, 4
        %v3687 = vrot.slane %v3659, 4
        %v3688 = vrot.slane %v3660, 4
        %v3689 = vrot.slane %v3661, 4
        %v3690 = vrot.slane %v3662, 4
        %v3691 = vrot.slane %v3663, 4
        %v3692 = vrot.slane %v3664, 4
        %v3693 = vrot.slane %v3665, 4
        %v3694 = vrot.slane %v3666, 4
        %v3695 = vrot.slane %v3667, 4
        %v3696 = vrot.slane %v3668, 4
        %v3697 = vrot.slane %v3669, 4
        %v3698 = vrot.slane %v3670, 4
        %v3699 = vrot.slane %v3671, 4
        %v3700 = vrot.slane %v3672, 4
        %v3701 = vrot.slane %v3673, 4
        %v3702 = vrot.slane %v3674, 4
        %v3703 = vrot.slane %v3675, 4
        %v3704 = vrot.slane %v3676, 4
        %v3705 = vrot.slane %v3677, 4
        %v3706 = vrot.slane %v3678, 4
        %v3707 = vrot.slane %v3679, 4
        %v3708 = vrot.slane %v3680, 4
        %v3709 = vrot.slane %v3681, 4
        %v3710 = vrot.slane %v3682, 4
        %v3711 = vrot.slane %v3683, 4
        %v3712 = vsel %vm563, %v3710, %v3711
        %v3713 = vsel %vm563, %v3709, %v3710
        %v3714 = vsel %vm563, %v3708, %v3709
        %v3715 = vsel %vm563, %v3707, %v3708
        %v3716 = vsel %vm563, %v3706, %v3707
        %v3717 = vsel %vm563, %v3705, %v3706
        %v3718 = vsel %vm563, %v3704, %v3705
        %v3719 = vsel %vm563, %v3703, %v3704
        %v3720 = vsel %vm563, %v3702, %v3703
        %v3721 = vsel %vm563, %v3701, %v3702
        %v3722 = vsel %vm563, %v3700, %v3701
        %v3723 = vsel %vm563, %v3699, %v3700
        %v3724 = vsel %vm563, %v3698, %v3699
        %v3725 = vsel %vm563, %v3697, %v3698
        %v3726 = vsel %vm563, %v3696, %v3697
        %v3727 = vsel %vm563, %v3695, %v3696
        %v3728 = vsel %vm563, %v3694, %v3695
        %v3729 = vsel %vm563, %v3693, %v3694
        %v3730 = vsel %vm563, %v3692, %v3693
        %v3731 = vsel %vm563, %v3691, %v3692
        %v3732 = vsel %vm563, %v3690, %v3691
        %v3733 = vsel %vm563, %v3689, %v3690
        %v3734 = vsel %vm563, %v3688, %v3689
        %v3735 = vsel %vm563, %v3687, %v3688
        %v3736 = vsel %vm563, %v3686, %v3687
        %v3737 = vsel %vm563, %v3685, %v3686
        %v3738 = vsel %vm563, %v3684, %v3685
        %v3739 = vsel %vm563, %v3711, %v3684
        %3768 = vrot.lane.b32.xlu0 %v3738, 80
        %v3769 = vpop.permute.xlu0 %3768
        %3770 = vrot.lane.b32.xlu0 %v3737, 80
        %v3771 = vpop.permute.xlu0 %3770
        %3772 = vrot.lane.b32.xlu0 %v3736, 80
        %v3773 = vpop.permute.xlu0 %3772
        %3774 = vrot.lane.b32.xlu0 %v3735, 80
        %v3775 = vpop.permute.xlu0 %3774
        %3776 = vrot.lane.b32.xlu0 %v3734, 80
        %v3777 = vpop.permute.xlu0 %3776
        %3778 = vrot.lane.b32.xlu0 %v3733, 80
        %v3779 = vpop.permute.xlu0 %3778
        %3780 = vrot.lane.b32.xlu0 %v3732, 80
        %v3781 = vpop.permute.xlu0 %3780
        %3782 = vrot.lane.b32.xlu0 %v3731, 80
        %v3783 = vpop.permute.xlu0 %3782
        %3784 = vrot.lane.b32.xlu0 %v3730, 80
        %v3785 = vpop.permute.xlu0 %3784
        %3786 = vrot.lane.b32.xlu0 %v3729, 80
        %v3787 = vpop.permute.xlu0 %3786
        %3788 = vrot.lane.b32.xlu0 %v3728, 80
        %v3789 = vpop.permute.xlu0 %3788
        %3790 = vrot.lane.b32.xlu0 %v3727, 80
        %v3791 = vpop.permute.xlu0 %3790
        %3792 = vrot.lane.b32.xlu0 %v3726, 80
        %v3793 = vpop.permute.xlu0 %3792
        %3794 = vrot.lane.b32.xlu0 %v3725, 80
        %v3795 = vpop.permute.xlu0 %3794
        %3796 = vrot.lane.b32.xlu0 %v3724, 80
        %v3797 = vpop.permute.xlu0 %3796
        %3798 = vrot.lane.b32.xlu0 %v3723, 80
        %v3799 = vpop.permute.xlu0 %3798
        %3800 = vrot.lane.b32.xlu0 %v3722, 80
        %v3801 = vpop.permute.xlu0 %3800
        %3802 = vrot.lane.b32.xlu0 %v3721, 80
        %v3803 = vpop.permute.xlu0 %3802
        %3804 = vrot.lane.b32.xlu0 %v3720, 80
        %v3805 = vpop.permute.xlu0 %3804
        %3806 = vrot.lane.b32.xlu0 %v3719, 80
        %v3807 = vpop.permute.xlu0 %3806
        %3808 = vrot.lane.b32.xlu0 %v3718, 80
        %v3809 = vpop.permute.xlu0 %3808
        %3810 = vrot.lane.b32.xlu0 %v3717, 80
        %v3811 = vpop.permute.xlu0 %3810
        %3812 = vrot.lane.b32.xlu0 %v3716, 80
        %v3813 = vpop.permute.xlu0 %3812
        %3814 = vrot.lane.b32.xlu0 %v3715, 80
        %v3815 = vpop.permute.xlu0 %3814
        %3816 = vrot.lane.b32.xlu0 %v3714, 80
        %v3817 = vpop.permute.xlu0 %3816
        %3818 = vrot.lane.b32.xlu0 %v3713, 80
        %v3819 = vpop.permute.xlu0 %3818
        %3820 = vrot.lane.b32.xlu0 %v3712, 80
        %v3821 = vpop.permute.xlu0 %3820
        %3822 = vrot.lane.b32.xlu0 %v3739, 80
        %v3823 = vpop.permute.xlu0 %3822
        %3880 = vrot.lane.b32.xlu0 %v3657, 32
        %v3881 = vpop.permute.xlu0 %3880
        %3882 = vrot.lane.b32.xlu0 %v3658, 32
        %v3883 = vpop.permute.xlu0 %3882
        %3884 = vrot.lane.b32.xlu0 %v3659, 32
        %v3885 = vpop.permute.xlu0 %3884
        %3886 = vrot.lane.b32.xlu0 %v3660, 32
        %v3887 = vpop.permute.xlu0 %3886
        %3888 = vrot.lane.b32.xlu0 %v3661, 32
        %v3889 = vpop.permute.xlu0 %3888
        %3890 = vrot.lane.b32.xlu0 %v3662, 32
        %v3891 = vpop.permute.xlu0 %3890
        %3892 = vrot.lane.b32.xlu0 %v3663, 32
        %v3893 = vpop.permute.xlu0 %3892
        %3894 = vrot.lane.b32.xlu0 %v3664, 32
        %v3895 = vpop.permute.xlu0 %3894
        %3896 = vrot.lane.b32.xlu0 %v3665, 32
        %v3897 = vpop.permute.xlu0 %3896
        %3898 = vrot.lane.b32.xlu0 %v3666, 32
        %v3899 = vpop.permute.xlu0 %3898
        %3900 = vrot.lane.b32.xlu0 %v3667, 32
        %v3901 = vpop.permute.xlu0 %3900
        %3902 = vrot.lane.b32.xlu0 %v3668, 32
        %v3903 = vpop.permute.xlu0 %3902
        %3904 = vrot.lane.b32.xlu0 %v3669, 32
        %v3905 = vpop.permute.xlu0 %3904
        %3906 = vrot.lane.b32.xlu0 %v3670, 32
        %v3907 = vpop.permute.xlu0 %3906
        %3908 = vrot.lane.b32.xlu0 %v3671, 32
        %v3909 = vpop.permute.xlu0 %3908
        %3910 = vrot.lane.b32.xlu0 %v3672, 32
        %v3911 = vpop.permute.xlu0 %3910
        %3912 = vrot.lane.b32.xlu0 %v3673, 32
        %v3913 = vpop.permute.xlu0 %3912
        %3914 = vrot.lane.b32.xlu0 %v3674, 32
        %v3915 = vpop.permute.xlu0 %3914
        %3916 = vrot.lane.b32.xlu0 %v3675, 32
        %v3917 = vpop.permute.xlu0 %3916
        %3918 = vrot.lane.b32.xlu0 %v3676, 32
        %v3919 = vpop.permute.xlu0 %3918
        %3920 = vrot.lane.b32.xlu0 %v3677, 32
        %v3921 = vpop.permute.xlu0 %3920
        %3922 = vrot.lane.b32.xlu0 %v3678, 32
        %v3923 = vpop.permute.xlu0 %3922
        %3924 = vrot.lane.b32.xlu0 %v3679, 32
        %v3925 = vpop.permute.xlu0 %3924
        %3926 = vrot.lane.b32.xlu0 %v3680, 32
        %v3927 = vpop.permute.xlu0 %3926
        %3928 = vrot.lane.b32.xlu0 %v3681, 32
        %v3929 = vpop.permute.xlu0 %3928
        %3930 = vrot.lane.b32.xlu0 %v3682, 32
        %v3931 = vpop.permute.xlu0 %3930
        %3932 = vrot.lane.b32.xlu0 %v3683, 32
        %v3933 = vpop.permute.xlu0 %3932
        %3934 = vrot.lane.b32.xlu0 %v3656, 32
        %v3935 = vpop.permute.xlu0 %3934
        %3964 = vrot.lane.b32.xlu0 %v3737, 112
        %v3965 = vpop.permute.xlu0 %3964
        %3966 = vrot.lane.b32.xlu0 %v3736, 112
        %v3967 = vpop.permute.xlu0 %3966
        %3968 = vrot.lane.b32.xlu0 %v3735, 112
        %v3969 = vpop.permute.xlu0 %3968
        %3970 = vrot.lane.b32.xlu0 %v3734, 112
        %v3971 = vpop.permute.xlu0 %3970
        %3972 = vrot.lane.b32.xlu0 %v3733, 112
        %v3973 = vpop.permute.xlu0 %3972
        %3974 = vrot.lane.b32.xlu0 %v3732, 112
        %v3975 = vpop.permute.xlu0 %3974
        %3976 = vrot.lane.b32.xlu0 %v3731, 112
        %v3977 = vpop.permute.xlu0 %3976
        %3978 = vrot.lane.b32.xlu0 %v3730, 112
        %v3979 = vpop.permute.xlu0 %3978
        %3980 = vrot.lane.b32.xlu0 %v3729, 112
        %v3981 = vpop.permute.xlu0 %3980
        %3982 = vrot.lane.b32.xlu0 %v3728, 112
        %v3983 = vpop.permute.xlu0 %3982
        %3984 = vrot.lane.b32.xlu0 %v3727, 112
        %v3985 = vpop.permute.xlu0 %3984
        %3986 = vrot.lane.b32.xlu0 %v3726, 112
        %v3987 = vpop.permute.xlu0 %3986
        %3988 = vrot.lane.b32.xlu0 %v3725, 112
        %v3989 = vpop.permute.xlu0 %3988
        %3990 = vrot.lane.b32.xlu0 %v3724, 112
        %v3991 = vpop.permute.xlu0 %3990
        %3992 = vrot.lane.b32.xlu0 %v3723, 112
        %v3993 = vpop.permute.xlu0 %3992
        %3994 = vrot.lane.b32.xlu0 %v3722, 112
        %v3995 = vpop.permute.xlu0 %3994
        %3996 = vrot.lane.b32.xlu0 %v3721, 112
        %v3997 = vpop.permute.xlu0 %3996
        %3998 = vrot.lane.b32.xlu0 %v3720, 112
        %v3999 = vpop.permute.xlu0 %3998
        %4000 = vrot.lane.b32.xlu0 %v3719, 112
        %v4001 = vpop.permute.xlu0 %4000
        %4002 = vrot.lane.b32.xlu0 %v3718, 112
        %v4003 = vpop.permute.xlu0 %4002
        %4004 = vrot.lane.b32.xlu0 %v3717, 112
        %v4005 = vpop.permute.xlu0 %4004
        %4006 = vrot.lane.b32.xlu0 %v3716, 112
        %v4007 = vpop.permute.xlu0 %4006
        %4008 = vrot.lane.b32.xlu0 %v3715, 112
        %v4009 = vpop.permute.xlu0 %4008
        %4010 = vrot.lane.b32.xlu0 %v3714, 112
        %v4011 = vpop.permute.xlu0 %4010
        %4012 = vrot.lane.b32.xlu0 %v3713, 112
        %v4013 = vpop.permute.xlu0 %4012
        %4014 = vrot.lane.b32.xlu0 %v3712, 112
        %v4015 = vpop.permute.xlu0 %4014
        %4016 = vrot.lane.b32.xlu0 %v3739, 112
        %v4017 = vpop.permute.xlu0 %4016
        %4018 = vrot.lane.b32.xlu0 %v3738, 112
        %v4019 = vpop.permute.xlu0 %4018
        %vm4048 = vcmask 654336
        %v4049 = vsel %vm4048, %v3656, %v3769
        %v4050 = vsel %vm4048, %v3657, %v3771
        %v4051 = vsel %vm4048, %v3658, %v3773
        %v4052 = vsel %vm4048, %v3659, %v3775
        %v4053 = vsel %vm4048, %v3660, %v3777
        %v4054 = vsel %vm4048, %v3661, %v3779
        %v4055 = vsel %vm4048, %v3662, %v3781
        %v4056 = vsel %vm4048, %v3663, %v3783
        %v4057 = vsel %vm4048, %v3664, %v3785
        %v4058 = vsel %vm4048, %v3665, %v3787
        %v4059 = vsel %vm4048, %v3666, %v3789
        %v4060 = vsel %vm4048, %v3667, %v3791
        %v4061 = vsel %vm4048, %v3668, %v3793
        %v4062 = vsel %vm4048, %v3669, %v3795
        %v4063 = vsel %vm4048, %v3670, %v3797
        %v4064 = vsel %vm4048, %v3671, %v3799
        %v4065 = vsel %vm4048, %v3672, %v3801
        %v4066 = vsel %vm4048, %v3673, %v3803
        %v4067 = vsel %vm4048, %v3674, %v3805
        %v4068 = vsel %vm4048, %v3675, %v3807
        %v4069 = vsel %vm4048, %v3676, %v3809
        %v4070 = vsel %vm4048, %v3677, %v3811
        %v4071 = vsel %vm4048, %v3678, %v3813
        %v4072 = vsel %vm4048, %v3679, %v3815
        %v4073 = vsel %vm4048, %v3680, %v3817
        %v4074 = vsel %vm4048, %v3681, %v3819
        %v4075 = vsel %vm4048, %v3682, %v3821
        %v4076 = vsel %vm4048, %v3683, %v3823
        %vm4077 = vcmask 261120
        %v4078 = vsel %vm4077, %v3769, %v3881
        %v4079 = vsel %vm4077, %v3771, %v3883
        %v4080 = vsel %vm4077, %v3773, %v3885
        %v4081 = vsel %vm4077, %v3775, %v3887
        %v4082 = vsel %vm4077, %v3777, %v3889
        %v4083 = vsel %vm4077, %v3779, %v3891
        %v4084 = vsel %vm4077, %v3781, %v3893
        %v4085 = vsel %vm4077, %v3783, %v3895
        %v4086 = vsel %vm4077, %v3785, %v3897
        %v4087 = vsel %vm4077, %v3787, %v3899
        %v4088 = vsel %vm4077, %v3789, %v3901
        %v4089 = vsel %vm4077, %v3791, %v3903
        %v4090 = vsel %vm4077, %v3793, %v3905
        %v4091 = vsel %vm4077, %v3795, %v3907
        %v4092 = vsel %vm4077, %v3797, %v3909
        %v4093 = vsel %vm4077, %v3799, %v3911
        %v4094 = vsel %vm4077, %v3801, %v3913
        %v4095 = vsel %vm4077, %v3803, %v3915
        %v4096 = vsel %vm4077, %v3805, %v3917
        %v4097 = vsel %vm4077, %v3807, %v3919
        %v4098 = vsel %vm4077, %v3809, %v3921
        %v4099 = vsel %vm4077, %v3811, %v3923
        %v4100 = vsel %vm4077, %v3813, %v3925
        %v4101 = vsel %vm4077, %v3815, %v3927
        %v4102 = vsel %vm4077, %v3817, %v3929
        %v4103 = vsel %vm4077, %v3819, %v3931
        %v4104 = vsel %vm4077, %v3821, %v3933
        %v4105 = vsel %vm4077, %v3823, %v3935
        %v4106 = vsel %vm1127, %v4078, %v3965
        %v4107 = vsel %vm1127, %v4079, %v3967
        %v4108 = vsel %vm1127, %v4080, %v3969
        %v4109 = vsel %vm1127, %v4081, %v3971
        %v4110 = vsel %vm1127, %v4082, %v3973
        %v4111 = vsel %vm1127, %v4083, %v3975
        %v4112 = vsel %vm1127, %v4084, %v3977
        %v4113 = vsel %vm1127, %v4085, %v3979
        %v4114 = vsel %vm1127, %v4086, %v3981
        %v4115 = vsel %vm1127, %v4087, %v3983
        %v4116 = vsel %vm1127, %v4088, %v3985
        %v4117 = vsel %vm1127, %v4089, %v3987
        %v4118 = vsel %vm1127, %v4090, %v3989
        %v4119 = vsel %vm1127, %v4091, %v3991
        %v4120 = vsel %vm1127, %v4092, %v3993
        %v4121 = vsel %vm1127, %v4093, %v3995
        %v4122 = vsel %vm1127, %v4094, %v3997
        %v4123 = vsel %vm1127, %v4095, %v3999
        %v4124 = vsel %vm1127, %v4096, %v4001
        %v4125 = vsel %vm1127, %v4097, %v4003
        %v4126 = vsel %vm1127, %v4098, %v4005
        %v4127 = vsel %vm1127, %v4099, %v4007
        %v4128 = vsel %vm1127, %v4100, %v4009
        %v4129 = vsel %vm1127, %v4101, %v4011
        %v4130 = vsel %vm1127, %v4102, %v4013
        %v4131 = vsel %vm1127, %v4103, %v4015
        %v4132 = vsel %vm1127, %v4104, %v4017
        %v4133 = vsel %vm1127, %v4105, %v4019
        %v4134 = vlaneseq
        %v4135 = vand.u32 %v4134, 127
        %v4136 = vadd.s32 %v4135, 128
        %v4137 = vmul.u32 %v391, 28
        %vm4138 = vcmp.eq.s32.totalorder %v4135, %v4137
        %vm4139 = vcmp.eq.s32.totalorder %v4136, %v4137
        %v4140 = vsel %vm4138, 1.0, 0.0
        %v4141 = vsel %vm4139, 1.0, 0.0
        %v4142 = vpack.c.bf16 %v4140, %v4140
        %v4143 = vpack.c.bf16 %v4141, %v4141
        %v4144 = vpack.c.bf16 %v4050, %v4049
        %v4145 = vpack.c.bf16 %v4107, %v4106
        %v4146 = vpack.c.bf16 %v3967, %v3965
        %v4147 = vpack.c.bf16 %v4052, %v4051
        %v4148 = vpack.c.bf16 %v4109, %v4108
        %v4149 = vpack.c.bf16 %v3971, %v3969
        %v4150 = vpack.c.bf16 %v4054, %v4053
        %v4151 = vpack.c.bf16 %v4111, %v4110
        %v4152 = vpack.c.bf16 %v3975, %v3973
        %v4153 = vpack.c.bf16 %v4056, %v4055
        %v4154 = vpack.c.bf16 %v4113, %v4112
        %v4155 = vpack.c.bf16 %v3979, %v3977
        %v4156 = vpack.c.bf16 %v4058, %v4057
        %v4157 = vpack.c.bf16 %v4115, %v4114
        %v4158 = vpack.c.bf16 %v3983, %v3981
        %v4159 = vpack.c.bf16 %v4060, %v4059
        %v4160 = vpack.c.bf16 %v4117, %v4116
        %v4161 = vpack.c.bf16 %v3987, %v3985
        %v4162 = vpack.c.bf16 %v4062, %v4061
        %v4163 = vpack.c.bf16 %v4119, %v4118
        %v4164 = vpack.c.bf16 %v3991, %v3989
        %v4165 = vpack.c.bf16 %v4064, %v4063
        %v4166 = vpack.c.bf16 %v4121, %v4120
        %v4167 = vpack.c.bf16 %v3995, %v3993
        %v4168 = vpack.c.bf16 %v4066, %v4065
        %v4169 = vpack.c.bf16 %v4123, %v4122
        %v4170 = vpack.c.bf16 %v3999, %v3997
        %v4171 = vpack.c.bf16 %v4068, %v4067
        %v4172 = vpack.c.bf16 %v4125, %v4124
        %v4173 = vpack.c.bf16 %v4003, %v4001
        %v4174 = vpack.c.bf16 %v4070, %v4069
        %v4175 = vpack.c.bf16 %v4127, %v4126
        %v4176 = vpack.c.bf16 %v4007, %v4005
        %v4177 = vpack.c.bf16 %v4072, %v4071
        %v4178 = vpack.c.bf16 %v4129, %v4128
        %v4179 = vpack.c.bf16 %v4011, %v4009
        %v4180 = vpack.c.bf16 %v4074, %v4073
        %v4181 = vpack.c.bf16 %v4131, %v4130
        %v4182 = vpack.c.bf16 %v4015, %v4013
        %v4183 = vpack.c.bf16 %v4076, %v4075
        %v4184 = vpack.c.bf16 %v4133, %v4132
        %v4185 = vpack.c.bf16 %v4019, %v4017
        %v4187 = vsel %vm2391, %v4143, 0
        %4189 = vmatprep.subr.bf16.mxu0 %v4166
        %4190 = vmatpush1.bf16.msra.mxu0 %v4165
        %4191 = vmatprep.subr.bf16.mxu0 %v4163
        %4192 = vmatpush1.bf16.msra.mxu0 %v4162
        %4193 = vmatprep.subr.bf16.mxu0 %v4160
        %4194 = vmatpush1.bf16.msra.mxu0 %v4159
        %4195 = vmatprep.subr.bf16.mxu0 %v4157
        %4196 = vmatpush1.bf16.msra.mxu0 %v4156
        %4197 = vmatprep.subr.bf16.mxu0 %v4154
        %4198 = vmatpush1.bf16.msra.mxu0 %v4153
        %4199 = vmatprep.subr.bf16.mxu0 %v4151
        %4200 = vmatpush1.bf16.msra.mxu0 %v4150
        %4201 = vmatprep.subr.bf16.mxu0 %v4148
        %4202 = vmatpush1.bf16.msra.mxu0 %v4147
        %4203 = vmatprep.subr.bf16.mxu0 %v4145
        %4204 = vmatpush1.bf16.msra.mxu0 %v4144
        %4205 = vmatprep.subr.bf16.mxu0 0
        %4206 = vmatpush2.bf16.msra.mxu0 0
        %4207 = vmatprep.subr.bf16.mxu0 0
        %4208 = vmatpush2.bf16.msra.mxu0 0
        %4209 = vmatprep.subr.bf16.mxu0 %v4184
        %4210 = vmatpush2.bf16.msra.mxu0 %v4183
        %4211 = vmatprep.subr.bf16.mxu0 %v4181
        %4212 = vmatpush2.bf16.msra.mxu0 %v4180
        %4213 = vmatprep.subr.bf16.mxu0 %v4178
        %4214 = vmatpush2.bf16.msra.mxu0 %v4177
        %4215 = vmatprep.subr.bf16.mxu0 %v4175
        %4216 = vmatpush2.bf16.msra.mxu0 %v4174
        %4217 = vmatprep.subr.bf16.mxu0 %v4172
        %4218 = vmatpush2.bf16.msra.mxu0 %v4171
        %4219 = vmatprep.subr.bf16.mxu0 %v4169
        %4220 = vmatpush2.bf16.msra.mxu0 %v4168
        %4221 = vmatprep.mubr.bf16.mxu0 %v4187
        %4222 = vmatmul.mubr.bf16.gmra.mxu0 %v4142
        %v4223 = vpop.f32.mrf.mxu0
        %v4224 = vadd.f32 0.0, %v4223
        %v4225 = vpop.f32.mrf.mxu0
        %v4226 = vadd.f32 0.0, %v4225
        %v4227 = vpop.f32.mrf.mxu0
        %v4228 = vpop.f32.mrf.mxu0
        %4229 = vdwg.mxu0
        %4230 = vmatprep.subr.bf16.mxu0 0
        %4231 = vmatpush1.bf16.msra.mxu0 %v4167
        %4232 = vmatprep.subr.bf16.mxu0 0
        %4233 = vmatpush1.bf16.msra.mxu0 %v4164
        %4234 = vmatprep.subr.bf16.mxu0 0
        %4235 = vmatpush1.bf16.msra.mxu0 %v4161
        %4236 = vmatprep.subr.bf16.mxu0 0
        %4237 = vmatpush1.bf16.msra.mxu0 %v4158
        %4238 = vmatprep.subr.bf16.mxu0 0
        %4239 = vmatpush1.bf16.msra.mxu0 %v4155
        %4240 = vmatprep.subr.bf16.mxu0 0
        %4241 = vmatpush1.bf16.msra.mxu0 %v4152
        %4242 = vmatprep.subr.bf16.mxu0 0
        %4243 = vmatpush1.bf16.msra.mxu0 %v4149
        %4244 = vmatprep.subr.bf16.mxu0 0
        %4245 = vmatpush1.bf16.msra.mxu0 %v4146
        %4246 = vmatprep.subr.bf16.mxu0 0
        %4247 = vmatpush2.bf16.msra.mxu0 0
        %4248 = vmatprep.subr.bf16.mxu0 0
        %4249 = vmatpush2.bf16.msra.mxu0 0
        %4250 = vmatprep.subr.bf16.mxu0 0
        %4251 = vmatpush2.bf16.msra.mxu0 %v4185
        %4252 = vmatprep.subr.bf16.mxu0 0
        %4253 = vmatpush2.bf16.msra.mxu0 %v4182
        %4254 = vmatprep.subr.bf16.mxu0 0
        %4255 = vmatpush2.bf16.msra.mxu0 %v4179
        %4256 = vmatprep.subr.bf16.mxu0 0
        %4257 = vmatpush2.bf16.msra.mxu0 %v4176
        %4258 = vmatprep.subr.bf16.mxu0 0
        %4259 = vmatpush2.bf16.msra.mxu0 %v4173
        %4260 = vmatprep.subr.bf16.mxu0 0
        %4261 = vmatpush2.bf16.msra.mxu0 %v4170
        %4262 = vmatprep.mubr.bf16.mxu0 %v4187
        %4263 = vmatmul.mubr.bf16.gmra.mxu0 %v4142
        %v4264 = vpop.f32.mrf.mxu0
        %v4265 = vadd.f32 0.0, %v4264
        %v4266 = vpop.f32.mrf.mxu0
        %v4267 = vpop.f32.mrf.mxu0
        %v4268 = vpop.f32.mrf.mxu0
        %4269 = vdwg.mxu0
        %v4270 = vpack.c.bf16 %v4224, %v4224
        %v4271 = vpack.c.bf16 %v4226, %v4226
        %v4272 = vpack.c.bf16 %v4265, %v4265
        %v4273 = vld [vmem:[%s5] sm:$0xf]
        %v4274 = vld [vmem:[%s5 + $0x4] sm:$0xf]
        %v4275 = vld [vmem:[%s5 + $0x8] sm:$0xf]
        %v4276 = vld [vmem:[%s5 + $0xc] sm:$0xf]
        %v4277 = vld [vmem:[%s5 + $0x10] sm:$0xf]
        %v4278 = vld [vmem:[%s5 + $0x14] sm:$0xf]
        %v4279 = vld [vmem:[%s5 + $0x18] sm:$0xf]
        %v4280 = vld [vmem:[%s5 + $0x1c] sm:$0xf]
        %v4281 = vld [vmem:[%s5 + $0x20] sm:$0xf]
        %v4282 = vld [vmem:[%s5 + $0x24] sm:$0xf]
        %v4283 = vld [vmem:[%s5 + $0x28] sm:$0xf]
        %v4284 = vld [vmem:[%s5 + $0x2c] sm:$0xf]
        %v4285 = vld [vmem:[%s5 + $0x30] sm:$0xf]
        %v4286 = vld [vmem:[%s5 + $0x34] sm:$0xf]
        %v4287 = vld [vmem:[%s5 + $0x38] sm:$0xf]
        %v4288 = vld [vmem:[%s5 + $0x3c] sm:$0xf]
        %v4289 = vld [vmem:[%s5 + $0x40] sm:$0xf]
        %v4290 = vld [vmem:[%s5 + $0x44] sm:$0xf]
        %v4291 = vld [vmem:[%s5 + $0x48] sm:$0xf]
        %v4292 = vld [vmem:[%s5 + $0x4c] sm:$0xf]
        %v4293 = vld [vmem:[%s5 + $0x50] sm:$0xf]
        %v4294 = vld [vmem:[%s5 + $0x54] sm:$0xf]
        %v4295 = vld [vmem:[%s5 + $0x58] sm:$0xf]
        %v4296 = vld [vmem:[%s5 + $0x5c] sm:$0xf]
        %v4297 = vld [vmem:[%s5 + $0x60] sm:$0xf]
        %v4298 = vld [vmem:[%s5 + $0x64] sm:$0xf]
        %v4299 = vld [vmem:[%s5 + $0x68] sm:$0xf]
        %v4300 = vld [vmem:[%s5 + $0x6c] sm:$0xf]
        %v4301 = vld [vmem:[%s5 + $0x70] sm:$0xf]
        %v4302 = vld [vmem:[%s5 + $0x74] sm:$0xf]
        %v4303 = vld [vmem:[%s5 + $0x78] sm:$0xf]
        %v4304 = vld [vmem:[%s5 + $0x7c] sm:$0xf]
        %v4305 = vld [vmem:[%s5 + $0x80] sm:$0xf]
        %v4306 = vld [vmem:[%s5 + $0x84] sm:$0xf]
        %v4307 = vld [vmem:[%s5 + $0x88] sm:$0xf]
        %v4308 = vld [vmem:[%s5 + $0x8c] sm:$0xf]
        %v4309 = vld [vmem:[%s5 + $0x90] sm:$0xf]
        %v4310 = vld [vmem:[%s5 + $0x94] sm:$0xf]
        %v4311 = vld [vmem:[%s5 + $0x98] sm:$0xf]
        %v4312 = vld [vmem:[%s5 + $0x9c] sm:$0xf]
        %v4313 = vld [vmem:[%s6] sm:$0x1]
        %v4315 = vlaneseq
        %v4316 = vshrl.u32 %v4315, 7
        %v4317 = vsub.s32 0, %v4316
        %v4318 = vrot.slane %v4313, %v4317
        %v4360 = vunpack.c.l.b16 %v4273
        %v4361 = vunpack.c.l.b16 %v4274
        %v4362 = vunpack.c.l.b16 %v4275
        %v4363 = vunpack.c.l.b16 %v4276
        %v4364 = vunpack.c.l.b16 %v4277
        %v4365 = vunpack.c.l.b16 %v4278
        %v4366 = vunpack.c.l.b16 %v4279
        %v4367 = vunpack.c.l.b16 %v4280
        %v4368 = vunpack.c.l.b16 %v4281
        %v4369 = vunpack.c.l.b16 %v4282
        %v4370 = vunpack.c.l.b16 %v4283
        %v4371 = vunpack.c.l.b16 %v4284
        %v4372 = vunpack.c.l.b16 %v4285
        %v4373 = vunpack.c.l.b16 %v4286
        %v4374 = vunpack.c.l.b16 %v4287
        %v4375 = vunpack.c.l.b16 %v4288
        %v4376 = vunpack.c.l.b16 %v4289
        %v4377 = vunpack.c.l.b16 %v4290
        %v4378 = vunpack.c.l.b16 %v4291
        %v4379 = vunpack.c.l.b16 %v4292
        %v4380 = vunpack.c.l.b16 %v4293
        %v4381 = vunpack.c.l.b16 %v4294
        %v4382 = vunpack.c.l.b16 %v4295
        %v4383 = vunpack.c.l.b16 %v4296
        %v4384 = vunpack.c.l.b16 %v4297
        %v4385 = vunpack.c.l.b16 %v4298
        %v4386 = vunpack.c.l.b16 %v4299
        %v4387 = vunpack.c.l.b16 %v4300
        %v4388 = vunpack.c.l.b16 %v4301
        %v4389 = vunpack.c.l.b16 %v4302
        %v4390 = vunpack.c.l.b16 %v4303
        %v4391 = vunpack.c.l.b16 %v4304
        %v4392 = vunpack.c.l.b16 %v4305
        %v4393 = vunpack.c.l.b16 %v4306
        %v4394 = vunpack.c.l.b16 %v4307
        %v4395 = vunpack.c.l.b16 %v4308
        %v4396 = vunpack.c.l.b16 %v4309
        %v4397 = vunpack.c.l.b16 %v4310
        %v4398 = vunpack.c.l.b16 %v4311
        %v4399 = vunpack.c.l.b16 %v4312
        %v4400 = vpack.c.b16 %v4361, %v4360
        %v4401 = vpack.c.b16 %v4363, %v4362
        %v4402 = vpack.c.b16 %v4365, %v4364
        %v4403 = vpack.c.b16 %v4367, %v4366
        %v4404 = vpack.c.b16 %v4369, %v4368
        %v4405 = vpack.c.b16 %v4371, %v4370
        %v4406 = vpack.c.b16 %v4373, %v4372
        %v4407 = vpack.c.b16 %v4375, %v4374
        %v4408 = vpack.c.b16 %v4377, %v4376
        %v4409 = vpack.c.b16 %v4379, %v4378
        %v4410 = vpack.c.b16 %v4381, %v4380
        %v4411 = vpack.c.b16 %v4383, %v4382
        %v4412 = vpack.c.b16 %v4385, %v4384
        %v4413 = vpack.c.b16 %v4387, %v4386
        %v4414 = vpack.c.b16 %v4389, %v4388
        %v4415 = vpack.c.b16 %v4391, %v4390
        %v4416 = vpack.c.b16 %v4393, %v4392
        %v4417 = vpack.c.b16 %v4395, %v4394
        %v4418 = vpack.c.b16 %v4397, %v4396
        %v4419 = vpack.c.b16 %v4399, %v4398
        %vm4440 = vcmask 523264
        %v4442 = vsel %vm4440, %v4272, 0
        %4444 = vmatprep.subr.bf16.mxu0 0
        %4445 = vmatpush1.bf16.msra.mxu0 %v4407
        %4446 = vmatprep.subr.bf16.mxu0 0
        %4447 = vmatpush1.bf16.msra.mxu0 %v4406
        %4448 = vmatprep.subr.bf16.mxu0 0
        %4449 = vmatpush1.bf16.msra.mxu0 %v4405
        %4450 = vmatprep.subr.bf16.mxu0 0
        %4451 = vmatpush1.bf16.msra.mxu0 %v4404
        %4452 = vmatprep.subr.bf16.mxu0 0
        %4453 = vmatpush1.bf16.msra.mxu0 %v4403
        %4454 = vmatprep.subr.bf16.mxu0 0
        %4455 = vmatpush1.bf16.msra.mxu0 %v4402
        %4456 = vmatprep.subr.bf16.mxu0 0
        %4457 = vmatpush1.bf16.msra.mxu0 %v4401
        %4458 = vmatprep.subr.bf16.mxu0 0
        %4459 = vmatpush1.bf16.msra.mxu0 %v4400
        %4460 = vmatprep.subr.bf16.mxu0 0
        %4461 = vmatpush2.bf16.msra.mxu0 %v4415
        %4462 = vmatprep.subr.bf16.mxu0 0
        %4463 = vmatpush2.bf16.msra.mxu0 %v4414
        %4464 = vmatprep.subr.bf16.mxu0 0
        %4465 = vmatpush2.bf16.msra.mxu0 %v4413
        %4466 = vmatprep.subr.bf16.mxu0 0
        %4467 = vmatpush2.bf16.msra.mxu0 %v4412
        %4468 = vmatprep.subr.bf16.mxu0 0
        %4469 = vmatpush2.bf16.msra.mxu0 %v4411
        %4470 = vmatprep.subr.bf16.mxu0 0
        %4471 = vmatpush2.bf16.msra.mxu0 %v4410
        %4472 = vmatprep.subr.bf16.mxu0 0
        %4473 = vmatpush2.bf16.msra.mxu0 %v4409
        %4474 = vmatprep.subr.bf16.mxu0 0
        %4475 = vmatpush2.bf16.msra.mxu0 %v4408
        %4476 = vmatprep.mubr.bf16.mxu0 %v4271
        %4477 = vmatmul.mubr.bf16.gmra.mxu0 %v4270
        %v4478 = vpop.f32.mrf.mxu0
        %v4479 = vadd.f32 %v4318, %v4478
        %v4480 = vpop.f32.mrf.mxu0
        %v4481 = vpop.f32.mrf.mxu0
        %v4482 = vpop.f32.mrf.mxu0
        %4483 = vdwg.mxu0
        %4484 = vmatprep.subr.bf16.mxu0 0
        %4485 = vmatpush1.bf16.msra.mxu0 0
        %4486 = vmatprep.subr.bf16.mxu0 0
        %4487 = vmatpush1.bf16.msra.mxu0 0
        %4488 = vmatprep.subr.bf16.mxu0 0
        %4489 = vmatpush1.bf16.msra.mxu0 0
        %4490 = vmatprep.subr.bf16.mxu0 0
        %4491 = vmatpush1.bf16.msra.mxu0 0
        %4492 = vmatprep.subr.bf16.mxu0 0
        %4493 = vmatpush1.bf16.msra.mxu0 %v4419
        %4494 = vmatprep.subr.bf16.mxu0 0
        %4495 = vmatpush1.bf16.msra.mxu0 %v4418
        %4496 = vmatprep.subr.bf16.mxu0 0
        %4497 = vmatpush1.bf16.msra.mxu0 %v4417
        %4498 = vmatprep.subr.bf16.mxu0 0
        %4499 = vmatpush1.bf16.msra.mxu0 %v4416
        %4500 = vmatprep.subr.bf16.mxu0 0
        %4501 = vmatpush2.bf16.msra.mxu0 0
        %4502 = vmatprep.subr.bf16.mxu0 0
        %4503 = vmatpush2.bf16.msra.mxu0 0
        %4504 = vmatprep.subr.bf16.mxu0 0
        %4505 = vmatpush2.bf16.msra.mxu0 0
        %4506 = vmatprep.subr.bf16.mxu0 0
        %4507 = vmatpush2.bf16.msra.mxu0 0
        %4508 = vmatprep.subr.bf16.mxu0 0
        %4509 = vmatpush2.bf16.msra.mxu0 0
        %4510 = vmatprep.subr.bf16.mxu0 0
        %4511 = vmatpush2.bf16.msra.mxu0 0
        %4512 = vmatprep.subr.bf16.mxu0 0
        %4513 = vmatpush2.bf16.msra.mxu0 0
        %4514 = vmatprep.subr.bf16.mxu0 0
        %4515 = vmatpush2.bf16.msra.mxu0 0
        %4516 = vmatprep.mubr.bf16.mxu0 0
        %4517 = vmatmul.mubr.bf16.gmra.mxu0 %v4442
        %v4518 = vpop.f32.mrf.mxu0
        %v4519 = vadd.f32 %v4479, %v4518
        %v4520 = vpop.f32.mrf.mxu0
        %v4521 = vpop.f32.mrf.mxu0
        %v4522 = vpop.f32.mrf.mxu0
        %4523 = vdwg.mxu0
        %v4524 = vmax.f32 %v4519, 0.0
        %v4525 = vld [vmem:[%s7] sm:$0xff]
        %v4526 = vld [vmem:[%s7 + $0x8] sm:$0xff]
        %v4527 = vld [vmem:[%s7 + $0x10] sm:$0xff]
        %v4528 = vld [vmem:[%s7 + $0x18] sm:$0xff]
        %v4529 = vld [vmem:[%s7 + $0x20] sm:$0xff]
        %v4530 = vld [vmem:[%s7 + $0x28] sm:$0xff]
        %v4531 = vld [vmem:[%s7 + $0x30] sm:$0x3]
        %v4532 = vld [vmem:[%s8] sm:$0x1]
        %v4534 = vlaneseq
        %v4535 = vshrl.u32 %v4534, 7
        %v4536 = vsub.s32 0, %v4535
        %v4537 = vrot.slane %v4532, %v4536
        %vm4539 = vcmask 408576
        %v4541 = vsel %vm4539, %v4524, 0
        %vm4543 = vcmask 1041408
        %v4545 = vsel %vm4543, %v4531, 0
        %4547 = vmatprep.subr.mxu0 0.0
        %4548 = vmatpush1.msra.mxu0 0.0
        %4549 = vmatprep.subr.mxu0 0.0
        %4550 = vmatpush1.msra.mxu0 0.0
        %4551 = vmatprep.subr.mxu0 0.0
        %4552 = vmatpush1.msra.mxu0 0.0
        %4553 = vmatprep.subr.mxu0 0.0
        %4554 = vmatpush1.msra.mxu0 0.0
        %4555 = vmatprep.subr.mxu0 0.0
        %4556 = vmatpush1.msra.mxu0 0.0
        %4557 = vmatprep.subr.mxu0 0.0
        %4558 = vmatpush1.msra.mxu0 0.0
        %4559 = vmatprep.subr.mxu0 0.0
        %4560 = vmatpush1.msra.mxu0 0.0
        %4561 = vmatprep.subr.mxu0 0.0
        %4562 = vmatpush1.msra.mxu0 0.0
        %4563 = vmatprep.subr.mxu0 0.0
        %4564 = vmatpush1.msra.mxu0 0.0
        %4565 = vmatprep.subr.mxu0 0.0
        %4566 = vmatpush1.msra.mxu0 %v4545
        %4567 = vmatprep.subr.mxu0 0.0
        %4568 = vmatpush1.msra.mxu0 %v4530
        %4569 = vmatprep.subr.mxu0 0.0
        %4570 = vmatpush1.msra.mxu0 %v4529
        %4571 = vmatprep.subr.mxu0 0.0
        %4572 = vmatpush1.msra.mxu0 %v4528
        %4573 = vmatprep.subr.mxu0 0.0
        %4574 = vmatpush1.msra.mxu0 %v4527
        %4575 = vmatprep.subr.mxu0 0.0
        %4576 = vmatpush1.msra.mxu0 %v4526
        %4577 = vmatprep.subr.mxu0 0.0
        %4578 = vmatpush1.msra.mxu0 %v4525
        %4579 = vmatprep.subr.mxu0 0.0
        %4580 = vmatpush2.msra.mxu0 0.0
        %4581 = vmatprep.subr.mxu0 0.0
        %4582 = vmatpush2.msra.mxu0 0.0
        %4583 = vmatprep.subr.mxu0 0.0
        %4584 = vmatpush2.msra.mxu0 0.0
        %4585 = vmatprep.subr.mxu0 0.0
        %4586 = vmatpush2.msra.mxu0 0.0
        %4587 = vmatprep.subr.mxu0 0.0
        %4588 = vmatpush2.msra.mxu0 0.0
        %4589 = vmatprep.subr.mxu0 0.0
        %4590 = vmatpush2.msra.mxu0 0.0
        %4591 = vmatprep.subr.mxu0 0.0
        %4592 = vmatpush2.msra.mxu0 0.0
        %4593 = vmatprep.subr.mxu0 0.0
        %4594 = vmatpush2.msra.mxu0 0.0
        %4595 = vmatprep.subr.mxu0 0.0
        %4596 = vmatpush2.msra.mxu0 0.0
        %4597 = vmatprep.subr.mxu0 0.0
        %4598 = vmatpush2.msra.mxu0 0.0
        %4599 = vmatprep.subr.mxu0 0.0
        %4600 = vmatpush2.msra.mxu0 0.0
        %4601 = vmatprep.subr.mxu0 0.0
        %4602 = vmatpush2.msra.mxu0 0.0
        %4603 = vmatprep.subr.mxu0 0.0
        %4604 = vmatpush2.msra.mxu0 0.0
        %4605 = vmatprep.subr.mxu0 0.0
        %4606 = vmatpush2.msra.mxu0 0.0
        %4607 = vmatprep.subr.mxu0 0.0
        %4608 = vmatpush2.msra.mxu0 0.0
        %4609 = vmatprep.subr.mxu0 0.0
        %4610 = vmatpush2.msra.mxu0 0.0
        %4611 = vmatprep.mubr.f32.mxu0 0.0
        %4612 = vmatmul.mubr.f32.gmra.mxu0 %v4541
        %v4613 = vpop.f32.mrf.mxu0
        %v4614 = vadd.f32 %v4537, %v4613
        %v4615 = vpop.f32.mrf.mxu0
        %4616 = vdwg.mxu0
        %vm4617 = vcmask 80896
        %v4618 = vsel %vm4617, %v4614, -inf
        %4619 = vmax.xlane.f32.xlu0 %v4618
        %v4620 = vpop.xlane.xlu0 %4619
        %v4621 = vsub.f32 %v4614, %v4620
        %v4622 = vmul.f32 %v4621, 1.442695
        %v4623 = vpow.pop %v4622
        %v4624 = vsel %vm4617, %v4623, 0.0
        %4625 = vadd.xlane.f32.xlu0 %v4624
        %v4626 = vpop.xlane.xlu0 %4625
        %v4627 = vlog2.pop %v4626
        %v4628 = vmul.f32 %v4627, 0.6931472
        %v4629 = vadd.f32 %v4620, %v4628
        %v4630 = vsub.f32 %v4614, %v4629
        %4631 = vst.msk [vmem:[%s326] sm:$0xff] %vm4617, %v4630
        %s4632 = sand.u32 %s225, 1
        %s4633 = scalar_lea.sflag [#allocation3], %s4632
        %s4634 = sand.u32 %s225, 1
        %s4635 = smul.addr %s4634, 8
        %s4636 = scalar_lea.vmem [#allocation2], %s4635
        // Predicated region
        $region57: #{net_forward.1} parent=55 // pred_check
          %p4637 = pneg %p235
        $region58: #{net_forward.1} parent=55 // pred_check_branch
          %4639 = sbr.rel (%p4637) target = $region60
        $region59: #{net_forward.1} parent=55 // pred_region
          %s4641 = ssub.s32 128, 128
          %4642 = vsyncadd %s4633, %s4641
          %s4643 = smul.addr %s23, 128
          %s4644 = scalar_lea.hbm %s9, %s4643
          %s4646 = sshll.u32 %s4636, 4
          %s4647 = int_to_ptr.vmem [resolvable:$true] %s4646
          %4649 = dma.vmem_to_hbm [thread:$0]  %s4647, 128, %s4644, %s4633
        $region60: #{net_forward.1} parent=55 // pred_fallthru
          _
      $region56: #{net_forward.1} parent=5 // pred_fallthru
        _
      %p4650 = scmp.le.s32.totalorder 2, %s18
      // Predicated region
      $region61: #{net_forward.1} parent=5 // pred_check
        %p4651 = pneg %p4650
      $region62: #{net_forward.1} parent=5 // pred_check_branch
        %4653 = sbr.rel (%p4651) target = $region64
      $region63: #{net_forward.1} parent=5 // pred_region
        %s4654 = ssub.s32 %s18, 2
        // Predicated region
        $region65: #{net_forward.1} parent=63 // pred_check
          %p4655 = pneg %p241
        $region66: #{net_forward.1} parent=63 // pred_check_branch
          %4657 = sbr.rel (%p4655) target = $region68
        $region67: #{net_forward.1} parent=63 // pred_region
          %s4658 = sand.u32 %s226, 1
          %s4659 = scalar_lea.sflag [#allocation3], %s4658
          %s4660 = sand.u32 %s226, 1
          %s4661 = smul.addr %s4660, 8
          %s4662 = scalar_lea.vmem [#allocation2], %s4661
          %4663 = dma.done %s4659, 128
        $region68: #{net_forward.1} parent=63 // pred_fallthru
          _
      $region64: #{net_forward.1} parent=5 // pred_fallthru
        _
    $region6: #{net_forward.1} parent=1 // loop_footer
      %s22 = sadd.s32 1, %s18
    $region7: #{net_forward.1} parent=1 // loop_footer_branch
      %17 = sbr.rel target = $region3
    $region8: #{net_forward.1} parent=1 // loop_exit
      _
    %4664 = vsyncpa [#allocation3], 1
    %s4665 = scalar_lea.sflag [#allocation3], 1
    %4666 = vsyncpa %s4665, 1

</llo_original>
